<compile_context>
chip_gen: v5e
topology: v5e:2x2
jax: 0.10.0
libtpu: 0.0.40
codegen_flags: <defaults>
</compile_context>

<pallas_src>
import jax
import jax.numpy as jnp
from jax.experimental import pallas as pl
from jax.experimental.pallas import tpu as pltpu

# Model dims (from the PyTorch module __init__)
TABULAR_DIM = 5
BERT_HIDDEN = 768
TAB_HIDDEN = 128          # -> 64 after second tabular layer
FUSION_HIDDEN = 256       # -> 128 after second fusion layer
CLS_HIDDEN = 64
NUM_CLASSES = 1
BN_EPS = 1e-5

_SEQ_CHUNK = 64           # in-kernel f32-upcast chunk (bounds the VMEM temporary)
_MAX_SEQ_TILE = 256       # streamed seq tile; deeper pipeline when >1 tile
_DEFAULT_VMEM = 64 << 20  # conservative fallback = v7x per-core capacity


def _round_up(x, m):
    return ((x + m - 1) // m) * m


def _vmem_capacity_bytes():
    try:
        cap = int(pltpu.get_tpu_info().vmem_capacity_bytes)
        if cap > 0:
            return cap
    except Exception:
        pass
    return _DEFAULT_VMEM


def _pick_tiles(B, S):
    """Generation-aware (TB, TS, B_pad, S_pad, n_buf, vmem_limit)."""
    vmem_cap = _vmem_capacity_bytes()
    # ~65% of VMEM for the streamed emb buffers; ~6 MiB reserved for VMEM-resident
    # weights, the f32 accumulator scratch and the per-chunk upcast temporary.
    emb_budget = max(8 << 20, int(0.65 * vmem_cap) - (6 << 20))
    vmem_limit = min(int(0.85 * vmem_cap), 112 << 20)

    if S <= _MAX_SEQ_TILE:
        TS, S_pad, n_buf = S, S, 2              # one seq block covers the full sequence
    else:
        TS = _MAX_SEQ_TILE                      # multiple of 128
        S_pad = _round_up(S, TS)
        n_buf = 3                               # hide smaller per-step DMAs

    per_row = n_buf * TS * BERT_HIDDEN * 2      # bf16 emb buffers per batch row
    TB = max(8, min(256, (emb_budget // per_row) // 8 * 8))
    TB = min(TB, _round_up(B, 8))
    if B >= 16:
        # keep >= 2 batch tiles so the "parallel" axis can shard across v7x's 2 TCs
        TB = min(TB, max(8, (_round_up(B, 8) // 2) // 8 * 8))
    B_pad = _round_up(B, TB)
    return TB, TS, B_pad, S_pad, n_buf, vmem_limit


def _fused_forward_kernel(
    emb_ref, inv_ref, tab_ref,
    wp_ref, bp_ref,                  # BERT pooler dense (bf16 weight)
    w1_ref, b1_ref, w2_ref, b2_ref,  # tabular encoder (BN folded)
    w3a_ref, w3b_ref, b3_ref,        # fusion layer 1 (split across concat, bf16)
    w4_ref, b4_ref,                  # fusion layer 2 (bf16)
    w5_ref, b5_ref, w6row_ref, b6_ref,   # classifier (w6 passed as (1, 64) row)
    out_ref,
    acc_ref,                         # f32 scratch: masked-sum accumulator
):
    f32 = jnp.float32
    bf16 = jnp.bfloat16
    s = pl.program_id(1)

    @pl.when(s == 0)
    def _():
        acc_ref[...] = jnp.zeros_like(acc_ref)

    # ---- streamed sum over the sequence axis.  The mask is pre-folded into emb in the
    # wrapper, so this is a plain chunked sum; chunking bounds the bf16->f32 upcast
    # temporary to (TB, _SEQ_CHUNK, 768) instead of materializing the whole block.
    ts = emb_ref.shape[1]
    for start in range(0, ts, _SEQ_CHUNK):
        end = min(start + _SEQ_CHUNK, ts)
        acc_ref[...] += jnp.sum(emb_ref[:, start:end, :].astype(f32), axis=1)

    @pl.when(s == pl.num_programs(1) - 1)
    def _():
        # ---- BERT stand-in tail: mean pool (exact wrapper-side 1/count), pooler+tanh --
        pooled = acc_ref[...] * inv_ref[...]                              # (TB, 768)
        text = jnp.tanh(
            jnp.dot(pooled.astype(bf16), wp_ref[...],
                    preferred_element_type=f32) + bp_ref[...])            # (TB, 768)

        # ---- tabular encoder: Linear+BN(folded)+ReLU x2 (dropout = identity) ----
        tab = tab_ref[...]                                                # (TB, 5)
        t1 = jnp.maximum(
            jnp.dot(tab, w1_ref[...], preferred_element_type=f32) + b1_ref[...], 0.0)
        t2 = jnp.maximum(
            jnp.dot(t1, w2_ref[...], preferred_element_type=f32) + b2_ref[...], 0.0)

        # ---- fusion: concat([text, t2]) @ W3 expressed as split bf16 matmuls ----
        f1 = jnp.maximum(
            jnp.dot(text.astype(bf16), w3a_ref[...], preferred_element_type=f32)
            + jnp.dot(t2.astype(bf16), w3b_ref[...], preferred_element_type=f32)
            + b3_ref[...], 0.0)                                           # (TB, 256)
        f2 = jnp.maximum(
            jnp.dot(f1.astype(bf16), w4_ref[...], preferred_element_type=f32)
            + b4_ref[...], 0.0)                                           # (TB, 128)

        # ---- classifier; final 64->1 layer on the VPU (avoid lane-sparse MXU pass) ----
        c1 = jnp.maximum(
            jnp.dot(f2.astype(bf16), w5_ref[...], preferred_element_type=f32)
            + b5_ref[...], 0.0)                                           # (TB, 64)
        out_ref[...] = (
            jnp.sum(c1 * w6row_ref[...], axis=-1, keepdims=True) + b6_ref[...]
        )                                                                 # (TB, 1)


def _fold_bn(w, b, gamma, beta, running_mean, running_var, eps=BN_EPS):
    """Fold eval-mode BatchNorm1d into the preceding Linear (w: (in,out), b: (out,))."""
    scale = gamma / jnp.sqrt(running_var + eps)
    return w * scale[None, :], b * scale + (beta - running_mean * scale)


def init_params(key):
    """Deterministic synthetic parameters (shapes follow the PyTorch module)."""
    ks = jax.random.split(key, 16)
    vocab = 64

    def lin(k, din, dout, s=0.05):
        kw, kb = jax.random.split(k)
        return (
            jax.random.normal(kw, (din, dout), jnp.float32) * s,
            jax.random.normal(kb, (dout,), jnp.float32) * s,
        )

    p = {}
    p["embed"] = jax.random.normal(ks[0], (vocab, BERT_HIDDEN), jnp.float32) * 0.02
    p["wp"], p["bp"] = lin(ks[1], BERT_HIDDEN, BERT_HIDDEN, 0.02)

    # tabular encoder (BN params at PyTorch defaults)
    w1, b1 = lin(ks[2], TABULAR_DIM, TAB_HIDDEN)
    w2, b2 = lin(ks[3], TAB_HIDDEN, TAB_HIDDEN // 2)
    ones = lambda d: jnp.ones((d,), jnp.float32)
    zeros = lambda d: jnp.zeros((d,), jnp.float32)
    p["w1"], p["b1"] = _fold_bn(w1, b1, ones(TAB_HIDDEN), zeros(TAB_HIDDEN),
                                zeros(TAB_HIDDEN), ones(TAB_HIDDEN))
    p["w2"], p["b2"] = _fold_bn(w2, b2, ones(TAB_HIDDEN // 2), zeros(TAB_HIDDEN // 2),
                                zeros(TAB_HIDDEN // 2), ones(TAB_HIDDEN // 2))

    # fusion layer
    fusion_in = BERT_HIDDEN + TAB_HIDDEN // 2
    w3, b3 = lin(ks[4], fusion_in, FUSION_HIDDEN)
    w3, b3 = _fold_bn(w3, b3, ones(FUSION_HIDDEN), zeros(FUSION_HIDDEN),
                      zeros(FUSION_HIDDEN), ones(FUSION_HIDDEN))
    p["w3a"], p["w3b"] = w3[:BERT_HIDDEN], w3[BERT_HIDDEN:]
    p["b3"] = b3
    w4, b4 = lin(ks[5], FUSION_HIDDEN, FUSION_HIDDEN // 2)
    p["w4"], p["b4"] = _fold_bn(w4, b4, ones(FUSION_HIDDEN // 2), zeros(FUSION_HIDDEN // 2),
                                zeros(FUSION_HIDDEN // 2), ones(FUSION_HIDDEN // 2))

    # classifier (no BN)
    p["w5"], p["b5"] = lin(ks[6], FUSION_HIDDEN // 2, CLS_HIDDEN)
    p["w6"], p["b6"] = lin(ks[7], CLS_HIDDEN, NUM_CLASSES)
    return p


@jax.jit
def multimodal_resume_classifier(params, input_ids, attention_masks, tabular_features):
    """Forward pass. Returns logits of shape (batch,)."""
    B, S = input_ids.shape
    TB, TS, B_pad, S_pad, n_buf, vmem_limit = _pick_tiles(B, S)

    # glue: embedding gather on a bf16 table (2 B/elem read) with the attention mask
    # folded into the same fusion, so the kernel streams pre-masked bf16 activations
    # and never touches a (TB, TS) mask block in its inner loop.
    embed_bf16 = params["embed"].astype(jnp.bfloat16)
    mask_bf16 = attention_masks.astype(jnp.bfloat16)
    emb = jnp.take(embed_bf16, input_ids, axis=0) * mask_bf16[:, :, None]  # (B, S, 768)
    tab = tabular_features.astype(jnp.float32)                            # (B, 5)
    # exact divide (not approx reciprocal) for the masked mean; clamp for empty rows.
    counts = jnp.sum(attention_masks.astype(jnp.float32), axis=1, keepdims=True)
    inv_count = 1.0 / jnp.maximum(counts, 1.0)                             # (B, 1)

    # pad only when needed (an unconditional pad would add an extra HBM pass over emb).
    if B_pad != B or S_pad != S:
        emb = jnp.pad(emb, ((0, B_pad - B), (0, S_pad - S), (0, 0)))
    if B_pad != B:
        tab = jnp.pad(tab, ((0, B_pad - B), (0, 0)))
        inv_count = jnp.pad(inv_count, ((0, B_pad - B), (0, 0)))

    row = lambda v: v.reshape(1, -1)   # biases / w6 as (1, d) rows for in-kernel broadcast
    as_bf16 = lambda w: w.astype(jnp.bfloat16)

    kernel_inputs = (
        emb, inv_count, tab,
        as_bf16(params["wp"]), row(params["bp"]),
        params["w1"], row(params["b1"]), params["w2"], row(params["b2"]),
        as_bf16(params["w3a"]), as_bf16(params["w3b"]), row(params["b3"]),
        as_bf16(params["w4"]), row(params["b4"]),
        as_bf16(params["w5"]), row(params["b5"]), row(params["w6"]), row(params["b6"]),
    )

    # batch-blocked streams + VMEM-resident weights (constant index_map -> DMA'd once).
    emb_kwargs = {"pipeline_mode": pl.Buffered(n_buf)} if (S_pad // TS) > 1 else {}
    in_specs = [
        pl.BlockSpec((TB, TS, BERT_HIDDEN), lambda i, s: (i, s, 0), **emb_kwargs),
        pl.BlockSpec((TB, 1), lambda i, s: (i, 0)),
        pl.BlockSpec((TB, TABULAR_DIM), lambda i, s: (i, 0)),
    ] + [pl.BlockSpec(a.shape, lambda i, s: (0, 0)) for a in kernel_inputs[3:]]

    grid_spec = pltpu.PrefetchScalarGridSpec(
        num_scalar_prefetch=0,
        grid=(B_pad // TB, S_pad // TS),
        in_specs=in_specs,
        out_specs=pl.BlockSpec((TB, NUM_CLASSES), lambda i, s: (i, 0)),
        scratch_shapes=[
            pltpu.VMEM((TB, BERT_HIDDEN), jnp.float32),   # masked-sum accumulator
        ],
    )

    logits = pl.pallas_call(
        _fused_forward_kernel,
        out_shape=jax.ShapeDtypeStruct((B_pad, NUM_CLASSES), jnp.float32),
        grid_spec=grid_spec,
        compiler_params=pltpu.CompilerParams(
            dimension_semantics=("parallel", "arbitrary"),
            vmem_limit_bytes=vmem_limit,
        ),
    )(*kernel_inputs)

    return jnp.squeeze(logits[:B], axis=-1)  # matches logits.squeeze(-1)


def _reference_forward(params, input_ids, attention_masks, tabular_features):
    """Pure-JAX f32 reference for correctness checking."""
    emb = jnp.take(params["embed"], input_ids, axis=0).astype(jnp.float32)
    mask = attention_masks.astype(jnp.float32)
    m = mask[:, :, None]
    pooled = jnp.sum(emb * m, axis=1) / jnp.maximum(jnp.sum(m, axis=1), 1.0)
    text = jnp.tanh(pooled @ params["wp"] + params["bp"])
    tab = tabular_features.astype(jnp.float32)
    t1 = jax.nn.relu(tab @ params["w1"] + params["b1"])
    t2 = jax.nn.relu(t1 @ params["w2"] + params["b2"])
    fused = jnp.concatenate([text, t2], axis=1)
    w3 = jnp.concatenate([params["w3a"], params["w3b"]], axis=0)
    f1 = jax.nn.relu(fused @ w3 + params["b3"])
    f2 = jax.nn.relu(f1 @ params["w4"] + params["b4"])
    c1 = jax.nn.relu(f2 @ params["w5"] + params["b5"])
    logits = c1 @ params["w6"] + params["b6"]
    return jnp.squeeze(logits, axis=-1)


if __name__ == "__main__":
    key = jax.random.PRNGKey(0)
    k_param, k_ids, k_tab = jax.random.split(key, 3)

    B, S, VOCAB = 2, 8, 64
    params = init_params(k_param)

    input_ids = jax.random.randint(k_ids, (B, S), 0, VOCAB, dtype=jnp.int32)
    attention_masks = jnp.array(
        [[1, 1, 1, 1, 1, 1, 0, 0],
         [1, 1, 1, 1, 0, 0, 0, 0]], dtype=jnp.int32
    )
    tabular_features = jax.random.normal(k_tab, (B, TABULAR_DIM), jnp.float32)

    out = multimodal_resume_classifier(params, input_ids, attention_masks, tabular_features)
    out = jax.block_until_ready(out)

    ref = _reference_forward(params, input_ids, attention_masks, tabular_features)
    assert out.shape == (B,), out.shape
    # tolerance loosened vs the pure-f32 reference: embeddings, pooler and the
    # fusion/classifier weights run in bf16 inside the kernel (f32 accumulation).
    assert jnp.allclose(out, ref, atol=1e-2, rtol=1e-2), (out, ref)

    print("KERNEL_OK")
</pallas_src>

<mosaic_0001>
module attributes {stable_mosaic.version = 11 : i64} {
  func.func @_fused_forward_kernel(%arg0: i32, %arg1: i32, %arg2: memref<8x8x768xbf16, #tpu.memory_space<vmem>>, %arg3: memref<8x1xf32, #tpu.memory_space<vmem>>, %arg4: memref<8x5xf32, #tpu.memory_space<vmem>>, %arg5: memref<768x768xbf16, #tpu.memory_space<vmem>>, %arg6: memref<1x768xf32, #tpu.memory_space<vmem>>, %arg7: memref<5x128xf32, #tpu.memory_space<vmem>>, %arg8: memref<1x128xf32, #tpu.memory_space<vmem>>, %arg9: memref<128x64xf32, #tpu.memory_space<vmem>>, %arg10: memref<1x64xf32, #tpu.memory_space<vmem>>, %arg11: memref<768x256xbf16, #tpu.memory_space<vmem>>, %arg12: memref<64x256xbf16, #tpu.memory_space<vmem>>, %arg13: memref<1x256xf32, #tpu.memory_space<vmem>>, %arg14: memref<256x128xbf16, #tpu.memory_space<vmem>>, %arg15: memref<1x128xf32, #tpu.memory_space<vmem>>, %arg16: memref<128x64xbf16, #tpu.memory_space<vmem>>, %arg17: memref<1x64xf32, #tpu.memory_space<vmem>>, %arg18: memref<1x64xf32, #tpu.memory_space<vmem>>, %arg19: memref<1x1xf32, #tpu.memory_space<vmem>>, %arg20: memref<8x1xf32, #tpu.memory_space<vmem>>, %arg21: memref<8x768xf32, #tpu.memory_space<vmem>>) attributes {dimension_semantics = [#tpu.dimension_semantics<parallel>, #tpu.dimension_semantics<arbitrary>], iteration_bounds = array<i64: 1, 1>, scalar_prefetch = 0 : i64, scratch_operands = 1 : i64, tpu.core_type = #tpu.core_type<tc>, window_params = [{transform_indices = @transform_0, window_bounds = array<i64: 8, 8, 768>}, {transform_indices = @transform_1, window_bounds = array<i64: 8, 1>}, {transform_indices = @transform_2, window_bounds = array<i64: 8, 5>}, {pipeline_mode = #tpu.pipeline_mode<synchronous>, transform_indices = @transform_3, window_bounds = array<i64: 768, 768>}, {pipeline_mode = #tpu.pipeline_mode<synchronous>, transform_indices = @transform_4, window_bounds = array<i64: 1, 768>}, {pipeline_mode = #tpu.pipeline_mode<synchronous>, transform_indices = @transform_5, window_bounds = array<i64: 5, 128>}, {pipeline_mode = #tpu.pipeline_mode<synchronous>, transform_indices = @transform_6, window_bounds = array<i64: 1, 128>}, {pipeline_mode = #tpu.pipeline_mode<synchronous>, transform_indices = @transform_7, window_bounds = array<i64: 128, 64>}, {pipeline_mode = #tpu.pipeline_mode<synchronous>, transform_indices = @transform_8, window_bounds = array<i64: 1, 64>}, {pipeline_mode = #tpu.pipeline_mode<synchronous>, transform_indices = @transform_9, window_bounds = array<i64: 768, 256>}, {pipeline_mode = #tpu.pipeline_mode<synchronous>, transform_indices = @transform_10, window_bounds = array<i64: 64, 256>}, {pipeline_mode = #tpu.pipeline_mode<synchronous>, transform_indices = @transform_11, window_bounds = array<i64: 1, 256>}, {pipeline_mode = #tpu.pipeline_mode<synchronous>, transform_indices = @transform_12, window_bounds = array<i64: 256, 128>}, {pipeline_mode = #tpu.pipeline_mode<synchronous>, transform_indices = @transform_13, window_bounds = array<i64: 1, 128>}, {pipeline_mode = #tpu.pipeline_mode<synchronous>, transform_indices = @transform_14, window_bounds = array<i64: 128, 64>}, {pipeline_mode = #tpu.pipeline_mode<synchronous>, transform_indices = @transform_15, window_bounds = array<i64: 1, 64>}, {pipeline_mode = #tpu.pipeline_mode<synchronous>, transform_indices = @transform_16, window_bounds = array<i64: 1, 64>}, {pipeline_mode = #tpu.pipeline_mode<synchronous>, transform_indices = @transform_17, window_bounds = array<i64: 1, 1>}, {transform_indices = @transform_18, window_bounds = array<i64: 8, 1>}]} {
    %c0_i32 = arith.constant 0 : i32
    %0 = arith.cmpi eq, %arg1, %c0_i32 : i32
    %1 = arith.extui %0 : i1 to i32
    %c0_i32_0 = arith.constant 0 : i32
    %2 = arith.cmpi ne, %1, %c0_i32_0 : i32
    scf.if %2 {
      %cst_9 = arith.constant 0.000000e+00 : f32
      %12 = vector.broadcast %cst_9 : f32 to vector<8x768xf32>
      %c0_10 = arith.constant 0 : index
      %c0_11 = arith.constant 0 : index
      %13 = vector.load %arg21[%c0_10, %c0_11] : memref<8x768xf32, #tpu.memory_space<vmem>>, vector<8x768xf32>
      tpu.vector_store %arg21[%c0_10, %c0_11], %12 {strides = array<i32>} : memref<8x768xf32, #tpu.memory_space<vmem>>, vector<8x768xf32>,
    } else {
    }
    %c0 = arith.constant 0 : index
    %c0_1 = arith.constant 0 : index
    %3 = vector.load %arg21[%c0, %c0_1] : memref<8x768xf32, #tpu.memory_space<vmem>>, vector<8x768xf32>
    %c0_2 = arith.constant 0 : index
    %c0_3 = arith.constant 0 : index
    %c0_4 = arith.constant 0 : index
    %4 = vector.load %arg2[%c0_2, %c0_3, %c0_4] : memref<8x8x768xbf16, #tpu.memory_space<vmem>>, vector<8x8x768xbf16>
    %5 = arith.extf %4 : vector<8x8x768xbf16> to vector<8x8x768xf32>
    %cst = arith.constant dense<0.000000e+00> : vector<8x768xf32>
    %6 = vector.multi_reduction <add>, %5, %cst [1] : vector<8x8x768xf32> to vector<8x768xf32>
    %7 = arith.addf %3, %6 : vector<8x768xf32>
    %c0_5 = arith.constant 0 : index
    %c0_6 = arith.constant 0 : index
    %8 = vector.load %arg21[%c0_5, %c0_6] : memref<8x768xf32, #tpu.memory_space<vmem>>, vector<8x768xf32>
    tpu.vector_store %arg21[%c0_5, %c0_6], %7 {strides = array<i32>} : memref<8x768xf32, #tpu.memory_space<vmem>>, vector<8x768xf32>,
    %c0_i32_7 = arith.constant 0 : i32
    %9 = arith.cmpi eq, %arg1, %c0_i32_7 : i32
    %10 = arith.extui %9 : i1 to i32
    %c0_i32_8 = arith.constant 0 : i32
    %11 = arith.cmpi ne, %10, %c0_i32_8 : i32
    scf.if %11 {
      %c0_9 = arith.constant 0 : index
      %c0_10 = arith.constant 0 : index
      %12 = vector.load %arg21[%c0_9, %c0_10] : memref<8x768xf32, #tpu.memory_space<vmem>>, vector<8x768xf32>
      %c0_11 = arith.constant 0 : index
      %c0_12 = arith.constant 0 : index
      %13 = vector.load %arg3[%c0_11, %c0_12] : memref<8x1xf32, #tpu.memory_space<vmem>>, vector<8x1xf32>
      %14 = vector.broadcast %13 : vector<8x1xf32> to vector<8x768xf32>
      %15 = arith.mulf %12, %14 : vector<8x768xf32>
      %16 = arith.truncf %15 : vector<8x768xf32> to vector<8x768xbf16>
      %c0_13 = arith.constant 0 : index
      %c0_14 = arith.constant 0 : index
      %17 = vector.load %arg5[%c0_13, %c0_14] : memref<768x768xbf16, #tpu.memory_space<vmem>>, vector<768x768xbf16>
      %cst_15 = arith.constant dense<0.000000e+00> : vector<8x768xf32>
      %18 = tpu.matmul %16, %17, %cst_15 {dimension_numbers = #tpu.dot_dimension_numbers<[1], [0], [0], [1], [0, 0, 1, 1], [], []>} : vector<8x768xbf16>, vector<768x768xbf16>, vector<8x768xf32> -> vector<8x768xf32>
      %c0_16 = arith.constant 0 : index
      %c0_17 = arith.constant 0 : index
      %19 = vector.load %arg6[%c0_16, %c0_17] : memref<1x768xf32, #tpu.memory_space<vmem>>, vector<1x768xf32>
      %20 = vector.broadcast %19 : vector<1x768xf32> to vector<8x768xf32>
      %21 = arith.addf %18, %20 : vector<8x768xf32>
      %22 = math.tanh %21 : vector<8x768xf32>
      %c0_18 = arith.constant 0 : index
      %c0_19 = arith.constant 0 : index
      %23 = vector.load %arg4[%c0_18, %c0_19] : memref<8x5xf32, #tpu.memory_space<vmem>>, vector<8x5xf32>
      %c0_20 = arith.constant 0 : index
      %c0_21 = arith.constant 0 : index
      %24 = vector.load %arg7[%c0_20, %c0_21] : memref<5x128xf32, #tpu.memory_space<vmem>>, vector<5x128xf32>
      %cst_22 = arith.constant dense<0.000000e+00> : vector<8x128xf32>
      %25 = tpu.matmul %23, %24, %cst_22 {dimension_numbers = #tpu.dot_dimension_numbers<[1], [0], [0], [1], [0, 0, 1, 1], [], []>} : vector<8x5xf32>, vector<5x128xf32>, vector<8x128xf32> -> vector<8x128xf32>
      %c0_23 = arith.constant 0 : index
      %c0_24 = arith.constant 0 : index
      %26 = vector.load %arg8[%c0_23, %c0_24] : memref<1x128xf32, #tpu.memory_space<vmem>>, vector<1x128xf32>
      %27 = vector.broadcast %26 : vector<1x128xf32> to vector<8x128xf32>
      %28 = arith.addf %25, %27 : vector<8x128xf32>
      %cst_25 = arith.constant 0.000000e+00 : f32
      %29 = vector.broadcast %cst_25 : f32 to vector<8x128xf32>
      %30 = arith.maximumf %28, %29 : vector<8x128xf32>
      %c0_26 = arith.constant 0 : index
      %c0_27 = arith.constant 0 : index
      %31 = vector.load %arg9[%c0_26, %c0_27] : memref<128x64xf32, #tpu.memory_space<vmem>>, vector<128x64xf32>
      %cst_28 = arith.constant dense<0.000000e+00> : vector<8x64xf32>
      %32 = tpu.matmul %30, %31, %cst_28 {dimension_numbers = #tpu.dot_dimension_numbers<[1], [0], [0], [1], [0, 0, 1, 1], [], []>} : vector<8x128xf32>, vector<128x64xf32>, vector<8x64xf32> -> vector<8x64xf32>
      %c0_29 = arith.constant 0 : index
      %c0_30 = arith.constant 0 : index
      %33 = vector.load %arg10[%c0_29, %c0_30] : memref<1x64xf32, #tpu.memory_space<vmem>>, vector<1x64xf32>
      %34 = vector.broadcast %33 : vector<1x64xf32> to vector<8x64xf32>
      %35 = arith.addf %32, %34 : vector<8x64xf32>
      %cst_31 = arith.constant 0.000000e+00 : f32
      %36 = vector.broadcast %cst_31 : f32 to vector<8x64xf32>
      %37 = arith.maximumf %35, %36 : vector<8x64xf32>
      %38 = arith.truncf %22 : vector<8x768xf32> to vector<8x768xbf16>
      %c0_32 = arith.constant 0 : index
      %c0_33 = arith.constant 0 : index
      %39 = vector.load %arg11[%c0_32, %c0_33] : memref<768x256xbf16, #tpu.memory_space<vmem>>, vector<768x256xbf16>
      %cst_34 = arith.constant dense<0.000000e+00> : vector<8x256xf32>
      %40 = tpu.matmul %38, %39, %cst_34 {dimension_numbers = #tpu.dot_dimension_numbers<[1], [0], [0], [1], [0, 0, 1, 1], [], []>} : vector<8x768xbf16>, vector<768x256xbf16>, vector<8x256xf32> -> vector<8x256xf32>
      %41 = arith.truncf %37 : vector<8x64xf32> to vector<8x64xbf16>
      %c0_35 = arith.constant 0 : index
      %c0_36 = arith.constant 0 : index
      %42 = vector.load %arg12[%c0_35, %c0_36] : memref<64x256xbf16, #tpu.memory_space<vmem>>, vector<64x256xbf16>
      %cst_37 = arith.constant dense<0.000000e+00> : vector<8x256xf32>
      %43 = tpu.matmul %41, %42, %cst_37 {dimension_numbers = #tpu.dot_dimension_numbers<[1], [0], [0], [1], [0, 0, 1, 1], [], []>} : vector<8x64xbf16>, vector<64x256xbf16>, vector<8x256xf32> -> vector<8x256xf32>
      %44 = arith.addf %40, %43 : vector<8x256xf32>
      %c0_38 = arith.constant 0 : index
      %c0_39 = arith.constant 0 : index
      %45 = vector.load %arg13[%c0_38, %c0_39] : memref<1x256xf32, #tpu.memory_space<vmem>>, vector<1x256xf32>
      %46 = vector.broadcast %45 : vector<1x256xf32> to vector<8x256xf32>
      %47 = arith.addf %44, %46 : vector<8x256xf32>
      %cst_40 = arith.constant 0.000000e+00 : f32
      %48 = vector.broadcast %cst_40 : f32 to vector<8x256xf32>
      %49 = arith.maximumf %47, %48 : vector<8x256xf32>
      %50 = arith.truncf %49 : vector<8x256xf32> to vector<8x256xbf16>
      %c0_41 = arith.constant 0 : index
      %c0_42 = arith.constant 0 : index
      %51 = vector.load %arg14[%c0_41, %c0_42] : memref<256x128xbf16, #tpu.memory_space<vmem>>, vector<256x128xbf16>
      %cst_43 = arith.constant dense<0.000000e+00> : vector<8x128xf32>
      %52 = tpu.matmul %50, %51, %cst_43 {dimension_numbers = #tpu.dot_dimension_numbers<[1], [0], [0], [1], [0, 0, 1, 1], [], []>} : vector<8x256xbf16>, vector<256x128xbf16>, vector<8x128xf32> -> vector<8x128xf32>
      %c0_44 = arith.constant 0 : index
      %c0_45 = arith.constant 0 : index
      %53 = vector.load %arg15[%c0_44, %c0_45] : memref<1x128xf32, #tpu.memory_space<vmem>>, vector<1x128xf32>
      %54 = vector.broadcast %53 : vector<1x128xf32> to vector<8x128xf32>
      %55 = arith.addf %52, %54 : vector<8x128xf32>
      %cst_46 = arith.constant 0.000000e+00 : f32
      %56 = vector.broadcast %cst_46 : f32 to vector<8x128xf32>
      %57 = arith.maximumf %55, %56 : vector<8x128xf32>
      %58 = arith.truncf %57 : vector<8x128xf32> to vector<8x128xbf16>
      %c0_47 = arith.constant 0 : index
      %c0_48 = arith.constant 0 : index
      %59 = vector.load %arg16[%c0_47, %c0_48] : memref<128x64xbf16, #tpu.memory_space<vmem>>, vector<128x64xbf16>
      %cst_49 = arith.constant dense<0.000000e+00> : vector<8x64xf32>
      %60 = tpu.matmul %58, %59, %cst_49 {dimension_numbers = #tpu.dot_dimension_numbers<[1], [0], [0], [1], [0, 0, 1, 1], [], []>} : vector<8x128xbf16>, vector<128x64xbf16>, vector<8x64xf32> -> vector<8x64xf32>
      %c0_50 = arith.constant 0 : index
      %c0_51 = arith.constant 0 : index
      %61 = vector.load %arg17[%c0_50, %c0_51] : memref<1x64xf32, #tpu.memory_space<vmem>>, vector<1x64xf32>
      %62 = vector.broadcast %61 : vector<1x64xf32> to vector<8x64xf32>
      %63 = arith.addf %60, %62 : vector<8x64xf32>
      %cst_52 = arith.constant 0.000000e+00 : f32
      %64 = vector.broadcast %cst_52 : f32 to vector<8x64xf32>
      %65 = arith.maximumf %63, %64 : vector<8x64xf32>
      %c0_53 = arith.constant 0 : index
      %c0_54 = arith.constant 0 : index
      %66 = vector.load %arg18[%c0_53, %c0_54] : memref<1x64xf32, #tpu.memory_space<vmem>>, vector<1x64xf32>
      %67 = vector.broadcast %66 : vector<1x64xf32> to vector<8x64xf32>
      %68 = arith.mulf %65, %67 : vector<8x64xf32>
      %cst_55 = arith.constant dense<0.000000e+00> : vector<8xf32>
      %69 = vector.multi_reduction <add>, %68, %cst_55 [1] : vector<8x64xf32> to vector<8xf32>
      %70 = vector.shape_cast %69 : vector<8xf32> to vector<8x1xf32>
      %c0_56 = arith.constant 0 : index
      %c0_57 = arith.constant 0 : index
      %71 = vector.load %arg19[%c0_56, %c0_57] : memref<1x1xf32, #tpu.memory_space<vmem>>, vector<1x1xf32>
      %72 = vector.broadcast %71 : vector<1x1xf32> to vector<8x1xf32>
      %73 = arith.addf %70, %72 : vector<8x1xf32>
      %c0_58 = arith.constant 0 : index
      %c0_59 = arith.constant 0 : index
      %74 = vector.load %arg20[%c0_58, %c0_59] : memref<8x1xf32, #tpu.memory_space<vmem>>, vector<8x1xf32>
      tpu.vector_store %arg20[%c0_58, %c0_59], %73 {strides = array<i32>} : memref<8x1xf32, #tpu.memory_space<vmem>>, vector<8x1xf32>,
    } else {
    }
    return
  }
  func.func @transform_0(%arg0: i32, %arg1: i32) -> (i32, i32, i32) {
    %c0_i32 = arith.constant 0 : i32
    %c0_i32_0 = arith.constant 0 : i32
    return %arg0, %arg1, %c0_i32 : i32, i32, i32
  }
  func.func @transform_1(%arg0: i32, %arg1: i32) -> (i32, i32) {
    %c0_i32 = arith.constant 0 : i32
    %c0_i32_0 = arith.constant 0 : i32
    return %arg0, %c0_i32 : i32, i32
  }
  func.func @transform_2(%arg0: i32, %arg1: i32) -> (i32, i32) {
    %c0_i32 = arith.constant 0 : i32
    %c0_i32_0 = arith.constant 0 : i32
    return %arg0, %c0_i32 : i32, i32
  }
  func.func @transform_3(%arg0: i32, %arg1: i32) -> (i32, i32) {
    %c0_i32 = arith.constant 0 : i32
    %c0_i32_0 = arith.constant 0 : i32
    %c0_i32_1 = arith.constant 0 : i32
    return %c0_i32, %c0_i32_0 : i32, i32
  }
  func.func @transform_4(%arg0: i32, %arg1: i32) -> (i32, i32) {
    %c0_i32 = arith.constant 0 : i32
    %c0_i32_0 = arith.constant 0 : i32
    %c0_i32_1 = arith.constant 0 : i32
    return %c0_i32, %c0_i32_0 : i32, i32
  }
  func.func @transform_5(%arg0: i32, %arg1: i32) -> (i32, i32) {
    %c0_i32 = arith.constant 0 : i32
    %c0_i32_0 = arith.constant 0 : i32
    %c0_i32_1 = arith.constant 0 : i32
    return %c0_i32, %c0_i32_0 : i32, i32
  }
  func.func @transform_6(%arg0: i32, %arg1: i32) -> (i32, i32) {
    %c0_i32 = arith.constant 0 : i32
    %c0_i32_0 = arith.constant 0 : i32
    %c0_i32_1 = arith.constant 0 : i32
    return %c0_i32, %c0_i32_0 : i32, i32
  }
  func.func @transform_7(%arg0: i32, %arg1: i32) -> (i32, i32) {
    %c0_i32 = arith.constant 0 : i32
    %c0_i32_0 = arith.constant 0 : i32
    %c0_i32_1 = arith.constant 0 : i32
    return %c0_i32, %c0_i32_0 : i32, i32
  }
  func.func @transform_8(%arg0: i32, %arg1: i32) -> (i32, i32) {
    %c0_i32 = arith.constant 0 : i32
    %c0_i32_0 = arith.constant 0 : i32
    %c0_i32_1 = arith.constant 0 : i32
    return %c0_i32, %c0_i32_0 : i32, i32
  }
  func.func @transform_9(%arg0: i32, %arg1: i32) -> (i32, i32) {
    %c0_i32 = arith.constant 0 : i32
    %c0_i32_0 = arith.constant 0 : i32
    %c0_i32_1 = arith.constant 0 : i32
    return %c0_i32, %c0_i32_0 : i32, i32
  }
  func.func @transform_10(%arg0: i32, %arg1: i32) -> (i32, i32) {
    %c0_i32 = arith.constant 0 : i32
    %c0_i32_0 = arith.constant 0 : i32
    %c0_i32_1 = arith.constant 0 : i32
    return %c0_i32, %c0_i32_0 : i32, i32
  }
  func.func @transform_11(%arg0: i32, %arg1: i32) -> (i32, i32) {
    %c0_i32 = arith.constant 0 : i32
    %c0_i32_0 = arith.constant 0 : i32
    %c0_i32_1 = arith.constant 0 : i32
    return %c0_i32, %c0_i32_0 : i32, i32
  }
  func.func @transform_12(%arg0: i32, %arg1: i32) -> (i32, i32) {
    %c0_i32 = arith.constant 0 : i32
    %c0_i32_0 = arith.constant 0 : i32
    %c0_i32_1 = arith.constant 0 : i32
    return %c0_i32, %c0_i32_0 : i32, i32
  }
  func.func @transform_13(%arg0: i32, %arg1: i32) -> (i32, i32) {
    %c0_i32 = arith.constant 0 : i32
    %c0_i32_0 = arith.constant 0 : i32
    %c0_i32_1 = arith.constant 0 : i32
    return %c0_i32, %c0_i32_0 : i32, i32
  }
  func.func @transform_14(%arg0: i32, %arg1: i32) -> (i32, i32) {
    %c0_i32 = arith.constant 0 : i32
    %c0_i32_0 = arith.constant 0 : i32
    %c0_i32_1 = arith.constant 0 : i32
    return %c0_i32, %c0_i32_0 : i32, i32
  }
  func.func @transform_15(%arg0: i32, %arg1: i32) -> (i32, i32) {
    %c0_i32 = arith.constant 0 : i32
    %c0_i32_0 = arith.constant 0 : i32
    %c0_i32_1 = arith.constant 0 : i32
    return %c0_i32, %c0_i32_0 : i32, i32
  }
  func.func @transform_16(%arg0: i32, %arg1: i32) -> (i32, i32) {
    %c0_i32 = arith.constant 0 : i32
    %c0_i32_0 = arith.constant 0 : i32
    %c0_i32_1 = arith.constant 0 : i32
    return %c0_i32, %c0_i32_0 : i32, i32
  }
  func.func @transform_17(%arg0: i32, %arg1: i32) -> (i32, i32) {
    %c0_i32 = arith.constant 0 : i32
    %c0_i32_0 = arith.constant 0 : i32
    %c0_i32_1 = arith.constant 0 : i32
    return %c0_i32, %c0_i32_0 : i32, i32
  }
  func.func @transform_18(%arg0: i32, %arg1: i32) -> (i32, i32) {
    %c0_i32 = arith.constant 0 : i32
    %c0_i32_0 = arith.constant 0 : i32
    return %arg0, %c0_i32 : i32, i32
  }
}

</mosaic_0001>

<llo_original>
// kernel: multimodal_resume_classifier.1
$region0: #{multimodal_resume_classifier.1}
  #allocation0 [shape = 'u32[]', space=smem, size = 0x4, offset = 0x4, fixed_abs, tag = 'smem constant byte address 0x4 - core index']
  #allocation1 [shape = 'u32[72,128]{1,0:T(1,128)}', space=vmem, size = 0x9000, scoped, tag = 'internal scratch']
  #allocation2 [shape = 'f32[8,768]{1,0:T(8,128)}', space=vmem, size = 0x6000, scoped, tag = 'scratch operand']
  #allocation3 [shape = 'f32[1,1]{1,0:T(1,128)S(1)}', space=vmem, size = 0x200, scoped, tag = 'scoped memory for multimodal_resume_classifier.1']
  %s0 = inlined_call_operand.vmem [shape: bf16[8,8,768], index: 0, kind: input, shape index: {}]
  %s1 = inlined_call_operand.vmem [shape: f32[8,1], index: 1, kind: input, shape index: {}]
  %s2 = inlined_call_operand.vmem [shape: f32[8,5], index: 2, kind: input, shape index: {}]
  %s3 = inlined_call_operand.vmem [shape: bf16[768,768], index: 3, kind: input, shape index: {}]
  %s4 = inlined_call_operand.vmem [shape: f32[1,768], index: 4, kind: input, shape index: {}]
  %s5 = inlined_call_operand.vmem [shape: f32[5,128], index: 5, kind: input, shape index: {}]
  %s6 = inlined_call_operand.vmem [shape: f32[1,128], index: 6, kind: input, shape index: {}]
  %s7 = inlined_call_operand.vmem [shape: f32[128,64], index: 7, kind: input, shape index: {}]
  %s8 = inlined_call_operand.vmem [shape: f32[1,64], index: 8, kind: input, shape index: {}]
  %s9 = inlined_call_operand.vmem [shape: bf16[768,256], index: 9, kind: input, shape index: {}]
  %s10 = inlined_call_operand.vmem [shape: bf16[64,256], index: 10, kind: input, shape index: {}]
  %s11 = inlined_call_operand.vmem [shape: f32[1,256], index: 11, kind: input, shape index: {}]
  %s12 = inlined_call_operand.vmem [shape: bf16[256,128], index: 12, kind: input, shape index: {}]
  %s13 = inlined_call_operand.vmem [shape: f32[1,128], index: 13, kind: input, shape index: {}]
  %s14 = inlined_call_operand.vmem [shape: bf16[128,64], index: 14, kind: input, shape index: {}]
  %s15 = inlined_call_operand.vmem [shape: f32[1,64], index: 15, kind: input, shape index: {}]
  %s16 = inlined_call_operand.vmem [shape: f32[1,64], index: 16, kind: input, shape index: {}]
  %s17 = inlined_call_operand.<no memory space> [shape: f32[1,1], index: 17, kind: input, shape index: {}]
  %s18 = inlined_call_operand.vmem [shape: f32[8,1], index: 18, kind: output, shape index: {}]
  %s19 = sld [smem:[#allocation0]]
  $region90: #{multimodal_resume_classifier.1} parent=0
    _
  %s21 = ssub.s32 1, %s19
  %s22 = scalar_select 0, %s21, %s19
  %v23 = vstv %s17
  %24 = vst [vmem:[#allocation3] sm:$0x1] %v23
  // Predicated region
  $region2: #{multimodal_resume_classifier.1} parent=0 // pred_check
    _
  $region3: #{multimodal_resume_classifier.1} parent=0 // pred_check_branch
    %26 = sbr.rel (0) target = $region5
  $region4: #{multimodal_resume_classifier.1} parent=0 // pred_region
    _
  $region5: #{multimodal_resume_classifier.1} parent=0 // pred_fallthru
    _
  // Predicated region
  $region6: #{multimodal_resume_classifier.1} parent=0 // pred_check
    _
  $region7: #{multimodal_resume_classifier.1} parent=0 // pred_check_branch
    %28 = sbr.rel (0) target = $region9
  $region8: #{multimodal_resume_classifier.1} parent=0 // pred_region
    _
  $region9: #{multimodal_resume_classifier.1} parent=0 // pred_fallthru
    _
  // Predicated region
  $region10: #{multimodal_resume_classifier.1} parent=0 // pred_check
    _
  $region11: #{multimodal_resume_classifier.1} parent=0 // pred_check_branch
    %30 = sbr.rel (0) target = $region13
  $region12: #{multimodal_resume_classifier.1} parent=0 // pred_region
    _
  $region13: #{multimodal_resume_classifier.1} parent=0 // pred_fallthru
    _
  // Predicated region
  $region14: #{multimodal_resume_classifier.1} parent=0 // pred_check
    _
  $region15: #{multimodal_resume_classifier.1} parent=0 // pred_check_branch
    %32 = sbr.rel (0) target = $region17
  $region16: #{multimodal_resume_classifier.1} parent=0 // pred_region
    _
  $region17: #{multimodal_resume_classifier.1} parent=0 // pred_fallthru
    _
  // Predicated region
  $region18: #{multimodal_resume_classifier.1} parent=0 // pred_check
    _
  $region19: #{multimodal_resume_classifier.1} parent=0 // pred_check_branch
    %34 = sbr.rel (0) target = $region21
  $region20: #{multimodal_resume_classifier.1} parent=0 // pred_region
    _
  $region21: #{multimodal_resume_classifier.1} parent=0 // pred_fallthru
    _
  // Predicated region
  $region22: #{multimodal_resume_classifier.1} parent=0 // pred_check
    _
  $region23: #{multimodal_resume_classifier.1} parent=0 // pred_check_branch
    %36 = sbr.rel (0) target = $region25
  $region24: #{multimodal_resume_classifier.1} parent=0 // pred_region
    _
  $region25: #{multimodal_resume_classifier.1} parent=0 // pred_fallthru
    _
  // Predicated region
  $region26: #{multimodal_resume_classifier.1} parent=0 // pred_check
    _
  $region27: #{multimodal_resume_classifier.1} parent=0 // pred_check_branch
    %38 = sbr.rel (0) target = $region29
  $region28: #{multimodal_resume_classifier.1} parent=0 // pred_region
    _
  $region29: #{multimodal_resume_classifier.1} parent=0 // pred_fallthru
    _
  // Predicated region
  $region30: #{multimodal_resume_classifier.1} parent=0 // pred_check
    _
  $region31: #{multimodal_resume_classifier.1} parent=0 // pred_check_branch
    %40 = sbr.rel (0) target = $region33
  $region32: #{multimodal_resume_classifier.1} parent=0 // pred_region
    _
  $region33: #{multimodal_resume_classifier.1} parent=0 // pred_fallthru
    _
  // Predicated region
  $region34: #{multimodal_resume_classifier.1} parent=0 // pred_check
    _
  $region35: #{multimodal_resume_classifier.1} parent=0 // pred_check_branch
    %42 = sbr.rel (0) target = $region37
  $region36: #{multimodal_resume_classifier.1} parent=0 // pred_region
    _
  $region37: #{multimodal_resume_classifier.1} parent=0 // pred_fallthru
    _
  // Predicated region
  $region38: #{multimodal_resume_classifier.1} parent=0 // pred_check
    _
  $region39: #{multimodal_resume_classifier.1} parent=0 // pred_check_branch
    %44 = sbr.rel (0) target = $region41
  $region40: #{multimodal_resume_classifier.1} parent=0 // pred_region
    _
  $region41: #{multimodal_resume_classifier.1} parent=0 // pred_fallthru
    _
  // Predicated region
  $region42: #{multimodal_resume_classifier.1} parent=0 // pred_check
    _
  $region43: #{multimodal_resume_classifier.1} parent=0 // pred_check_branch
    %46 = sbr.rel (0) target = $region45
  $region44: #{multimodal_resume_classifier.1} parent=0 // pred_region
    _
  $region45: #{multimodal_resume_classifier.1} parent=0 // pred_fallthru
    _
  // Predicated region
  $region46: #{multimodal_resume_classifier.1} parent=0 // pred_check
    _
  $region47: #{multimodal_resume_classifier.1} parent=0 // pred_check_branch
    %48 = sbr.rel (0) target = $region49
  $region48: #{multimodal_resume_classifier.1} parent=0 // pred_region
    _
  $region49: #{multimodal_resume_classifier.1} parent=0 // pred_fallthru
    _
  // Predicated region
  $region50: #{multimodal_resume_classifier.1} parent=0 // pred_check
    _
  $region51: #{multimodal_resume_classifier.1} parent=0 // pred_check_branch
    %50 = sbr.rel (0) target = $region53
  $region52: #{multimodal_resume_classifier.1} parent=0 // pred_region
    _
  $region53: #{multimodal_resume_classifier.1} parent=0 // pred_fallthru
    _
  // Predicated region
  $region54: #{multimodal_resume_classifier.1} parent=0 // pred_check
    _
  $region55: #{multimodal_resume_classifier.1} parent=0 // pred_check_branch
    %52 = sbr.rel (0) target = $region57
  $region56: #{multimodal_resume_classifier.1} parent=0 // pred_region
    _
  $region57: #{multimodal_resume_classifier.1} parent=0 // pred_fallthru
    _
  // Predicated region
  $region58: #{multimodal_resume_classifier.1} parent=0 // pred_check
    _
  $region59: #{multimodal_resume_classifier.1} parent=0 // pred_check_branch
    %54 = sbr.rel (0) target = $region61
  $region60: #{multimodal_resume_classifier.1} parent=0 // pred_region
    _
  $region61: #{multimodal_resume_classifier.1} parent=0 // pred_fallthru
    _
  // Predicated region
  $region62: #{multimodal_resume_classifier.1} parent=0 // pred_check
    _
  $region63: #{multimodal_resume_classifier.1} parent=0 // pred_check_branch
    %56 = sbr.rel (0) target = $region65
  $region64: #{multimodal_resume_classifier.1} parent=0 // pred_region
    _
  $region65: #{multimodal_resume_classifier.1} parent=0 // pred_fallthru
    _
  // Predicated region
  $region66: #{multimodal_resume_classifier.1} parent=0 // pred_check
    _
  $region67: #{multimodal_resume_classifier.1} parent=0 // pred_check_branch
    %58 = sbr.rel (0) target = $region69
  $region68: #{multimodal_resume_classifier.1} parent=0 // pred_region
    _
  $region69: #{multimodal_resume_classifier.1} parent=0 // pred_fallthru
    _
  // Predicated region
  $region70: #{multimodal_resume_classifier.1} parent=0 // pred_check
    _
  $region71: #{multimodal_resume_classifier.1} parent=0 // pred_check_branch
    %60 = sbr.rel (0) target = $region73
  $region72: #{multimodal_resume_classifier.1} parent=0 // pred_region
    _
  $region73: #{multimodal_resume_classifier.1} parent=0 // pred_fallthru
    _
  %p62 = scmp.eq.s32.totalorder 0, 0
  // Predicated region
  $region74: #{multimodal_resume_classifier.1} parent=0 // pred_check
    %p63 = pneg %p62
  $region75: #{multimodal_resume_classifier.1} parent=0 // pred_check_branch
    %65 = sbr.rel (%p63) target = $region77
  $region76: #{multimodal_resume_classifier.1} parent=0 // pred_region
    %66 = vst [vmem:[#allocation2] sm:$0xff] 0.0
    %67 = vst [vmem:[#allocation2 + $0x8] sm:$0xff] 0.0
    %68 = vst [vmem:[#allocation2 + $0x10] sm:$0xff] 0.0
    %69 = vst [vmem:[#allocation2 + $0x18] sm:$0xff] 0.0
    %70 = vst [vmem:[#allocation2 + $0x20] sm:$0xff] 0.0
    %71 = vst [vmem:[#allocation2 + $0x28] sm:$0xff] 0.0
  $region77: #{multimodal_resume_classifier.1} parent=0 // pred_fallthru
    _
  %v72 = vld [vmem:[#allocation2] sm:$0xff]
  %v73 = vld [vmem:[#allocation2 + $0x8] sm:$0xff]
  %v74 = vld [vmem:[#allocation2 + $0x10] sm:$0xff]
  %v75 = vld [vmem:[#allocation2 + $0x18] sm:$0xff]
  %v76 = vld [vmem:[#allocation2 + $0x20] sm:$0xff]
  %v77 = vld [vmem:[#allocation2 + $0x28] sm:$0xff]
  %v78 = vld [vmem:[%s0] sm:$0xff]
  %v79 = vld [vmem:[%s0 + $0x8] sm:$0xff]
  %v80 = vld [vmem:[%s0 + $0x10] sm:$0xff]
  %v81 = vld [vmem:[%s0 + $0x18] sm:$0xff]
  %v82 = vld [vmem:[%s0 + $0x20] sm:$0xff]
  %v83 = vld [vmem:[%s0 + $0x28] sm:$0xff]
  %v84 = vld [vmem:[%s0 + $0x30] sm:$0xff]
  %v85 = vld [vmem:[%s0 + $0x38] sm:$0xff]
  %v86 = vld [vmem:[%s0 + $0x40] sm:$0xff]
  %v87 = vld [vmem:[%s0 + $0x48] sm:$0xff]
  %v88 = vld [vmem:[%s0 + $0x50] sm:$0xff]
  %v89 = vld [vmem:[%s0 + $0x58] sm:$0xff]
  %v90 = vld [vmem:[%s0 + $0x60] sm:$0xff]
  %v91 = vld [vmem:[%s0 + $0x68] sm:$0xff]
  %v92 = vld [vmem:[%s0 + $0x70] sm:$0xff]
  %v93 = vld [vmem:[%s0 + $0x78] sm:$0xff]
  %v94 = vld [vmem:[%s0 + $0x80] sm:$0xff]
  %v95 = vld [vmem:[%s0 + $0x88] sm:$0xff]
  %v96 = vld [vmem:[%s0 + $0x90] sm:$0xff]
  %v97 = vld [vmem:[%s0 + $0x98] sm:$0xff]
  %v98 = vld [vmem:[%s0 + $0xa0] sm:$0xff]
  %v99 = vld [vmem:[%s0 + $0xa8] sm:$0xff]
  %v100 = vld [vmem:[%s0 + $0xb0] sm:$0xff]
  %v101 = vld [vmem:[%s0 + $0xb8] sm:$0xff]
  %v102 = vunpack.c.l.bf16 %v78
  %v103 = vunpack.c.h.bf16 %v78
  %v104 = vunpack.c.l.bf16 %v79
  %v105 = vunpack.c.h.bf16 %v79
  %v106 = vunpack.c.l.bf16 %v80
  %v107 = vunpack.c.h.bf16 %v80
  %v108 = vunpack.c.l.bf16 %v81
  %v109 = vunpack.c.h.bf16 %v81
  %v110 = vunpack.c.l.bf16 %v82
  %v111 = vunpack.c.h.bf16 %v82
  %v112 = vunpack.c.l.bf16 %v83
  %v113 = vunpack.c.h.bf16 %v83
  %v114 = vunpack.c.l.bf16 %v84
  %v115 = vunpack.c.h.bf16 %v84
  %v116 = vunpack.c.l.bf16 %v85
  %v117 = vunpack.c.h.bf16 %v85
  %v118 = vunpack.c.l.bf16 %v86
  %v119 = vunpack.c.h.bf16 %v86
  %v120 = vunpack.c.l.bf16 %v87
  %v121 = vunpack.c.h.bf16 %v87
  %v122 = vunpack.c.l.bf16 %v88
  %v123 = vunpack.c.h.bf16 %v88
  %v124 = vunpack.c.l.bf16 %v89
  %v125 = vunpack.c.h.bf16 %v89
  %v126 = vunpack.c.l.bf16 %v90
  %v127 = vunpack.c.h.bf16 %v90
  %v128 = vunpack.c.l.bf16 %v91
  %v129 = vunpack.c.h.bf16 %v91
  %v130 = vunpack.c.l.bf16 %v92
  %v131 = vunpack.c.h.bf16 %v92
  %v132 = vunpack.c.l.bf16 %v93
  %v133 = vunpack.c.h.bf16 %v93
  %v134 = vunpack.c.l.bf16 %v94
  %v135 = vunpack.c.h.bf16 %v94
  %v136 = vunpack.c.l.bf16 %v95
  %v137 = vunpack.c.h.bf16 %v95
  %v138 = vunpack.c.l.bf16 %v96
  %v139 = vunpack.c.h.bf16 %v96
  %v140 = vunpack.c.l.bf16 %v97
  %v141 = vunpack.c.h.bf16 %v97
  %v142 = vunpack.c.l.bf16 %v98
  %v143 = vunpack.c.h.bf16 %v98
  %v144 = vunpack.c.l.bf16 %v99
  %v145 = vunpack.c.h.bf16 %v99
  %v146 = vunpack.c.l.bf16 %v100
  %v147 = vunpack.c.h.bf16 %v100
  %v148 = vunpack.c.l.bf16 %v101
  %v149 = vunpack.c.h.bf16 %v101
  %v150 = vrot.slane %v102, 4
  %v151 = vadd.f32 %v102, %v150
  %v152 = vrot.slane %v151, 2
  %v153 = vadd.f32 %v151, %v152
  %v154 = vrot.slane %v153, 1
  %v155 = vadd.f32 %v153, %v154
  %v156 = vrot.slane %v103, 4
  %v157 = vadd.f32 %v103, %v156
  %v158 = vrot.slane %v157, 2
  %v159 = vadd.f32 %v157, %v158
  %v160 = vrot.slane %v159, 1
  %v161 = vadd.f32 %v159, %v160
  %v162 = vrot.slane %v104, 4
  %v163 = vadd.f32 %v104, %v162
  %v164 = vrot.slane %v163, 2
  %v165 = vadd.f32 %v163, %v164
  %v166 = vrot.slane %v165, 1
  %v167 = vadd.f32 %v165, %v166
  %v168 = vrot.slane %v105, 4
  %v169 = vadd.f32 %v105, %v168
  %v170 = vrot.slane %v169, 2
  %v171 = vadd.f32 %v169, %v170
  %v172 = vrot.slane %v171, 1
  %v173 = vadd.f32 %v171, %v172
  %v174 = vrot.slane %v106, 4
  %v175 = vadd.f32 %v106, %v174
  %v176 = vrot.slane %v175, 2
  %v177 = vadd.f32 %v175, %v176
  %v178 = vrot.slane %v177, 1
  %v179 = vadd.f32 %v177, %v178
  %v180 = vrot.slane %v107, 4
  %v181 = vadd.f32 %v107, %v180
  %v182 = vrot.slane %v181, 2
  %v183 = vadd.f32 %v181, %v182
  %v184 = vrot.slane %v183, 1
  %v185 = vadd.f32 %v183, %v184
  %v186 = vrot.slane %v108, 4
  %v187 = vadd.f32 %v108, %v186
  %v188 = vrot.slane %v187, 2
  %v189 = vadd.f32 %v187, %v188
  %v190 = vrot.slane %v189, 1
  %v191 = vadd.f32 %v189, %v190
  %v192 = vrot.slane %v109, 4
  %v193 = vadd.f32 %v109, %v192
  %v194 = vrot.slane %v193, 2
  %v195 = vadd.f32 %v193, %v194
  %v196 = vrot.slane %v195, 1
  %v197 = vadd.f32 %v195, %v196
  %v198 = vrot.slane %v110, 4
  %v199 = vadd.f32 %v110, %v198
  %v200 = vrot.slane %v199, 2
  %v201 = vadd.f32 %v199, %v200
  %v202 = vrot.slane %v201, 1
  %v203 = vadd.f32 %v201, %v202
  %v204 = vrot.slane %v111, 4
  %v205 = vadd.f32 %v111, %v204
  %v206 = vrot.slane %v205, 2
  %v207 = vadd.f32 %v205, %v206
  %v208 = vrot.slane %v207, 1
  %v209 = vadd.f32 %v207, %v208
  %v210 = vrot.slane %v112, 4
  %v211 = vadd.f32 %v112, %v210
  %v212 = vrot.slane %v211, 2
  %v213 = vadd.f32 %v211, %v212
  %v214 = vrot.slane %v213, 1
  %v215 = vadd.f32 %v213, %v214
  %v216 = vrot.slane %v113, 4
  %v217 = vadd.f32 %v113, %v216
  %v218 = vrot.slane %v217, 2
  %v219 = vadd.f32 %v217, %v218
  %v220 = vrot.slane %v219, 1
  %v221 = vadd.f32 %v219, %v220
  %v222 = vrot.slane %v114, 4
  %v223 = vadd.f32 %v114, %v222
  %v224 = vrot.slane %v223, 2
  %v225 = vadd.f32 %v223, %v224
  %v226 = vrot.slane %v225, 1
  %v227 = vadd.f32 %v225, %v226
  %v228 = vrot.slane %v115, 4
  %v229 = vadd.f32 %v115, %v228
  %v230 = vrot.slane %v229, 2
  %v231 = vadd.f32 %v229, %v230
  %v232 = vrot.slane %v231, 1
  %v233 = vadd.f32 %v231, %v232
  %v234 = vrot.slane %v116, 4
  %v235 = vadd.f32 %v116, %v234
  %v236 = vrot.slane %v235, 2
  %v237 = vadd.f32 %v235, %v236
  %v238 = vrot.slane %v237, 1
  %v239 = vadd.f32 %v237, %v238
  %v240 = vrot.slane %v117, 4
  %v241 = vadd.f32 %v117, %v240
  %v242 = vrot.slane %v241, 2
  %v243 = vadd.f32 %v241, %v242
  %v244 = vrot.slane %v243, 1
  %v245 = vadd.f32 %v243, %v244
  %v246 = vrot.slane %v118, 4
  %v247 = vadd.f32 %v118, %v246
  %v248 = vrot.slane %v247, 2
  %v249 = vadd.f32 %v247, %v248
  %v250 = vrot.slane %v249, 1
  %v251 = vadd.f32 %v249, %v250
  %v252 = vrot.slane %v119, 4
  %v253 = vadd.f32 %v119, %v252
  %v254 = vrot.slane %v253, 2
  %v255 = vadd.f32 %v253, %v254
  %v256 = vrot.slane %v255, 1
  %v257 = vadd.f32 %v255, %v256
  %v258 = vrot.slane %v120, 4
  %v259 = vadd.f32 %v120, %v258
  %v260 = vrot.slane %v259, 2
  %v261 = vadd.f32 %v259, %v260
  %v262 = vrot.slane %v261, 1
  %v263 = vadd.f32 %v261, %v262
  %v264 = vrot.slane %v121, 4
  %v265 = vadd.f32 %v121, %v264
  %v266 = vrot.slane %v265, 2
  %v267 = vadd.f32 %v265, %v266
  %v268 = vrot.slane %v267, 1
  %v269 = vadd.f32 %v267, %v268
  %v270 = vrot.slane %v122, 4
  %v271 = vadd.f32 %v122, %v270
  %v272 = vrot.slane %v271, 2
  %v273 = vadd.f32 %v271, %v272
  %v274 = vrot.slane %v273, 1
  %v275 = vadd.f32 %v273, %v274
  %v276 = vrot.slane %v123, 4
  %v277 = vadd.f32 %v123, %v276
  %v278 = vrot.slane %v277, 2
  %v279 = vadd.f32 %v277, %v278
  %v280 = vrot.slane %v279, 1
  %v281 = vadd.f32 %v279, %v280
  %v282 = vrot.slane %v124, 4
  %v283 = vadd.f32 %v124, %v282
  %v284 = vrot.slane %v283, 2
  %v285 = vadd.f32 %v283, %v284
  %v286 = vrot.slane %v285, 1
  %v287 = vadd.f32 %v285, %v286
  %v288 = vrot.slane %v125, 4
  %v289 = vadd.f32 %v125, %v288
  %v290 = vrot.slane %v289, 2
  %v291 = vadd.f32 %v289, %v290
  %v292 = vrot.slane %v291, 1
  %v293 = vadd.f32 %v291, %v292
  %v294 = vrot.slane %v126, 4
  %v295 = vadd.f32 %v126, %v294
  %v296 = vrot.slane %v295, 2
  %v297 = vadd.f32 %v295, %v296
  %v298 = vrot.slane %v297, 1
  %v299 = vadd.f32 %v297, %v298
  %v300 = vrot.slane %v127, 4
  %v301 = vadd.f32 %v127, %v300
  %v302 = vrot.slane %v301, 2
  %v303 = vadd.f32 %v301, %v302
  %v304 = vrot.slane %v303, 1
  %v305 = vadd.f32 %v303, %v304
  %v306 = vrot.slane %v128, 4
  %v307 = vadd.f32 %v128, %v306
  %v308 = vrot.slane %v307, 2
  %v309 = vadd.f32 %v307, %v308
  %v310 = vrot.slane %v309, 1
  %v311 = vadd.f32 %v309, %v310
  %v312 = vrot.slane %v129, 4
  %v313 = vadd.f32 %v129, %v312
  %v314 = vrot.slane %v313, 2
  %v315 = vadd.f32 %v313, %v314
  %v316 = vrot.slane %v315, 1
  %v317 = vadd.f32 %v315, %v316
  %v318 = vrot.slane %v130, 4
  %v319 = vadd.f32 %v130, %v318
  %v320 = vrot.slane %v319, 2
  %v321 = vadd.f32 %v319, %v320
  %v322 = vrot.slane %v321, 1
  %v323 = vadd.f32 %v321, %v322
  %v324 = vrot.slane %v131, 4
  %v325 = vadd.f32 %v131, %v324
  %v326 = vrot.slane %v325, 2
  %v327 = vadd.f32 %v325, %v326
  %v328 = vrot.slane %v327, 1
  %v329 = vadd.f32 %v327, %v328
  %v330 = vrot.slane %v132, 4
  %v331 = vadd.f32 %v132, %v330
  %v332 = vrot.slane %v331, 2
  %v333 = vadd.f32 %v331, %v332
  %v334 = vrot.slane %v333, 1
  %v335 = vadd.f32 %v333, %v334
  %v336 = vrot.slane %v133, 4
  %v337 = vadd.f32 %v133, %v336
  %v338 = vrot.slane %v337, 2
  %v339 = vadd.f32 %v337, %v338
  %v340 = vrot.slane %v339, 1
  %v341 = vadd.f32 %v339, %v340
  %v342 = vrot.slane %v134, 4
  %v343 = vadd.f32 %v134, %v342
  %v344 = vrot.slane %v343, 2
  %v345 = vadd.f32 %v343, %v344
  %v346 = vrot.slane %v345, 1
  %v347 = vadd.f32 %v345, %v346
  %v348 = vrot.slane %v135, 4
  %v349 = vadd.f32 %v135, %v348
  %v350 = vrot.slane %v349, 2
  %v351 = vadd.f32 %v349, %v350
  %v352 = vrot.slane %v351, 1
  %v353 = vadd.f32 %v351, %v352
  %v354 = vrot.slane %v136, 4
  %v355 = vadd.f32 %v136, %v354
  %v356 = vrot.slane %v355, 2
  %v357 = vadd.f32 %v355, %v356
  %v358 = vrot.slane %v357, 1
  %v359 = vadd.f32 %v357, %v358
  %v360 = vrot.slane %v137, 4
  %v361 = vadd.f32 %v137, %v360
  %v362 = vrot.slane %v361, 2
  %v363 = vadd.f32 %v361, %v362
  %v364 = vrot.slane %v363, 1
  %v365 = vadd.f32 %v363, %v364
  %v366 = vrot.slane %v138, 4
  %v367 = vadd.f32 %v138, %v366
  %v368 = vrot.slane %v367, 2
  %v369 = vadd.f32 %v367, %v368
  %v370 = vrot.slane %v369, 1
  %v371 = vadd.f32 %v369, %v370
  %v372 = vrot.slane %v139, 4
  %v373 = vadd.f32 %v139, %v372
  %v374 = vrot.slane %v373, 2
  %v375 = vadd.f32 %v373, %v374
  %v376 = vrot.slane %v375, 1
  %v377 = vadd.f32 %v375, %v376
  %v378 = vrot.slane %v140, 4
  %v379 = vadd.f32 %v140, %v378
  %v380 = vrot.slane %v379, 2
  %v381 = vadd.f32 %v379, %v380
  %v382 = vrot.slane %v381, 1
  %v383 = vadd.f32 %v381, %v382
  %v384 = vrot.slane %v141, 4
  %v385 = vadd.f32 %v141, %v384
  %v386 = vrot.slane %v385, 2
  %v387 = vadd.f32 %v385, %v386
  %v388 = vrot.slane %v387, 1
  %v389 = vadd.f32 %v387, %v388
  %v390 = vrot.slane %v142, 4
  %v391 = vadd.f32 %v142, %v390
  %v392 = vrot.slane %v391, 2
  %v393 = vadd.f32 %v391, %v392
  %v394 = vrot.slane %v393, 1
  %v395 = vadd.f32 %v393, %v394
  %v396 = vrot.slane %v143, 4
  %v397 = vadd.f32 %v143, %v396
  %v398 = vrot.slane %v397, 2
  %v399 = vadd.f32 %v397, %v398
  %v400 = vrot.slane %v399, 1
  %v401 = vadd.f32 %v399, %v400
  %v402 = vrot.slane %v144, 4
  %v403 = vadd.f32 %v144, %v402
  %v404 = vrot.slane %v403, 2
  %v405 = vadd.f32 %v403, %v404
  %v406 = vrot.slane %v405, 1
  %v407 = vadd.f32 %v405, %v406
  %v408 = vrot.slane %v145, 4
  %v409 = vadd.f32 %v145, %v408
  %v410 = vrot.slane %v409, 2
  %v411 = vadd.f32 %v409, %v410
  %v412 = vrot.slane %v411, 1
  %v413 = vadd.f32 %v411, %v412
  %v414 = vrot.slane %v146, 4
  %v415 = vadd.f32 %v146, %v414
  %v416 = vrot.slane %v415, 2
  %v417 = vadd.f32 %v415, %v416
  %v418 = vrot.slane %v417, 1
  %v419 = vadd.f32 %v417, %v418
  %v420 = vrot.slane %v147, 4
  %v421 = vadd.f32 %v147, %v420
  %v422 = vrot.slane %v421, 2
  %v423 = vadd.f32 %v421, %v422
  %v424 = vrot.slane %v423, 1
  %v425 = vadd.f32 %v423, %v424
  %v426 = vrot.slane %v148, 4
  %v427 = vadd.f32 %v148, %v426
  %v428 = vrot.slane %v427, 2
  %v429 = vadd.f32 %v427, %v428
  %v430 = vrot.slane %v429, 1
  %v431 = vadd.f32 %v429, %v430
  %v432 = vrot.slane %v149, 4
  %v433 = vadd.f32 %v149, %v432
  %v434 = vrot.slane %v433, 2
  %v435 = vadd.f32 %v433, %v434
  %v436 = vrot.slane %v435, 1
  %v437 = vadd.f32 %v435, %v436
  %vm486 = vcmask 1041409
  %v487 = vsel %vm486, %v191, %v155
  %vm488 = vcmask 1042434
  %v489 = vsel %vm488, %v227, %v487
  %vm490 = vcmask 1043459
  %v491 = vsel %vm490, %v263, %v489
  %vm492 = vcmask 1044484
  %v493 = vsel %vm492, %v299, %v491
  %vm494 = vcmask 1045509
  %v495 = vsel %vm494, %v335, %v493
  %vm496 = vcmask 1046534
  %v497 = vsel %vm496, %v371, %v495
  %vm498 = vcmask 1047559
  %v499 = vsel %vm498, %v407, %v497
  %v500 = vsel %vm486, %v197, %v161
  %v501 = vsel %vm488, %v233, %v500
  %v502 = vsel %vm490, %v269, %v501
  %v503 = vsel %vm492, %v305, %v502
  %v504 = vsel %vm494, %v341, %v503
  %v505 = vsel %vm496, %v377, %v504
  %v506 = vsel %vm498, %v413, %v505
  %v507 = vsel %vm486, %v203, %v167
  %v508 = vsel %vm488, %v239, %v507
  %v509 = vsel %vm490, %v275, %v508
  %v510 = vsel %vm492, %v311, %v509
  %v511 = vsel %vm494, %v347, %v510
  %v512 = vsel %vm496, %v383, %v511
  %v513 = vsel %vm498, %v419, %v512
  %v514 = vsel %vm486, %v209, %v173
  %v515 = vsel %vm488, %v245, %v514
  %v516 = vsel %vm490, %v281, %v515
  %v517 = vsel %vm492, %v317, %v516
  %v518 = vsel %vm494, %v353, %v517
  %v519 = vsel %vm496, %v389, %v518
  %v520 = vsel %vm498, %v425, %v519
  %v521 = vsel %vm486, %v215, %v179
  %v522 = vsel %vm488, %v251, %v521
  %v523 = vsel %vm490, %v287, %v522
  %v524 = vsel %vm492, %v323, %v523
  %v525 = vsel %vm494, %v359, %v524
  %v526 = vsel %vm496, %v395, %v525
  %v527 = vsel %vm498, %v431, %v526
  %v528 = vsel %vm486, %v221, %v185
  %v529 = vsel %vm488, %v257, %v528
  %v530 = vsel %vm490, %v293, %v529
  %v531 = vsel %vm492, %v329, %v530
  %v532 = vsel %vm494, %v365, %v531
  %v533 = vsel %vm496, %v401, %v532
  %v534 = vsel %vm498, %v437, %v533
  %v541 = vadd.f32 %v72, %v499
  %v542 = vadd.f32 %v73, %v506
  %v543 = vadd.f32 %v74, %v513
  %v544 = vadd.f32 %v75, %v520
  %v545 = vadd.f32 %v76, %v527
  %v546 = vadd.f32 %v77, %v534
  %547 = vst [vmem:[#allocation2] sm:$0xff] %v541
  %548 = vst [vmem:[#allocation2 + $0x8] sm:$0xff] %v542
  %549 = vst [vmem:[#allocation2 + $0x10] sm:$0xff] %v543
  %550 = vst [vmem:[#allocation2 + $0x18] sm:$0xff] %v544
  %551 = vst [vmem:[#allocation2 + $0x20] sm:$0xff] %v545
  %552 = vst [vmem:[#allocation2 + $0x28] sm:$0xff] %v546
  // Predicated region
  $region78: #{multimodal_resume_classifier.1} parent=0 // pred_check
    %p553 = pneg %p62
  $region79: #{multimodal_resume_classifier.1} parent=0 // pred_check_branch
    %555 = sbr.rel (%p553) target = $region81
  $region80: #{multimodal_resume_classifier.1} parent=0 // pred_region
    %v556 = vld [vmem:[#allocation2] sm:$0xff]
    %v557 = vld [vmem:[#allocation2 + $0x8] sm:$0xff]
    %v558 = vld [vmem:[#allocation2 + $0x10] sm:$0xff]
    %v559 = vld [vmem:[#allocation2 + $0x18] sm:$0xff]
    %v560 = vld [vmem:[#allocation2 + $0x20] sm:$0xff]
    %v561 = vld [vmem:[#allocation2 + $0x28] sm:$0xff]
    %v562 = vld [vmem:[%s1] sm:$0xff]
    %564 = vset.pattern.permute.xlu0 0
    %565 = vperm.xlu0 %564, %v562
    %v566 = vpop.permute.xlu0 %565
    %v568 = vmul.f32 %v556, %v566
    %v569 = vmul.f32 %v557, %v566
    %v570 = vmul.f32 %v558, %v566
    %v571 = vmul.f32 %v559, %v566
    %v572 = vmul.f32 %v560, %v566
    %v573 = vmul.f32 %v561, %v566
    %v574 = vpack.c.bf16 %v568, %v568
    %v575 = vpack.c.bf16 %v569, %v569
    %v576 = vpack.c.bf16 %v570, %v570
    %v577 = vpack.c.bf16 %v571, %v571
    %v578 = vpack.c.bf16 %v572, %v572
    %v579 = vpack.c.bf16 %v573, %v573
    %v580 = vld [vmem:[%s3] sm:$0xff]
    %v581 = vld [vmem:[%s3 + $0x8] sm:$0xff]
    %v582 = vld [vmem:[%s3 + $0x10] sm:$0xff]
    %v583 = vld [vmem:[%s3 + $0x18] sm:$0xff]
    %v584 = vld [vmem:[%s3 + $0x20] sm:$0xff]
    %v585 = vld [vmem:[%s3 + $0x28] sm:$0xff]
    %v586 = vld [vmem:[%s3 + $0x30] sm:$0xff]
    %v587 = vld [vmem:[%s3 + $0x38] sm:$0xff]
    %v588 = vld [vmem:[%s3 + $0x40] sm:$0xff]
    %v589 = vld [vmem:[%s3 + $0x48] sm:$0xff]
    %v590 = vld [vmem:[%s3 + $0x50] sm:$0xff]
    %v591 = vld [vmem:[%s3 + $0x58] sm:$0xff]
    %v592 = vld [vmem:[%s3 + $0x60] sm:$0xff]
    %v593 = vld [vmem:[%s3 + $0x68] sm:$0xff]
    %v594 = vld [vmem:[%s3 + $0x70] sm:$0xff]
    %v595 = vld [vmem:[%s3 + $0x78] sm:$0xff]
    %v596 = vld [vmem:[%s3 + $0x80] sm:$0xff]
    %v597 = vld [vmem:[%s3 + $0x88] sm:$0xff]
    %v598 = vld [vmem:[%s3 + $0x90] sm:$0xff]
    %v599 = vld [vmem:[%s3 + $0x98] sm:$0xff]
    %v600 = vld [vmem:[%s3 + $0xa0] sm:$0xff]
    %v601 = vld [vmem:[%s3 + $0xa8] sm:$0xff]
    %v602 = vld [vmem:[%s3 + $0xb0] sm:$0xff]
    %v603 = vld [vmem:[%s3 + $0xb8] sm:$0xff]
    %v604 = vld [vmem:[%s3 + $0xc0] sm:$0xff]
    %v605 = vld [vmem:[%s3 + $0xc8] sm:$0xff]
    %v606 = vld [vmem:[%s3 + $0xd0] sm:$0xff]
    %v607 = vld [vmem:[%s3 + $0xd8] sm:$0xff]
    %v608 = vld [vmem:[%s3 + $0xe0] sm:$0xff]
    %v609 = vld [vmem:[%s3 + $0xe8] sm:$0xff]
    %v610 = vld [vmem:[%s3 + $0xf0] sm:$0xff]
    %v611 = vld [vmem:[%s3 + $0xf8] sm:$0xff]
    %v612 = vld [vmem:[%s3 + $0x100] sm:$0xff]
    %v613 = vld [vmem:[%s3 + $0x108] sm:$0xff]
    %v614 = vld [vmem:[%s3 + $0x110] sm:$0xff]
    %v615 = vld [vmem:[%s3 + $0x118] sm:$0xff]
    %v616 = vld [vmem:[%s3 + $0x120] sm:$0xff]
    %v617 = vld [vmem:[%s3 + $0x128] sm:$0xff]
    %v618 = vld [vmem:[%s3 + $0x130] sm:$0xff]
    %v619 = vld [vmem:[%s3 + $0x138] sm:$0xff]
    %v620 = vld [vmem:[%s3 + $0x140] sm:$0xff]
    %v621 = vld [vmem:[%s3 + $0x148] sm:$0xff]
    %v622 = vld [vmem:[%s3 + $0x150] sm:$0xff]
    %v623 = vld [vmem:[%s3 + $0x158] sm:$0xff]
    %v624 = vld [vmem:[%s3 + $0x160] sm:$0xff]
    %v625 = vld [vmem:[%s3 + $0x168] sm:$0xff]
    %v626 = vld [vmem:[%s3 + $0x170] sm:$0xff]
    %v627 = vld [vmem:[%s3 + $0x178] sm:$0xff]
    %v628 = vld [vmem:[%s3 + $0x180] sm:$0xff]
    %v629 = vld [vmem:[%s3 + $0x188] sm:$0xff]
    %v630 = vld [vmem:[%s3 + $0x190] sm:$0xff]
    %v631 = vld [vmem:[%s3 + $0x198] sm:$0xff]
    %v632 = vld [vmem:[%s3 + $0x1a0] sm:$0xff]
    %v633 = vld [vmem:[%s3 + $0x1a8] sm:$0xff]
    %v634 = vld [vmem:[%s3 + $0x1b0] sm:$0xff]
    %v635 = vld [vmem:[%s3 + $0x1b8] sm:$0xff]
    %v636 = vld [vmem:[%s3 + $0x1c0] sm:$0xff]
    %v637 = vld [vmem:[%s3 + $0x1c8] sm:$0xff]
    %v638 = vld [vmem:[%s3 + $0x1d0] sm:$0xff]
    %v639 = vld [vmem:[%s3 + $0x1d8] sm:$0xff]
    %v640 = vld [vmem:[%s3 + $0x1e0] sm:$0xff]
    %v641 = vld [vmem:[%s3 + $0x1e8] sm:$0xff]
    %v642 = vld [vmem:[%s3 + $0x1f0] sm:$0xff]
    %v643 = vld [vmem:[%s3 + $0x1f8] sm:$0xff]
    %v644 = vld [vmem:[%s3 + $0x200] sm:$0xff]
    %v645 = vld [vmem:[%s3 + $0x208] sm:$0xff]
    %v646 = vld [vmem:[%s3 + $0x210] sm:$0xff]
    %v647 = vld [vmem:[%s3 + $0x218] sm:$0xff]
    %v648 = vld [vmem:[%s3 + $0x220] sm:$0xff]
    %v649 = vld [vmem:[%s3 + $0x228] sm:$0xff]
    %v650 = vld [vmem:[%s3 + $0x230] sm:$0xff]
    %v651 = vld [vmem:[%s3 + $0x238] sm:$0xff]
    %v652 = vld [vmem:[%s3 + $0x240] sm:$0xff]
    %v653 = vld [vmem:[%s3 + $0x248] sm:$0xff]
    %v654 = vld [vmem:[%s3 + $0x250] sm:$0xff]
    %v655 = vld [vmem:[%s3 + $0x258] sm:$0xff]
    %v656 = vld [vmem:[%s3 + $0x260] sm:$0xff]
    %v657 = vld [vmem:[%s3 + $0x268] sm:$0xff]
    %v658 = vld [vmem:[%s3 + $0x270] sm:$0xff]
    %v659 = vld [vmem:[%s3 + $0x278] sm:$0xff]
    %v660 = vld [vmem:[%s3 + $0x280] sm:$0xff]
    %v661 = vld [vmem:[%s3 + $0x288] sm:$0xff]
    %v662 = vld [vmem:[%s3 + $0x290] sm:$0xff]
    %v663 = vld [vmem:[%s3 + $0x298] sm:$0xff]
    %v664 = vld [vmem:[%s3 + $0x2a0] sm:$0xff]
    %v665 = vld [vmem:[%s3 + $0x2a8] sm:$0xff]
    %v666 = vld [vmem:[%s3 + $0x2b0] sm:$0xff]
    %v667 = vld [vmem:[%s3 + $0x2b8] sm:$0xff]
    %v668 = vld [vmem:[%s3 + $0x2c0] sm:$0xff]
    %v669 = vld [vmem:[%s3 + $0x2c8] sm:$0xff]
    %v670 = vld [vmem:[%s3 + $0x2d0] sm:$0xff]
    %v671 = vld [vmem:[%s3 + $0x2d8] sm:$0xff]
    %v672 = vld [vmem:[%s3 + $0x2e0] sm:$0xff]
    %v673 = vld [vmem:[%s3 + $0x2e8] sm:$0xff]
    %v674 = vld [vmem:[%s3 + $0x2f0] sm:$0xff]
    %v675 = vld [vmem:[%s3 + $0x2f8] sm:$0xff]
    %v676 = vld [vmem:[%s3 + $0x300] sm:$0xff]
    %v677 = vld [vmem:[%s3 + $0x308] sm:$0xff]
    %v678 = vld [vmem:[%s3 + $0x310] sm:$0xff]
    %v679 = vld [vmem:[%s3 + $0x318] sm:$0xff]
    %v680 = vld [vmem:[%s3 + $0x320] sm:$0xff]
    %v681 = vld [vmem:[%s3 + $0x328] sm:$0xff]
    %v682 = vld [vmem:[%s3 + $0x330] sm:$0xff]
    %v683 = vld [vmem:[%s3 + $0x338] sm:$0xff]
    %v684 = vld [vmem:[%s3 + $0x340] sm:$0xff]
    %v685 = vld [vmem:[%s3 + $0x348] sm:$0xff]
    %v686 = vld [vmem:[%s3 + $0x350] sm:$0xff]
    %v687 = vld [vmem:[%s3 + $0x358] sm:$0xff]
    %v688 = vld [vmem:[%s3 + $0x360] sm:$0xff]
    %v689 = vld [vmem:[%s3 + $0x368] sm:$0xff]
    %v690 = vld [vmem:[%s3 + $0x370] sm:$0xff]
    %v691 = vld [vmem:[%s3 + $0x378] sm:$0xff]
    %v692 = vld [vmem:[%s3 + $0x380] sm:$0xff]
    %v693 = vld [vmem:[%s3 + $0x388] sm:$0xff]
    %v694 = vld [vmem:[%s3 + $0x390] sm:$0xff]
    %v695 = vld [vmem:[%s3 + $0x398] sm:$0xff]
    %v696 = vld [vmem:[%s3 + $0x3a0] sm:$0xff]
    %v697 = vld [vmem:[%s3 + $0x3a8] sm:$0xff]
    %v698 = vld [vmem:[%s3 + $0x3b0] sm:$0xff]
    %v699 = vld [vmem:[%s3 + $0x3b8] sm:$0xff]
    %v700 = vld [vmem:[%s3 + $0x3c0] sm:$0xff]
    %v701 = vld [vmem:[%s3 + $0x3c8] sm:$0xff]
    %v702 = vld [vmem:[%s3 + $0x3d0] sm:$0xff]
    %v703 = vld [vmem:[%s3 + $0x3d8] sm:$0xff]
    %v704 = vld [vmem:[%s3 + $0x3e0] sm:$0xff]
    %v705 = vld [vmem:[%s3 + $0x3e8] sm:$0xff]
    %v706 = vld [vmem:[%s3 + $0x3f0] sm:$0xff]
    %v707 = vld [vmem:[%s3 + $0x3f8] sm:$0xff]
    %v708 = vld [vmem:[%s3 + $0x400] sm:$0xff]
    %v709 = vld [vmem:[%s3 + $0x408] sm:$0xff]
    %v710 = vld [vmem:[%s3 + $0x410] sm:$0xff]
    %v711 = vld [vmem:[%s3 + $0x418] sm:$0xff]
    %v712 = vld [vmem:[%s3 + $0x420] sm:$0xff]
    %v713 = vld [vmem:[%s3 + $0x428] sm:$0xff]
    %v714 = vld [vmem:[%s3 + $0x430] sm:$0xff]
    %v715 = vld [vmem:[%s3 + $0x438] sm:$0xff]
    %v716 = vld [vmem:[%s3 + $0x440] sm:$0xff]
    %v717 = vld [vmem:[%s3 + $0x448] sm:$0xff]
    %v718 = vld [vmem:[%s3 + $0x450] sm:$0xff]
    %v719 = vld [vmem:[%s3 + $0x458] sm:$0xff]
    %v720 = vld [vmem:[%s3 + $0x460] sm:$0xff]
    %v721 = vld [vmem:[%s3 + $0x468] sm:$0xff]
    %v722 = vld [vmem:[%s3 + $0x470] sm:$0xff]
    %v723 = vld [vmem:[%s3 + $0x478] sm:$0xff]
    %v724 = vld [vmem:[%s3 + $0x480] sm:$0xff]
    %v725 = vld [vmem:[%s3 + $0x488] sm:$0xff]
    %v726 = vld [vmem:[%s3 + $0x490] sm:$0xff]
    %v727 = vld [vmem:[%s3 + $0x498] sm:$0xff]
    %v728 = vld [vmem:[%s3 + $0x4a0] sm:$0xff]
    %v729 = vld [vmem:[%s3 + $0x4a8] sm:$0xff]
    %v730 = vld [vmem:[%s3 + $0x4b0] sm:$0xff]
    %v731 = vld [vmem:[%s3 + $0x4b8] sm:$0xff]
    %v732 = vld [vmem:[%s3 + $0x4c0] sm:$0xff]
    %v733 = vld [vmem:[%s3 + $0x4c8] sm:$0xff]
    %v734 = vld [vmem:[%s3 + $0x4d0] sm:$0xff]
    %v735 = vld [vmem:[%s3 + $0x4d8] sm:$0xff]
    %v736 = vld [vmem:[%s3 + $0x4e0] sm:$0xff]
    %v737 = vld [vmem:[%s3 + $0x4e8] sm:$0xff]
    %v738 = vld [vmem:[%s3 + $0x4f0] sm:$0xff]
    %v739 = vld [vmem:[%s3 + $0x4f8] sm:$0xff]
    %v740 = vld [vmem:[%s3 + $0x500] sm:$0xff]
    %v741 = vld [vmem:[%s3 + $0x508] sm:$0xff]
    %v742 = vld [vmem:[%s3 + $0x510] sm:$0xff]
    %v743 = vld [vmem:[%s3 + $0x518] sm:$0xff]
    %v744 = vld [vmem:[%s3 + $0x520] sm:$0xff]
    %v745 = vld [vmem:[%s3 + $0x528] sm:$0xff]
    %v746 = vld [vmem:[%s3 + $0x530] sm:$0xff]
    %v747 = vld [vmem:[%s3 + $0x538] sm:$0xff]
    %v748 = vld [vmem:[%s3 + $0x540] sm:$0xff]
    %v749 = vld [vmem:[%s3 + $0x548] sm:$0xff]
    %v750 = vld [vmem:[%s3 + $0x550] sm:$0xff]
    %v751 = vld [vmem:[%s3 + $0x558] sm:$0xff]
    %v752 = vld [vmem:[%s3 + $0x560] sm:$0xff]
    %v753 = vld [vmem:[%s3 + $0x568] sm:$0xff]
    %v754 = vld [vmem:[%s3 + $0x570] sm:$0xff]
    %v755 = vld [vmem:[%s3 + $0x578] sm:$0xff]
    %v756 = vld [vmem:[%s3 + $0x580] sm:$0xff]
    %v757 = vld [vmem:[%s3 + $0x588] sm:$0xff]
    %v758 = vld [vmem:[%s3 + $0x590] sm:$0xff]
    %v759 = vld [vmem:[%s3 + $0x598] sm:$0xff]
    %v760 = vld [vmem:[%s3 + $0x5a0] sm:$0xff]
    %v761 = vld [vmem:[%s3 + $0x5a8] sm:$0xff]
    %v762 = vld [vmem:[%s3 + $0x5b0] sm:$0xff]
    %v763 = vld [vmem:[%s3 + $0x5b8] sm:$0xff]
    %v764 = vld [vmem:[%s3 + $0x5c0] sm:$0xff]
    %v765 = vld [vmem:[%s3 + $0x5c8] sm:$0xff]
    %v766 = vld [vmem:[%s3 + $0x5d0] sm:$0xff]
    %v767 = vld [vmem:[%s3 + $0x5d8] sm:$0xff]
    %v768 = vld [vmem:[%s3 + $0x5e0] sm:$0xff]
    %v769 = vld [vmem:[%s3 + $0x5e8] sm:$0xff]
    %v770 = vld [vmem:[%s3 + $0x5f0] sm:$0xff]
    %v771 = vld [vmem:[%s3 + $0x5f8] sm:$0xff]
    %v772 = vld [vmem:[%s3 + $0x600] sm:$0xff]
    %v773 = vld [vmem:[%s3 + $0x608] sm:$0xff]
    %v774 = vld [vmem:[%s3 + $0x610] sm:$0xff]
    %v775 = vld [vmem:[%s3 + $0x618] sm:$0xff]
    %v776 = vld [vmem:[%s3 + $0x620] sm:$0xff]
    %v777 = vld [vmem:[%s3 + $0x628] sm:$0xff]
    %v778 = vld [vmem:[%s3 + $0x630] sm:$0xff]
    %v779 = vld [vmem:[%s3 + $0x638] sm:$0xff]
    %v780 = vld [vmem:[%s3 + $0x640] sm:$0xff]
    %v781 = vld [vmem:[%s3 + $0x648] sm:$0xff]
    %v782 = vld [vmem:[%s3 + $0x650] sm:$0xff]
    %v783 = vld [vmem:[%s3 + $0x658] sm:$0xff]
    %v784 = vld [vmem:[%s3 + $0x660] sm:$0xff]
    %v785 = vld [vmem:[%s3 + $0x668] sm:$0xff]
    %v786 = vld [vmem:[%s3 + $0x670] sm:$0xff]
    %v787 = vld [vmem:[%s3 + $0x678] sm:$0xff]
    %v788 = vld [vmem:[%s3 + $0x680] sm:$0xff]
    %v789 = vld [vmem:[%s3 + $0x688] sm:$0xff]
    %v790 = vld [vmem:[%s3 + $0x690] sm:$0xff]
    %v791 = vld [vmem:[%s3 + $0x698] sm:$0xff]
    %v792 = vld [vmem:[%s3 + $0x6a0] sm:$0xff]
    %v793 = vld [vmem:[%s3 + $0x6a8] sm:$0xff]
    %v794 = vld [vmem:[%s3 + $0x6b0] sm:$0xff]
    %v795 = vld [vmem:[%s3 + $0x6b8] sm:$0xff]
    %v796 = vld [vmem:[%s3 + $0x6c0] sm:$0xff]
    %v797 = vld [vmem:[%s3 + $0x6c8] sm:$0xff]
    %v798 = vld [vmem:[%s3 + $0x6d0] sm:$0xff]
    %v799 = vld [vmem:[%s3 + $0x6d8] sm:$0xff]
    %v800 = vld [vmem:[%s3 + $0x6e0] sm:$0xff]
    %v801 = vld [vmem:[%s3 + $0x6e8] sm:$0xff]
    %v802 = vld [vmem:[%s3 + $0x6f0] sm:$0xff]
    %v803 = vld [vmem:[%s3 + $0x6f8] sm:$0xff]
    %v804 = vld [vmem:[%s3 + $0x700] sm:$0xff]
    %v805 = vld [vmem:[%s3 + $0x708] sm:$0xff]
    %v806 = vld [vmem:[%s3 + $0x710] sm:$0xff]
    %v807 = vld [vmem:[%s3 + $0x718] sm:$0xff]
    %v808 = vld [vmem:[%s3 + $0x720] sm:$0xff]
    %v809 = vld [vmem:[%s3 + $0x728] sm:$0xff]
    %v810 = vld [vmem:[%s3 + $0x730] sm:$0xff]
    %v811 = vld [vmem:[%s3 + $0x738] sm:$0xff]
    %v812 = vld [vmem:[%s3 + $0x740] sm:$0xff]
    %v813 = vld [vmem:[%s3 + $0x748] sm:$0xff]
    %v814 = vld [vmem:[%s3 + $0x750] sm:$0xff]
    %v815 = vld [vmem:[%s3 + $0x758] sm:$0xff]
    %v816 = vld [vmem:[%s3 + $0x760] sm:$0xff]
    %v817 = vld [vmem:[%s3 + $0x768] sm:$0xff]
    %v818 = vld [vmem:[%s3 + $0x770] sm:$0xff]
    %v819 = vld [vmem:[%s3 + $0x778] sm:$0xff]
    %v820 = vld [vmem:[%s3 + $0x780] sm:$0xff]
    %v821 = vld [vmem:[%s3 + $0x788] sm:$0xff]
    %v822 = vld [vmem:[%s3 + $0x790] sm:$0xff]
    %v823 = vld [vmem:[%s3 + $0x798] sm:$0xff]
    %v824 = vld [vmem:[%s3 + $0x7a0] sm:$0xff]
    %v825 = vld [vmem:[%s3 + $0x7a8] sm:$0xff]
    %v826 = vld [vmem:[%s3 + $0x7b0] sm:$0xff]
    %v827 = vld [vmem:[%s3 + $0x7b8] sm:$0xff]
    %v828 = vld [vmem:[%s3 + $0x7c0] sm:$0xff]
    %v829 = vld [vmem:[%s3 + $0x7c8] sm:$0xff]
    %v830 = vld [vmem:[%s3 + $0x7d0] sm:$0xff]
    %v831 = vld [vmem:[%s3 + $0x7d8] sm:$0xff]
    %v832 = vld [vmem:[%s3 + $0x7e0] sm:$0xff]
    %v833 = vld [vmem:[%s3 + $0x7e8] sm:$0xff]
    %v834 = vld [vmem:[%s3 + $0x7f0] sm:$0xff]
    %v835 = vld [vmem:[%s3 + $0x7f8] sm:$0xff]
    %v836 = vld [vmem:[%s3 + $0x800] sm:$0xff]
    %v837 = vld [vmem:[%s3 + $0x808] sm:$0xff]
    %v838 = vld [vmem:[%s3 + $0x810] sm:$0xff]
    %v839 = vld [vmem:[%s3 + $0x818] sm:$0xff]
    %v840 = vld [vmem:[%s3 + $0x820] sm:$0xff]
    %v841 = vld [vmem:[%s3 + $0x828] sm:$0xff]
    %v842 = vld [vmem:[%s3 + $0x830] sm:$0xff]
    %v843 = vld [vmem:[%s3 + $0x838] sm:$0xff]
    %v844 = vld [vmem:[%s3 + $0x840] sm:$0xff]
    %v845 = vld [vmem:[%s3 + $0x848] sm:$0xff]
    %v846 = vld [vmem:[%s3 + $0x850] sm:$0xff]
    %v847 = vld [vmem:[%s3 + $0x858] sm:$0xff]
    %v848 = vld [vmem:[%s3 + $0x860] sm:$0xff]
    %v849 = vld [vmem:[%s3 + $0x868] sm:$0xff]
    %v850 = vld [vmem:[%s3 + $0x870] sm:$0xff]
    %v851 = vld [vmem:[%s3 + $0x878] sm:$0xff]
    %v852 = vld [vmem:[%s3 + $0x880] sm:$0xff]
    %v853 = vld [vmem:[%s3 + $0x888] sm:$0xff]
    %v854 = vld [vmem:[%s3 + $0x890] sm:$0xff]
    %v855 = vld [vmem:[%s3 + $0x898] sm:$0xff]
    %v856 = vld [vmem:[%s3 + $0x8a0] sm:$0xff]
    %v857 = vld [vmem:[%s3 + $0x8a8] sm:$0xff]
    %v858 = vld [vmem:[%s3 + $0x8b0] sm:$0xff]
    %v859 = vld [vmem:[%s3 + $0x8b8] sm:$0xff]
    %v860 = vld [vmem:[%s3 + $0x8c0] sm:$0xff]
    %v861 = vld [vmem:[%s3 + $0x8c8] sm:$0xff]
    %v862 = vld [vmem:[%s3 + $0x8d0] sm:$0xff]
    %v863 = vld [vmem:[%s3 + $0x8d8] sm:$0xff]
    %v864 = vld [vmem:[%s3 + $0x8e0] sm:$0xff]
    %v865 = vld [vmem:[%s3 + $0x8e8] sm:$0xff]
    %v866 = vld [vmem:[%s3 + $0x8f0] sm:$0xff]
    %v867 = vld [vmem:[%s3 + $0x8f8] sm:$0xff]
    %v868 = vld [vmem:[%s4] sm:$0x3f]
    %v870 = vperm.slane %v868, 0
    %v871 = vperm.slane %v868, 1
    %v872 = vperm.slane %v868, 2
    %v873 = vperm.slane %v868, 3
    %v874 = vperm.slane %v868, 4
    %v875 = vperm.slane %v868, 5
    %v1170 = vunpack.c.l.b16 %v580
    %v1171 = vunpack.c.h.b16 %v580
    %v1172 = vunpack.c.l.b16 %v581
    %v1173 = vunpack.c.h.b16 %v581
    %v1174 = vunpack.c.l.b16 %v582
    %v1175 = vunpack.c.h.b16 %v582
    %v1176 = vunpack.c.l.b16 %v583
    %v1177 = vunpack.c.h.b16 %v583
    %v1178 = vunpack.c.l.b16 %v584
    %v1179 = vunpack.c.h.b16 %v584
    %v1180 = vunpack.c.l.b16 %v585
    %v1181 = vunpack.c.h.b16 %v585
    %v1182 = vunpack.c.l.b16 %v586
    %v1183 = vunpack.c.h.b16 %v586
    %v1184 = vunpack.c.l.b16 %v587
    %v1185 = vunpack.c.h.b16 %v587
    %v1186 = vunpack.c.l.b16 %v588
    %v1187 = vunpack.c.h.b16 %v588
    %v1188 = vunpack.c.l.b16 %v589
    %v1189 = vunpack.c.h.b16 %v589
    %v1190 = vunpack.c.l.b16 %v590
    %v1191 = vunpack.c.h.b16 %v590
    %v1192 = vunpack.c.l.b16 %v591
    %v1193 = vunpack.c.h.b16 %v591
    %v1194 = vunpack.c.l.b16 %v592
    %v1195 = vunpack.c.h.b16 %v592
    %v1196 = vunpack.c.l.b16 %v593
    %v1197 = vunpack.c.h.b16 %v593
    %v1198 = vunpack.c.l.b16 %v594
    %v1199 = vunpack.c.h.b16 %v594
    %v1200 = vunpack.c.l.b16 %v595
    %v1201 = vunpack.c.h.b16 %v595
    %v1202 = vunpack.c.l.b16 %v596
    %v1203 = vunpack.c.h.b16 %v596
    %v1204 = vunpack.c.l.b16 %v597
    %v1205 = vunpack.c.h.b16 %v597
    %v1206 = vunpack.c.l.b16 %v598
    %v1207 = vunpack.c.h.b16 %v598
    %v1208 = vunpack.c.l.b16 %v599
    %v1209 = vunpack.c.h.b16 %v599
    %v1210 = vunpack.c.l.b16 %v600
    %v1211 = vunpack.c.h.b16 %v600
    %v1212 = vunpack.c.l.b16 %v601
    %v1213 = vunpack.c.h.b16 %v601
    %v1214 = vunpack.c.l.b16 %v602
    %v1215 = vunpack.c.h.b16 %v602
    %v1216 = vunpack.c.l.b16 %v603
    %v1217 = vunpack.c.h.b16 %v603
    %v1218 = vunpack.c.l.b16 %v604
    %v1219 = vunpack.c.h.b16 %v604
    %v1220 = vunpack.c.l.b16 %v605
    %v1221 = vunpack.c.h.b16 %v605
    %v1222 = vunpack.c.l.b16 %v606
    %v1223 = vunpack.c.h.b16 %v606
    %v1224 = vunpack.c.l.b16 %v607
    %v1225 = vunpack.c.h.b16 %v607
    %v1226 = vunpack.c.l.b16 %v608
    %v1227 = vunpack.c.h.b16 %v608
    %v1228 = vunpack.c.l.b16 %v609
    %v1229 = vunpack.c.h.b16 %v609
    %v1230 = vunpack.c.l.b16 %v610
    %v1231 = vunpack.c.h.b16 %v610
    %v1232 = vunpack.c.l.b16 %v611
    %v1233 = vunpack.c.h.b16 %v611
    %v1234 = vunpack.c.l.b16 %v612
    %v1235 = vunpack.c.h.b16 %v612
    %v1236 = vunpack.c.l.b16 %v613
    %v1237 = vunpack.c.h.b16 %v613
    %v1238 = vunpack.c.l.b16 %v614
    %v1239 = vunpack.c.h.b16 %v614
    %v1240 = vunpack.c.l.b16 %v615
    %v1241 = vunpack.c.h.b16 %v615
    %v1242 = vunpack.c.l.b16 %v616
    %v1243 = vunpack.c.h.b16 %v616
    %v1244 = vunpack.c.l.b16 %v617
    %v1245 = vunpack.c.h.b16 %v617
    %v1246 = vunpack.c.l.b16 %v618
    %v1247 = vunpack.c.h.b16 %v618
    %v1248 = vunpack.c.l.b16 %v619
    %v1249 = vunpack.c.h.b16 %v619
    %v1250 = vunpack.c.l.b16 %v620
    %v1251 = vunpack.c.h.b16 %v620
    %v1252 = vunpack.c.l.b16 %v621
    %v1253 = vunpack.c.h.b16 %v621
    %v1254 = vunpack.c.l.b16 %v622
    %v1255 = vunpack.c.h.b16 %v622
    %v1256 = vunpack.c.l.b16 %v623
    %v1257 = vunpack.c.h.b16 %v623
    %v1258 = vunpack.c.l.b16 %v624
    %v1259 = vunpack.c.h.b16 %v624
    %v1260 = vunpack.c.l.b16 %v625
    %v1261 = vunpack.c.h.b16 %v625
    %v1262 = vunpack.c.l.b16 %v626
    %v1263 = vunpack.c.h.b16 %v626
    %v1264 = vunpack.c.l.b16 %v627
    %v1265 = vunpack.c.h.b16 %v627
    %v1266 = vunpack.c.l.b16 %v628
    %v1267 = vunpack.c.h.b16 %v628
    %v1268 = vunpack.c.l.b16 %v629
    %v1269 = vunpack.c.h.b16 %v629
    %v1270 = vunpack.c.l.b16 %v630
    %v1271 = vunpack.c.h.b16 %v630
    %v1272 = vunpack.c.l.b16 %v631
    %v1273 = vunpack.c.h.b16 %v631
    %v1274 = vunpack.c.l.b16 %v632
    %v1275 = vunpack.c.h.b16 %v632
    %v1276 = vunpack.c.l.b16 %v633
    %v1277 = vunpack.c.h.b16 %v633
    %v1278 = vunpack.c.l.b16 %v634
    %v1279 = vunpack.c.h.b16 %v634
    %v1280 = vunpack.c.l.b16 %v635
    %v1281 = vunpack.c.h.b16 %v635
    %v1282 = vunpack.c.l.b16 %v636
    %v1283 = vunpack.c.h.b16 %v636
    %v1284 = vunpack.c.l.b16 %v637
    %v1285 = vunpack.c.h.b16 %v637
    %v1286 = vunpack.c.l.b16 %v638
    %v1287 = vunpack.c.h.b16 %v638
    %v1288 = vunpack.c.l.b16 %v639
    %v1289 = vunpack.c.h.b16 %v639
    %v1290 = vunpack.c.l.b16 %v640
    %v1291 = vunpack.c.h.b16 %v640
    %v1292 = vunpack.c.l.b16 %v641
    %v1293 = vunpack.c.h.b16 %v641
    %v1294 = vunpack.c.l.b16 %v642
    %v1295 = vunpack.c.h.b16 %v642
    %v1296 = vunpack.c.l.b16 %v643
    %v1297 = vunpack.c.h.b16 %v643
    %v1298 = vunpack.c.l.b16 %v644
    %v1299 = vunpack.c.h.b16 %v644
    %v1300 = vunpack.c.l.b16 %v645
    %v1301 = vunpack.c.h.b16 %v645
    %v1302 = vunpack.c.l.b16 %v646
    %v1303 = vunpack.c.h.b16 %v646
    %v1304 = vunpack.c.l.b16 %v647
    %v1305 = vunpack.c.h.b16 %v647
    %v1306 = vunpack.c.l.b16 %v648
    %v1307 = vunpack.c.h.b16 %v648
    %v1308 = vunpack.c.l.b16 %v649
    %v1309 = vunpack.c.h.b16 %v649
    %v1310 = vunpack.c.l.b16 %v650
    %v1311 = vunpack.c.h.b16 %v650
    %v1312 = vunpack.c.l.b16 %v651
    %v1313 = vunpack.c.h.b16 %v651
    %v1314 = vunpack.c.l.b16 %v652
    %v1315 = vunpack.c.h.b16 %v652
    %v1316 = vunpack.c.l.b16 %v653
    %v1317 = vunpack.c.h.b16 %v653
    %v1318 = vunpack.c.l.b16 %v654
    %v1319 = vunpack.c.h.b16 %v654
    %v1320 = vunpack.c.l.b16 %v655
    %v1321 = vunpack.c.h.b16 %v655
    %v1322 = vunpack.c.l.b16 %v656
    %v1323 = vunpack.c.h.b16 %v656
    %v1324 = vunpack.c.l.b16 %v657
    %v1325 = vunpack.c.h.b16 %v657
    %v1326 = vunpack.c.l.b16 %v658
    %v1327 = vunpack.c.h.b16 %v658
    %v1328 = vunpack.c.l.b16 %v659
    %v1329 = vunpack.c.h.b16 %v659
    %v1330 = vunpack.c.l.b16 %v660
    %v1331 = vunpack.c.h.b16 %v660
    %v1332 = vunpack.c.l.b16 %v661
    %v1333 = vunpack.c.h.b16 %v661
    %v1334 = vunpack.c.l.b16 %v662
    %v1335 = vunpack.c.h.b16 %v662
    %v1336 = vunpack.c.l.b16 %v663
    %v1337 = vunpack.c.h.b16 %v663
    %v1338 = vunpack.c.l.b16 %v664
    %v1339 = vunpack.c.h.b16 %v664
    %v1340 = vunpack.c.l.b16 %v665
    %v1341 = vunpack.c.h.b16 %v665
    %v1342 = vunpack.c.l.b16 %v666
    %v1343 = vunpack.c.h.b16 %v666
    %v1344 = vunpack.c.l.b16 %v667
    %v1345 = vunpack.c.h.b16 %v667
    %v1346 = vunpack.c.l.b16 %v668
    %v1347 = vunpack.c.h.b16 %v668
    %v1348 = vunpack.c.l.b16 %v669
    %v1349 = vunpack.c.h.b16 %v669
    %v1350 = vunpack.c.l.b16 %v670
    %v1351 = vunpack.c.h.b16 %v670
    %v1352 = vunpack.c.l.b16 %v671
    %v1353 = vunpack.c.h.b16 %v671
    %v1354 = vunpack.c.l.b16 %v672
    %v1355 = vunpack.c.h.b16 %v672
    %v1356 = vunpack.c.l.b16 %v673
    %v1357 = vunpack.c.h.b16 %v673
    %v1358 = vunpack.c.l.b16 %v674
    %v1359 = vunpack.c.h.b16 %v674
    %v1360 = vunpack.c.l.b16 %v675
    %v1361 = vunpack.c.h.b16 %v675
    %v1362 = vunpack.c.l.b16 %v676
    %v1363 = vunpack.c.h.b16 %v676
    %v1364 = vunpack.c.l.b16 %v677
    %v1365 = vunpack.c.h.b16 %v677
    %v1366 = vunpack.c.l.b16 %v678
    %v1367 = vunpack.c.h.b16 %v678
    %v1368 = vunpack.c.l.b16 %v679
    %v1369 = vunpack.c.h.b16 %v679
    %v1370 = vunpack.c.l.b16 %v680
    %v1371 = vunpack.c.h.b16 %v680
    %v1372 = vunpack.c.l.b16 %v681
    %v1373 = vunpack.c.h.b16 %v681
    %v1374 = vunpack.c.l.b16 %v682
    %v1375 = vunpack.c.h.b16 %v682
    %v1376 = vunpack.c.l.b16 %v683
    %v1377 = vunpack.c.h.b16 %v683
    %v1378 = vunpack.c.l.b16 %v684
    %v1379 = vunpack.c.h.b16 %v684
    %v1380 = vunpack.c.l.b16 %v685
    %v1381 = vunpack.c.h.b16 %v685
    %v1382 = vunpack.c.l.b16 %v686
    %v1383 = vunpack.c.h.b16 %v686
    %v1384 = vunpack.c.l.b16 %v687
    %v1385 = vunpack.c.h.b16 %v687
    %v1386 = vunpack.c.l.b16 %v688
    %v1387 = vunpack.c.h.b16 %v688
    %v1388 = vunpack.c.l.b16 %v689
    %v1389 = vunpack.c.h.b16 %v689
    %v1390 = vunpack.c.l.b16 %v690
    %v1391 = vunpack.c.h.b16 %v690
    %v1392 = vunpack.c.l.b16 %v691
    %v1393 = vunpack.c.h.b16 %v691
    %v1394 = vunpack.c.l.b16 %v692
    %v1395 = vunpack.c.h.b16 %v692
    %v1396 = vunpack.c.l.b16 %v693
    %v1397 = vunpack.c.h.b16 %v693
    %v1398 = vunpack.c.l.b16 %v694
    %v1399 = vunpack.c.h.b16 %v694
    %v1400 = vunpack.c.l.b16 %v695
    %v1401 = vunpack.c.h.b16 %v695
    %v1402 = vunpack.c.l.b16 %v696
    %v1403 = vunpack.c.h.b16 %v696
    %v1404 = vunpack.c.l.b16 %v697
    %v1405 = vunpack.c.h.b16 %v697
    %v1406 = vunpack.c.l.b16 %v698
    %v1407 = vunpack.c.h.b16 %v698
    %v1408 = vunpack.c.l.b16 %v699
    %v1409 = vunpack.c.h.b16 %v699
    %v1410 = vunpack.c.l.b16 %v700
    %v1411 = vunpack.c.h.b16 %v700
    %v1412 = vunpack.c.l.b16 %v701
    %v1413 = vunpack.c.h.b16 %v701
    %v1414 = vunpack.c.l.b16 %v702
    %v1415 = vunpack.c.h.b16 %v702
    %v1416 = vunpack.c.l.b16 %v703
    %v1417 = vunpack.c.h.b16 %v703
    %v1418 = vunpack.c.l.b16 %v704
    %v1419 = vunpack.c.h.b16 %v704
    %v1420 = vunpack.c.l.b16 %v705
    %v1421 = vunpack.c.h.b16 %v705
    %v1422 = vunpack.c.l.b16 %v706
    %v1423 = vunpack.c.h.b16 %v706
    %v1424 = vunpack.c.l.b16 %v707
    %v1425 = vunpack.c.h.b16 %v707
    %v1426 = vunpack.c.l.b16 %v708
    %v1427 = vunpack.c.h.b16 %v708
    %v1428 = vunpack.c.l.b16 %v709
    %v1429 = vunpack.c.h.b16 %v709
    %v1430 = vunpack.c.l.b16 %v710
    %v1431 = vunpack.c.h.b16 %v710
    %v1432 = vunpack.c.l.b16 %v711
    %v1433 = vunpack.c.h.b16 %v711
    %v1434 = vunpack.c.l.b16 %v712
    %v1435 = vunpack.c.h.b16 %v712
    %v1436 = vunpack.c.l.b16 %v713
    %v1437 = vunpack.c.h.b16 %v713
    %v1438 = vunpack.c.l.b16 %v714
    %v1439 = vunpack.c.h.b16 %v714
    %v1440 = vunpack.c.l.b16 %v715
    %v1441 = vunpack.c.h.b16 %v715
    %v1442 = vunpack.c.l.b16 %v716
    %v1443 = vunpack.c.h.b16 %v716
    %v1444 = vunpack.c.l.b16 %v717
    %v1445 = vunpack.c.h.b16 %v717
    %v1446 = vunpack.c.l.b16 %v718
    %v1447 = vunpack.c.h.b16 %v718
    %v1448 = vunpack.c.l.b16 %v719
    %v1449 = vunpack.c.h.b16 %v719
    %v1450 = vunpack.c.l.b16 %v720
    %v1451 = vunpack.c.h.b16 %v720
    %v1452 = vunpack.c.l.b16 %v721
    %v1453 = vunpack.c.h.b16 %v721
    %v1454 = vunpack.c.l.b16 %v722
    %v1455 = vunpack.c.h.b16 %v722
    %v1456 = vunpack.c.l.b16 %v723
    %v1457 = vunpack.c.h.b16 %v723
    %v1458 = vunpack.c.l.b16 %v724
    %v1459 = vunpack.c.h.b16 %v724
    %v1460 = vunpack.c.l.b16 %v725
    %v1461 = vunpack.c.h.b16 %v725
    %v1462 = vunpack.c.l.b16 %v726
    %v1463 = vunpack.c.h.b16 %v726
    %v1464 = vunpack.c.l.b16 %v727
    %v1465 = vunpack.c.h.b16 %v727
    %v1466 = vunpack.c.l.b16 %v728
    %v1467 = vunpack.c.h.b16 %v728
    %v1468 = vunpack.c.l.b16 %v729
    %v1469 = vunpack.c.h.b16 %v729
    %v1470 = vunpack.c.l.b16 %v730
    %v1471 = vunpack.c.h.b16 %v730
    %v1472 = vunpack.c.l.b16 %v731
    %v1473 = vunpack.c.h.b16 %v731
    %v1474 = vunpack.c.l.b16 %v732
    %v1475 = vunpack.c.h.b16 %v732
    %v1476 = vunpack.c.l.b16 %v733
    %v1477 = vunpack.c.h.b16 %v733
    %v1478 = vunpack.c.l.b16 %v734
    %v1479 = vunpack.c.h.b16 %v734
    %v1480 = vunpack.c.l.b16 %v735
    %v1481 = vunpack.c.h.b16 %v735
    %v1482 = vunpack.c.l.b16 %v736
    %v1483 = vunpack.c.h.b16 %v736
    %v1484 = vunpack.c.l.b16 %v737
    %v1485 = vunpack.c.h.b16 %v737
    %v1486 = vunpack.c.l.b16 %v738
    %v1487 = vunpack.c.h.b16 %v738
    %v1488 = vunpack.c.l.b16 %v739
    %v1489 = vunpack.c.h.b16 %v739
    %v1490 = vunpack.c.l.b16 %v740
    %v1491 = vunpack.c.h.b16 %v740
    %v1492 = vunpack.c.l.b16 %v741
    %v1493 = vunpack.c.h.b16 %v741
    %v1494 = vunpack.c.l.b16 %v742
    %v1495 = vunpack.c.h.b16 %v742
    %v1496 = vunpack.c.l.b16 %v743
    %v1497 = vunpack.c.h.b16 %v743
    %v1498 = vunpack.c.l.b16 %v744
    %v1499 = vunpack.c.h.b16 %v744
    %v1500 = vunpack.c.l.b16 %v745
    %v1501 = vunpack.c.h.b16 %v745
    %v1502 = vunpack.c.l.b16 %v746
    %v1503 = vunpack.c.h.b16 %v746
    %v1504 = vunpack.c.l.b16 %v747
    %v1505 = vunpack.c.h.b16 %v747
    %v1506 = vunpack.c.l.b16 %v748
    %v1507 = vunpack.c.h.b16 %v748
    %v1508 = vunpack.c.l.b16 %v749
    %v1509 = vunpack.c.h.b16 %v749
    %v1510 = vunpack.c.l.b16 %v750
    %v1511 = vunpack.c.h.b16 %v750
    %v1512 = vunpack.c.l.b16 %v751
    %v1513 = vunpack.c.h.b16 %v751
    %v1514 = vunpack.c.l.b16 %v752
    %v1515 = vunpack.c.h.b16 %v752
    %v1516 = vunpack.c.l.b16 %v753
    %v1517 = vunpack.c.h.b16 %v753
    %v1518 = vunpack.c.l.b16 %v754
    %v1519 = vunpack.c.h.b16 %v754
    %v1520 = vunpack.c.l.b16 %v755
    %v1521 = vunpack.c.h.b16 %v755
    %v1522 = vunpack.c.l.b16 %v756
    %v1523 = vunpack.c.h.b16 %v756
    %v1524 = vunpack.c.l.b16 %v757
    %v1525 = vunpack.c.h.b16 %v757
    %v1526 = vunpack.c.l.b16 %v758
    %v1527 = vunpack.c.h.b16 %v758
    %v1528 = vunpack.c.l.b16 %v759
    %v1529 = vunpack.c.h.b16 %v759
    %v1530 = vunpack.c.l.b16 %v760
    %v1531 = vunpack.c.h.b16 %v760
    %v1532 = vunpack.c.l.b16 %v761
    %v1533 = vunpack.c.h.b16 %v761
    %v1534 = vunpack.c.l.b16 %v762
    %v1535 = vunpack.c.h.b16 %v762
    %v1536 = vunpack.c.l.b16 %v763
    %v1537 = vunpack.c.h.b16 %v763
    %v1538 = vunpack.c.l.b16 %v764
    %v1539 = vunpack.c.h.b16 %v764
    %v1540 = vunpack.c.l.b16 %v765
    %v1541 = vunpack.c.h.b16 %v765
    %v1542 = vunpack.c.l.b16 %v766
    %v1543 = vunpack.c.h.b16 %v766
    %v1544 = vunpack.c.l.b16 %v767
    %v1545 = vunpack.c.h.b16 %v767
    %v1546 = vunpack.c.l.b16 %v768
    %v1547 = vunpack.c.h.b16 %v768
    %v1548 = vunpack.c.l.b16 %v769
    %v1549 = vunpack.c.h.b16 %v769
    %v1550 = vunpack.c.l.b16 %v770
    %v1551 = vunpack.c.h.b16 %v770
    %v1552 = vunpack.c.l.b16 %v771
    %v1553 = vunpack.c.h.b16 %v771
    %v1554 = vunpack.c.l.b16 %v772
    %v1555 = vunpack.c.h.b16 %v772
    %v1556 = vunpack.c.l.b16 %v773
    %v1557 = vunpack.c.h.b16 %v773
    %v1558 = vunpack.c.l.b16 %v774
    %v1559 = vunpack.c.h.b16 %v774
    %v1560 = vunpack.c.l.b16 %v775
    %v1561 = vunpack.c.h.b16 %v775
    %v1562 = vunpack.c.l.b16 %v776
    %v1563 = vunpack.c.h.b16 %v776
    %v1564 = vunpack.c.l.b16 %v777
    %v1565 = vunpack.c.h.b16 %v777
    %v1566 = vunpack.c.l.b16 %v778
    %v1567 = vunpack.c.h.b16 %v778
    %v1568 = vunpack.c.l.b16 %v779
    %v1569 = vunpack.c.h.b16 %v779
    %v1570 = vunpack.c.l.b16 %v780
    %v1571 = vunpack.c.h.b16 %v780
    %v1572 = vunpack.c.l.b16 %v781
    %v1573 = vunpack.c.h.b16 %v781
    %v1574 = vunpack.c.l.b16 %v782
    %v1575 = vunpack.c.h.b16 %v782
    %v1576 = vunpack.c.l.b16 %v783
    %v1577 = vunpack.c.h.b16 %v783
    %v1578 = vunpack.c.l.b16 %v784
    %v1579 = vunpack.c.h.b16 %v784
    %v1580 = vunpack.c.l.b16 %v785
    %v1581 = vunpack.c.h.b16 %v785
    %v1582 = vunpack.c.l.b16 %v786
    %v1583 = vunpack.c.h.b16 %v786
    %v1584 = vunpack.c.l.b16 %v787
    %v1585 = vunpack.c.h.b16 %v787
    %v1586 = vunpack.c.l.b16 %v788
    %v1587 = vunpack.c.h.b16 %v788
    %v1588 = vunpack.c.l.b16 %v789
    %v1589 = vunpack.c.h.b16 %v789
    %v1590 = vunpack.c.l.b16 %v790
    %v1591 = vunpack.c.h.b16 %v790
    %v1592 = vunpack.c.l.b16 %v791
    %v1593 = vunpack.c.h.b16 %v791
    %v1594 = vunpack.c.l.b16 %v792
    %v1595 = vunpack.c.h.b16 %v792
    %v1596 = vunpack.c.l.b16 %v793
    %v1597 = vunpack.c.h.b16 %v793
    %v1598 = vunpack.c.l.b16 %v794
    %v1599 = vunpack.c.h.b16 %v794
    %v1600 = vunpack.c.l.b16 %v795
    %v1601 = vunpack.c.h.b16 %v795
    %v1602 = vunpack.c.l.b16 %v796
    %v1603 = vunpack.c.h.b16 %v796
    %v1604 = vunpack.c.l.b16 %v797
    %v1605 = vunpack.c.h.b16 %v797
    %v1606 = vunpack.c.l.b16 %v798
    %v1607 = vunpack.c.h.b16 %v798
    %v1608 = vunpack.c.l.b16 %v799
    %v1609 = vunpack.c.h.b16 %v799
    %v1610 = vunpack.c.l.b16 %v800
    %v1611 = vunpack.c.h.b16 %v800
    %v1612 = vunpack.c.l.b16 %v801
    %v1613 = vunpack.c.h.b16 %v801
    %v1614 = vunpack.c.l.b16 %v802
    %v1615 = vunpack.c.h.b16 %v802
    %v1616 = vunpack.c.l.b16 %v803
    %v1617 = vunpack.c.h.b16 %v803
    %v1618 = vunpack.c.l.b16 %v804
    %v1619 = vunpack.c.h.b16 %v804
    %v1620 = vunpack.c.l.b16 %v805
    %v1621 = vunpack.c.h.b16 %v805
    %v1622 = vunpack.c.l.b16 %v806
    %v1623 = vunpack.c.h.b16 %v806
    %v1624 = vunpack.c.l.b16 %v807
    %v1625 = vunpack.c.h.b16 %v807
    %v1626 = vunpack.c.l.b16 %v808
    %v1627 = vunpack.c.h.b16 %v808
    %v1628 = vunpack.c.l.b16 %v809
    %v1629 = vunpack.c.h.b16 %v809
    %v1630 = vunpack.c.l.b16 %v810
    %v1631 = vunpack.c.h.b16 %v810
    %v1632 = vunpack.c.l.b16 %v811
    %v1633 = vunpack.c.h.b16 %v811
    %v1634 = vunpack.c.l.b16 %v812
    %v1635 = vunpack.c.h.b16 %v812
    %v1636 = vunpack.c.l.b16 %v813
    %v1637 = vunpack.c.h.b16 %v813
    %v1638 = vunpack.c.l.b16 %v814
    %v1639 = vunpack.c.h.b16 %v814
    %v1640 = vunpack.c.l.b16 %v815
    %v1641 = vunpack.c.h.b16 %v815
    %v1642 = vunpack.c.l.b16 %v816
    %v1643 = vunpack.c.h.b16 %v816
    %v1644 = vunpack.c.l.b16 %v817
    %v1645 = vunpack.c.h.b16 %v817
    %v1646 = vunpack.c.l.b16 %v818
    %v1647 = vunpack.c.h.b16 %v818
    %v1648 = vunpack.c.l.b16 %v819
    %v1649 = vunpack.c.h.b16 %v819
    %v1650 = vunpack.c.l.b16 %v820
    %v1651 = vunpack.c.h.b16 %v820
    %v1652 = vunpack.c.l.b16 %v821
    %v1653 = vunpack.c.h.b16 %v821
    %v1654 = vunpack.c.l.b16 %v822
    %v1655 = vunpack.c.h.b16 %v822
    %v1656 = vunpack.c.l.b16 %v823
    %v1657 = vunpack.c.h.b16 %v823
    %v1658 = vunpack.c.l.b16 %v824
    %v1659 = vunpack.c.h.b16 %v824
    %v1660 = vunpack.c.l.b16 %v825
    %v1661 = vunpack.c.h.b16 %v825
    %v1662 = vunpack.c.l.b16 %v826
    %v1663 = vunpack.c.h.b16 %v826
    %v1664 = vunpack.c.l.b16 %v827
    %v1665 = vunpack.c.h.b16 %v827
    %v1666 = vunpack.c.l.b16 %v828
    %v1667 = vunpack.c.h.b16 %v828
    %v1668 = vunpack.c.l.b16 %v829
    %v1669 = vunpack.c.h.b16 %v829
    %v1670 = vunpack.c.l.b16 %v830
    %v1671 = vunpack.c.h.b16 %v830
    %v1672 = vunpack.c.l.b16 %v831
    %v1673 = vunpack.c.h.b16 %v831
    %v1674 = vunpack.c.l.b16 %v832
    %v1675 = vunpack.c.h.b16 %v832
    %v1676 = vunpack.c.l.b16 %v833
    %v1677 = vunpack.c.h.b16 %v833
    %v1678 = vunpack.c.l.b16 %v834
    %v1679 = vunpack.c.h.b16 %v834
    %v1680 = vunpack.c.l.b16 %v835
    %v1681 = vunpack.c.h.b16 %v835
    %v1682 = vunpack.c.l.b16 %v836
    %v1683 = vunpack.c.h.b16 %v836
    %v1684 = vunpack.c.l.b16 %v837
    %v1685 = vunpack.c.h.b16 %v837
    %v1686 = vunpack.c.l.b16 %v838
    %v1687 = vunpack.c.h.b16 %v838
    %v1688 = vunpack.c.l.b16 %v839
    %v1689 = vunpack.c.h.b16 %v839
    %v1690 = vunpack.c.l.b16 %v840
    %v1691 = vunpack.c.h.b16 %v840
    %v1692 = vunpack.c.l.b16 %v841
    %v1693 = vunpack.c.h.b16 %v841
    %v1694 = vunpack.c.l.b16 %v842
    %v1695 = vunpack.c.h.b16 %v842
    %v1696 = vunpack.c.l.b16 %v843
    %v1697 = vunpack.c.h.b16 %v843
    %v1698 = vunpack.c.l.b16 %v844
    %v1699 = vunpack.c.h.b16 %v844
    %v1700 = vunpack.c.l.b16 %v845
    %v1701 = vunpack.c.h.b16 %v845
    %v1702 = vunpack.c.l.b16 %v846
    %v1703 = vunpack.c.h.b16 %v846
    %v1704 = vunpack.c.l.b16 %v847
    %v1705 = vunpack.c.h.b16 %v847
    %v1706 = vunpack.c.l.b16 %v848
    %v1707 = vunpack.c.h.b16 %v848
    %v1708 = vunpack.c.l.b16 %v849
    %v1709 = vunpack.c.h.b16 %v849
    %v1710 = vunpack.c.l.b16 %v850
    %v1711 = vunpack.c.h.b16 %v850
    %v1712 = vunpack.c.l.b16 %v851
    %v1713 = vunpack.c.h.b16 %v851
    %v1714 = vunpack.c.l.b16 %v852
    %v1715 = vunpack.c.h.b16 %v852
    %v1716 = vunpack.c.l.b16 %v853
    %v1717 = vunpack.c.h.b16 %v853
    %v1718 = vunpack.c.l.b16 %v854
    %v1719 = vunpack.c.h.b16 %v854
    %v1720 = vunpack.c.l.b16 %v855
    %v1721 = vunpack.c.h.b16 %v855
    %v1722 = vunpack.c.l.b16 %v856
    %v1723 = vunpack.c.h.b16 %v856
    %v1724 = vunpack.c.l.b16 %v857
    %v1725 = vunpack.c.h.b16 %v857
    %v1726 = vunpack.c.l.b16 %v858
    %v1727 = vunpack.c.h.b16 %v858
    %v1728 = vunpack.c.l.b16 %v859
    %v1729 = vunpack.c.h.b16 %v859
    %v1730 = vunpack.c.l.b16 %v860
    %v1731 = vunpack.c.h.b16 %v860
    %v1732 = vunpack.c.l.b16 %v861
    %v1733 = vunpack.c.h.b16 %v861
    %v1734 = vunpack.c.l.b16 %v862
    %v1735 = vunpack.c.h.b16 %v862
    %v1736 = vunpack.c.l.b16 %v863
    %v1737 = vunpack.c.h.b16 %v863
    %v1738 = vunpack.c.l.b16 %v864
    %v1739 = vunpack.c.h.b16 %v864
    %v1740 = vunpack.c.l.b16 %v865
    %v1741 = vunpack.c.h.b16 %v865
    %v1742 = vunpack.c.l.b16 %v866
    %v1743 = vunpack.c.h.b16 %v866
    %v1744 = vunpack.c.l.b16 %v867
    %v1745 = vunpack.c.h.b16 %v867
    %v1746 = vpack.c.b16 %v1176, %v1170
    %v1747 = vpack.c.b16 %v1177, %v1171
    %v1748 = vpack.c.b16 %v1178, %v1172
    %v1749 = vpack.c.b16 %v1179, %v1173
    %v1750 = vpack.c.b16 %v1180, %v1174
    %v1751 = vpack.c.b16 %v1181, %v1175
    %v1752 = vpack.c.b16 %v1188, %v1182
    %v1753 = vpack.c.b16 %v1189, %v1183
    %v1754 = vpack.c.b16 %v1190, %v1184
    %v1755 = vpack.c.b16 %v1191, %v1185
    %v1756 = vpack.c.b16 %v1192, %v1186
    %v1757 = vpack.c.b16 %v1193, %v1187
    %v1758 = vpack.c.b16 %v1200, %v1194
    %v1759 = vpack.c.b16 %v1201, %v1195
    %v1760 = vpack.c.b16 %v1202, %v1196
    %v1761 = vpack.c.b16 %v1203, %v1197
    %v1762 = vpack.c.b16 %v1204, %v1198
    %v1763 = vpack.c.b16 %v1205, %v1199
    %v1764 = vpack.c.b16 %v1212, %v1206
    %v1765 = vpack.c.b16 %v1213, %v1207
    %v1766 = vpack.c.b16 %v1214, %v1208
    %v1767 = vpack.c.b16 %v1215, %v1209
    %v1768 = vpack.c.b16 %v1216, %v1210
    %v1769 = vpack.c.b16 %v1217, %v1211
    %v1770 = vpack.c.b16 %v1224, %v1218
    %v1771 = vpack.c.b16 %v1225, %v1219
    %v1772 = vpack.c.b16 %v1226, %v1220
    %v1773 = vpack.c.b16 %v1227, %v1221
    %v1774 = vpack.c.b16 %v1228, %v1222
    %v1775 = vpack.c.b16 %v1229, %v1223
    %v1776 = vpack.c.b16 %v1236, %v1230
    %v1777 = vpack.c.b16 %v1237, %v1231
    %v1778 = vpack.c.b16 %v1238, %v1232
    %v1779 = vpack.c.b16 %v1239, %v1233
    %v1780 = vpack.c.b16 %v1240, %v1234
    %v1781 = vpack.c.b16 %v1241, %v1235
    %v1782 = vpack.c.b16 %v1248, %v1242
    %v1783 = vpack.c.b16 %v1249, %v1243
    %v1784 = vpack.c.b16 %v1250, %v1244
    %v1785 = vpack.c.b16 %v1251, %v1245
    %v1786 = vpack.c.b16 %v1252, %v1246
    %v1787 = vpack.c.b16 %v1253, %v1247
    %v1788 = vpack.c.b16 %v1260, %v1254
    %v1789 = vpack.c.b16 %v1261, %v1255
    %v1790 = vpack.c.b16 %v1262, %v1256
    %v1791 = vpack.c.b16 %v1263, %v1257
    %v1792 = vpack.c.b16 %v1264, %v1258
    %v1793 = vpack.c.b16 %v1265, %v1259
    %v1794 = vpack.c.b16 %v1272, %v1266
    %v1795 = vpack.c.b16 %v1273, %v1267
    %v1796 = vpack.c.b16 %v1274, %v1268
    %v1797 = vpack.c.b16 %v1275, %v1269
    %v1798 = vpack.c.b16 %v1276, %v1270
    %v1799 = vpack.c.b16 %v1277, %v1271
    %v1800 = vpack.c.b16 %v1284, %v1278
    %v1801 = vpack.c.b16 %v1285, %v1279
    %v1802 = vpack.c.b16 %v1286, %v1280
    %v1803 = vpack.c.b16 %v1287, %v1281
    %v1804 = vpack.c.b16 %v1288, %v1282
    %v1805 = vpack.c.b16 %v1289, %v1283
    %v1806 = vpack.c.b16 %v1296, %v1290
    %v1807 = vpack.c.b16 %v1297, %v1291
    %v1808 = vpack.c.b16 %v1298, %v1292
    %v1809 = vpack.c.b16 %v1299, %v1293
    %v1810 = vpack.c.b16 %v1300, %v1294
    %v1811 = vpack.c.b16 %v1301, %v1295
    %v1812 = vpack.c.b16 %v1308, %v1302
    %v1813 = vpack.c.b16 %v1309, %v1303
    %v1814 = vpack.c.b16 %v1310, %v1304
    %v1815 = vpack.c.b16 %v1311, %v1305
    %v1816 = vpack.c.b16 %v1312, %v1306
    %v1817 = vpack.c.b16 %v1313, %v1307
    %v1818 = vpack.c.b16 %v1320, %v1314
    %v1819 = vpack.c.b16 %v1321, %v1315
    %v1820 = vpack.c.b16 %v1322, %v1316
    %v1821 = vpack.c.b16 %v1323, %v1317
    %v1822 = vpack.c.b16 %v1324, %v1318
    %v1823 = vpack.c.b16 %v1325, %v1319
    %v1824 = vpack.c.b16 %v1332, %v1326
    %v1825 = vpack.c.b16 %v1333, %v1327
    %v1826 = vpack.c.b16 %v1334, %v1328
    %v1827 = vpack.c.b16 %v1335, %v1329
    %v1828 = vpack.c.b16 %v1336, %v1330
    %v1829 = vpack.c.b16 %v1337, %v1331
    %v1830 = vpack.c.b16 %v1344, %v1338
    %v1831 = vpack.c.b16 %v1345, %v1339
    %v1832 = vpack.c.b16 %v1346, %v1340
    %v1833 = vpack.c.b16 %v1347, %v1341
    %v1834 = vpack.c.b16 %v1348, %v1342
    %v1835 = vpack.c.b16 %v1349, %v1343
    %v1836 = vpack.c.b16 %v1356, %v1350
    %v1837 = vpack.c.b16 %v1357, %v1351
    %v1838 = vpack.c.b16 %v1358, %v1352
    %v1839 = vpack.c.b16 %v1359, %v1353
    %v1840 = vpack.c.b16 %v1360, %v1354
    %v1841 = vpack.c.b16 %v1361, %v1355
    %v1842 = vpack.c.b16 %v1368, %v1362
    %v1843 = vpack.c.b16 %v1369, %v1363
    %v1844 = vpack.c.b16 %v1370, %v1364
    %v1845 = vpack.c.b16 %v1371, %v1365
    %v1846 = vpack.c.b16 %v1372, %v1366
    %v1847 = vpack.c.b16 %v1373, %v1367
    %v1848 = vpack.c.b16 %v1380, %v1374
    %v1849 = vpack.c.b16 %v1381, %v1375
    %v1850 = vpack.c.b16 %v1382, %v1376
    %v1851 = vpack.c.b16 %v1383, %v1377
    %v1852 = vpack.c.b16 %v1384, %v1378
    %v1853 = vpack.c.b16 %v1385, %v1379
    %v1854 = vpack.c.b16 %v1392, %v1386
    %v1855 = vpack.c.b16 %v1393, %v1387
    %v1856 = vpack.c.b16 %v1394, %v1388
    %v1857 = vpack.c.b16 %v1395, %v1389
    %v1858 = vpack.c.b16 %v1396, %v1390
    %v1859 = vpack.c.b16 %v1397, %v1391
    %v1860 = vpack.c.b16 %v1404, %v1398
    %v1861 = vpack.c.b16 %v1405, %v1399
    %v1862 = vpack.c.b16 %v1406, %v1400
    %v1863 = vpack.c.b16 %v1407, %v1401
    %v1864 = vpack.c.b16 %v1408, %v1402
    %v1865 = vpack.c.b16 %v1409, %v1403
    %v1866 = vpack.c.b16 %v1416, %v1410
    %v1867 = vpack.c.b16 %v1417, %v1411
    %v1868 = vpack.c.b16 %v1418, %v1412
    %v1869 = vpack.c.b16 %v1419, %v1413
    %v1870 = vpack.c.b16 %v1420, %v1414
    %v1871 = vpack.c.b16 %v1421, %v1415
    %v1872 = vpack.c.b16 %v1428, %v1422
    %v1873 = vpack.c.b16 %v1429, %v1423
    %v1874 = vpack.c.b16 %v1430, %v1424
    %v1875 = vpack.c.b16 %v1431, %v1425
    %v1876 = vpack.c.b16 %v1432, %v1426
    %v1877 = vpack.c.b16 %v1433, %v1427
    %v1878 = vpack.c.b16 %v1440, %v1434
    %v1879 = vpack.c.b16 %v1441, %v1435
    %v1880 = vpack.c.b16 %v1442, %v1436
    %v1881 = vpack.c.b16 %v1443, %v1437
    %v1882 = vpack.c.b16 %v1444, %v1438
    %v1883 = vpack.c.b16 %v1445, %v1439
    %v1884 = vpack.c.b16 %v1452, %v1446
    %v1885 = vpack.c.b16 %v1453, %v1447
    %v1886 = vpack.c.b16 %v1454, %v1448
    %v1887 = vpack.c.b16 %v1455, %v1449
    %v1888 = vpack.c.b16 %v1456, %v1450
    %v1889 = vpack.c.b16 %v1457, %v1451
    %v1890 = vpack.c.b16 %v1464, %v1458
    %v1891 = vpack.c.b16 %v1465, %v1459
    %v1892 = vpack.c.b16 %v1466, %v1460
    %v1893 = vpack.c.b16 %v1467, %v1461
    %v1894 = vpack.c.b16 %v1468, %v1462
    %v1895 = vpack.c.b16 %v1469, %v1463
    %v1896 = vpack.c.b16 %v1476, %v1470
    %v1897 = vpack.c.b16 %v1477, %v1471
    %v1898 = vpack.c.b16 %v1478, %v1472
    %v1899 = vpack.c.b16 %v1479, %v1473
    %v1900 = vpack.c.b16 %v1480, %v1474
    %v1901 = vpack.c.b16 %v1481, %v1475
    %v1902 = vpack.c.b16 %v1488, %v1482
    %v1903 = vpack.c.b16 %v1489, %v1483
    %v1904 = vpack.c.b16 %v1490, %v1484
    %v1905 = vpack.c.b16 %v1491, %v1485
    %v1906 = vpack.c.b16 %v1492, %v1486
    %v1907 = vpack.c.b16 %v1493, %v1487
    %v1908 = vpack.c.b16 %v1500, %v1494
    %v1909 = vpack.c.b16 %v1501, %v1495
    %v1910 = vpack.c.b16 %v1502, %v1496
    %v1911 = vpack.c.b16 %v1503, %v1497
    %v1912 = vpack.c.b16 %v1504, %v1498
    %v1913 = vpack.c.b16 %v1505, %v1499
    %v1914 = vpack.c.b16 %v1512, %v1506
    %v1915 = vpack.c.b16 %v1513, %v1507
    %v1916 = vpack.c.b16 %v1514, %v1508
    %v1917 = vpack.c.b16 %v1515, %v1509
    %v1918 = vpack.c.b16 %v1516, %v1510
    %v1919 = vpack.c.b16 %v1517, %v1511
    %v1920 = vpack.c.b16 %v1524, %v1518
    %v1921 = vpack.c.b16 %v1525, %v1519
    %v1922 = vpack.c.b16 %v1526, %v1520
    %v1923 = vpack.c.b16 %v1527, %v1521
    %v1924 = vpack.c.b16 %v1528, %v1522
    %v1925 = vpack.c.b16 %v1529, %v1523
    %v1926 = vpack.c.b16 %v1536, %v1530
    %v1927 = vpack.c.b16 %v1537, %v1531
    %v1928 = vpack.c.b16 %v1538, %v1532
    %v1929 = vpack.c.b16 %v1539, %v1533
    %v1930 = vpack.c.b16 %v1540, %v1534
    %v1931 = vpack.c.b16 %v1541, %v1535
    %v1932 = vpack.c.b16 %v1548, %v1542
    %v1933 = vpack.c.b16 %v1549, %v1543
    %v1934 = vpack.c.b16 %v1550, %v1544
    %v1935 = vpack.c.b16 %v1551, %v1545
    %v1936 = vpack.c.b16 %v1552, %v1546
    %v1937 = vpack.c.b16 %v1553, %v1547
    %v1938 = vpack.c.b16 %v1560, %v1554
    %v1939 = vpack.c.b16 %v1561, %v1555
    %v1940 = vpack.c.b16 %v1562, %v1556
    %v1941 = vpack.c.b16 %v1563, %v1557
    %v1942 = vpack.c.b16 %v1564, %v1558
    %v1943 = vpack.c.b16 %v1565, %v1559
    %v1944 = vpack.c.b16 %v1572, %v1566
    %v1945 = vpack.c.b16 %v1573, %v1567
    %v1946 = vpack.c.b16 %v1574, %v1568
    %v1947 = vpack.c.b16 %v1575, %v1569
    %v1948 = vpack.c.b16 %v1576, %v1570
    %v1949 = vpack.c.b16 %v1577, %v1571
    %v1950 = vpack.c.b16 %v1584, %v1578
    %v1951 = vpack.c.b16 %v1585, %v1579
    %v1952 = vpack.c.b16 %v1586, %v1580
    %v1953 = vpack.c.b16 %v1587, %v1581
    %v1954 = vpack.c.b16 %v1588, %v1582
    %v1955 = vpack.c.b16 %v1589, %v1583
    %v1956 = vpack.c.b16 %v1596, %v1590
    %v1957 = vpack.c.b16 %v1597, %v1591
    %v1958 = vpack.c.b16 %v1598, %v1592
    %v1959 = vpack.c.b16 %v1599, %v1593
    %v1960 = vpack.c.b16 %v1600, %v1594
    %v1961 = vpack.c.b16 %v1601, %v1595
    %v1962 = vpack.c.b16 %v1608, %v1602
    %v1963 = vpack.c.b16 %v1609, %v1603
    %v1964 = vpack.c.b16 %v1610, %v1604
    %v1965 = vpack.c.b16 %v1611, %v1605
    %v1966 = vpack.c.b16 %v1612, %v1606
    %v1967 = vpack.c.b16 %v1613, %v1607
    %v1968 = vpack.c.b16 %v1620, %v1614
    %v1969 = vpack.c.b16 %v1621, %v1615
    %v1970 = vpack.c.b16 %v1622, %v1616
    %v1971 = vpack.c.b16 %v1623, %v1617
    %v1972 = vpack.c.b16 %v1624, %v1618
    %v1973 = vpack.c.b16 %v1625, %v1619
    %v1974 = vpack.c.b16 %v1632, %v1626
    %v1975 = vpack.c.b16 %v1633, %v1627
    %v1976 = vpack.c.b16 %v1634, %v1628
    %v1977 = vpack.c.b16 %v1635, %v1629
    %v1978 = vpack.c.b16 %v1636, %v1630
    %v1979 = vpack.c.b16 %v1637, %v1631
    %v1980 = vpack.c.b16 %v1644, %v1638
    %v1981 = vpack.c.b16 %v1645, %v1639
    %v1982 = vpack.c.b16 %v1646, %v1640
    %v1983 = vpack.c.b16 %v1647, %v1641
    %v1984 = vpack.c.b16 %v1648, %v1642
    %v1985 = vpack.c.b16 %v1649, %v1643
    %v1986 = vpack.c.b16 %v1656, %v1650
    %v1987 = vpack.c.b16 %v1657, %v1651
    %v1988 = vpack.c.b16 %v1658, %v1652
    %v1989 = vpack.c.b16 %v1659, %v1653
    %v1990 = vpack.c.b16 %v1660, %v1654
    %v1991 = vpack.c.b16 %v1661, %v1655
    %v1992 = vpack.c.b16 %v1668, %v1662
    %v1993 = vpack.c.b16 %v1669, %v1663
    %v1994 = vpack.c.b16 %v1670, %v1664
    %v1995 = vpack.c.b16 %v1671, %v1665
    %v1996 = vpack.c.b16 %v1672, %v1666
    %v1997 = vpack.c.b16 %v1673, %v1667
    %v1998 = vpack.c.b16 %v1680, %v1674
    %v1999 = vpack.c.b16 %v1681, %v1675
    %v2000 = vpack.c.b16 %v1682, %v1676
    %v2001 = vpack.c.b16 %v1683, %v1677
    %v2002 = vpack.c.b16 %v1684, %v1678
    %v2003 = vpack.c.b16 %v1685, %v1679
    %v2004 = vpack.c.b16 %v1692, %v1686
    %v2005 = vpack.c.b16 %v1693, %v1687
    %v2006 = vpack.c.b16 %v1694, %v1688
    %v2007 = vpack.c.b16 %v1695, %v1689
    %v2008 = vpack.c.b16 %v1696, %v1690
    %v2009 = vpack.c.b16 %v1697, %v1691
    %v2010 = vpack.c.b16 %v1704, %v1698
    %v2011 = vpack.c.b16 %v1705, %v1699
    %v2012 = vpack.c.b16 %v1706, %v1700
    %v2013 = vpack.c.b16 %v1707, %v1701
    %v2014 = vpack.c.b16 %v1708, %v1702
    %v2015 = vpack.c.b16 %v1709, %v1703
    %v2016 = vpack.c.b16 %v1716, %v1710
    %v2017 = vpack.c.b16 %v1717, %v1711
    %v2018 = vpack.c.b16 %v1718, %v1712
    %v2019 = vpack.c.b16 %v1719, %v1713
    %v2020 = vpack.c.b16 %v1720, %v1714
    %v2021 = vpack.c.b16 %v1721, %v1715
    %v2022 = vpack.c.b16 %v1728, %v1722
    %v2023 = vpack.c.b16 %v1729, %v1723
    %v2024 = vpack.c.b16 %v1730, %v1724
    %v2025 = vpack.c.b16 %v1731, %v1725
    %v2026 = vpack.c.b16 %v1732, %v1726
    %v2027 = vpack.c.b16 %v1733, %v1727
    %v2028 = vpack.c.b16 %v1740, %v1734
    %v2029 = vpack.c.b16 %v1741, %v1735
    %v2030 = vpack.c.b16 %v1742, %v1736
    %v2031 = vpack.c.b16 %v1743, %v1737
    %v2032 = vpack.c.b16 %v1744, %v1738
    %v2033 = vpack.c.b16 %v1745, %v1739
    %2322 = vmatpush.bf16.msra.mxu0 %v1788
    %2323 = vmatpush.bf16.msra.mxu0 %v1782
    %2324 = vmatpush.bf16.msra.mxu0 %v1776
    %2325 = vmatpush.bf16.msra.mxu0 %v1770
    %2326 = vmatpush.bf16.msra.mxu0 %v1764
    %2327 = vmatpush.bf16.msra.mxu0 %v1758
    %2328 = vmatpush.bf16.msra.mxu0 %v1752
    %2329 = vmatpush.bf16.msra.mxu0 %v1746
    %2330 = vmatmul.bf16.gmra.mxu0 %v574
    %v2331 = vpop.f32.mrf.mxu0
    %v2332 = vadd.f32 %v870, %v2331
    %v2333 = vpop.f32.mrf.mxu0
    %2334 = vdwg.mxu0
    %2335 = vmatpush.bf16.msra.mxu0 %v1836
    %2336 = vmatpush.bf16.msra.mxu0 %v1830
    %2337 = vmatpush.bf16.msra.mxu0 %v1824
    %2338 = vmatpush.bf16.msra.mxu0 %v1818
    %2339 = vmatpush.bf16.msra.mxu0 %v1812
    %2340 = vmatpush.bf16.msra.mxu0 %v1806
    %2341 = vmatpush.bf16.msra.mxu0 %v1800
    %2342 = vmatpush.bf16.msra.mxu0 %v1794
    %2343 = vmatmul.bf16.gmra.mxu0 %v575
    %v2344 = vpop.f32.mrf.mxu0
    %v2345 = vadd.f32 %v2332, %v2344
    %v2346 = vpop.f32.mrf.mxu0
    %2347 = vdwg.mxu0
    %2348 = vmatpush.bf16.msra.mxu0 %v1884
    %2349 = vmatpush.bf16.msra.mxu0 %v1878
    %2350 = vmatpush.bf16.msra.mxu0 %v1872
    %2351 = vmatpush.bf16.msra.mxu0 %v1866
    %2352 = vmatpush.bf16.msra.mxu0 %v1860
    %2353 = vmatpush.bf16.msra.mxu0 %v1854
    %2354 = vmatpush.bf16.msra.mxu0 %v1848
    %2355 = vmatpush.bf16.msra.mxu0 %v1842
    %2356 = vmatmul.bf16.gmra.mxu0 %v576
    %v2357 = vpop.f32.mrf.mxu0
    %v2358 = vadd.f32 %v2345, %v2357
    %v2359 = vpop.f32.mrf.mxu0
    %2360 = vdwg.mxu0
    %2361 = vmatpush.bf16.msra.mxu0 %v1932
    %2362 = vmatpush.bf16.msra.mxu0 %v1926
    %2363 = vmatpush.bf16.msra.mxu0 %v1920
    %2364 = vmatpush.bf16.msra.mxu0 %v1914
    %2365 = vmatpush.bf16.msra.mxu0 %v1908
    %2366 = vmatpush.bf16.msra.mxu0 %v1902
    %2367 = vmatpush.bf16.msra.mxu0 %v1896
    %2368 = vmatpush.bf16.msra.mxu0 %v1890
    %2369 = vmatmul.bf16.gmra.mxu0 %v577
    %v2370 = vpop.f32.mrf.mxu0
    %v2371 = vadd.f32 %v2358, %v2370
    %v2372 = vpop.f32.mrf.mxu0
    %2373 = vdwg.mxu0
    %2374 = vmatpush.bf16.msra.mxu0 %v1980
    %2375 = vmatpush.bf16.msra.mxu0 %v1974
    %2376 = vmatpush.bf16.msra.mxu0 %v1968
    %2377 = vmatpush.bf16.msra.mxu0 %v1962
    %2378 = vmatpush.bf16.msra.mxu0 %v1956
    %2379 = vmatpush.bf16.msra.mxu0 %v1950
    %2380 = vmatpush.bf16.msra.mxu0 %v1944
    %2381 = vmatpush.bf16.msra.mxu0 %v1938
    %2382 = vmatmul.bf16.gmra.mxu0 %v578
    %v2383 = vpop.f32.mrf.mxu0
    %v2384 = vadd.f32 %v2371, %v2383
    %v2385 = vpop.f32.mrf.mxu0
    %2386 = vdwg.mxu0
    %2387 = vmatpush.bf16.msra.mxu0 %v2028
    %2388 = vmatpush.bf16.msra.mxu0 %v2022
    %2389 = vmatpush.bf16.msra.mxu0 %v2016
    %2390 = vmatpush.bf16.msra.mxu0 %v2010
    %2391 = vmatpush.bf16.msra.mxu0 %v2004
    %2392 = vmatpush.bf16.msra.mxu0 %v1998
    %2393 = vmatpush.bf16.msra.mxu0 %v1992
    %2394 = vmatpush.bf16.msra.mxu0 %v1986
    %2395 = vmatmul.bf16.gmra.mxu0 %v579
    %v2396 = vpop.f32.mrf.mxu0
    %v2397 = vadd.f32 %v2384, %v2396
    %v2398 = vpop.f32.mrf.mxu0
    %2399 = vdwg.mxu0
    %2400 = vmatpush.bf16.msra.mxu0 %v1789
    %2401 = vmatpush.bf16.msra.mxu0 %v1783
    %2402 = vmatpush.bf16.msra.mxu0 %v1777
    %2403 = vmatpush.bf16.msra.mxu0 %v1771
    %2404 = vmatpush.bf16.msra.mxu0 %v1765
    %2405 = vmatpush.bf16.msra.mxu0 %v1759
    %2406 = vmatpush.bf16.msra.mxu0 %v1753
    %2407 = vmatpush.bf16.msra.mxu0 %v1747
    %2408 = vmatmul.bf16.gmra.mxu0 %v574
    %v2409 = vpop.f32.mrf.mxu0
    %v2410 = vadd.f32 %v871, %v2409
    %v2411 = vpop.f32.mrf.mxu0
    %2412 = vdwg.mxu0
    %2413 = vmatpush.bf16.msra.mxu0 %v1837
    %2414 = vmatpush.bf16.msra.mxu0 %v1831
    %2415 = vmatpush.bf16.msra.mxu0 %v1825
    %2416 = vmatpush.bf16.msra.mxu0 %v1819
    %2417 = vmatpush.bf16.msra.mxu0 %v1813
    %2418 = vmatpush.bf16.msra.mxu0 %v1807
    %2419 = vmatpush.bf16.msra.mxu0 %v1801
    %2420 = vmatpush.bf16.msra.mxu0 %v1795
    %2421 = vmatmul.bf16.gmra.mxu0 %v575
    %v2422 = vpop.f32.mrf.mxu0
    %v2423 = vadd.f32 %v2410, %v2422
    %v2424 = vpop.f32.mrf.mxu0
    %2425 = vdwg.mxu0
    %2426 = vmatpush.bf16.msra.mxu0 %v1885
    %2427 = vmatpush.bf16.msra.mxu0 %v1879
    %2428 = vmatpush.bf16.msra.mxu0 %v1873
    %2429 = vmatpush.bf16.msra.mxu0 %v1867
    %2430 = vmatpush.bf16.msra.mxu0 %v1861
    %2431 = vmatpush.bf16.msra.mxu0 %v1855
    %2432 = vmatpush.bf16.msra.mxu0 %v1849
    %2433 = vmatpush.bf16.msra.mxu0 %v1843
    %2434 = vmatmul.bf16.gmra.mxu0 %v576
    %v2435 = vpop.f32.mrf.mxu0
    %v2436 = vadd.f32 %v2423, %v2435
    %v2437 = vpop.f32.mrf.mxu0
    %2438 = vdwg.mxu0
    %2439 = vmatpush.bf16.msra.mxu0 %v1933
    %2440 = vmatpush.bf16.msra.mxu0 %v1927
    %2441 = vmatpush.bf16.msra.mxu0 %v1921
    %2442 = vmatpush.bf16.msra.mxu0 %v1915
    %2443 = vmatpush.bf16.msra.mxu0 %v1909
    %2444 = vmatpush.bf16.msra.mxu0 %v1903
    %2445 = vmatpush.bf16.msra.mxu0 %v1897
    %2446 = vmatpush.bf16.msra.mxu0 %v1891
    %2447 = vmatmul.bf16.gmra.mxu0 %v577
    %v2448 = vpop.f32.mrf.mxu0
    %v2449 = vadd.f32 %v2436, %v2448
    %v2450 = vpop.f32.mrf.mxu0
    %2451 = vdwg.mxu0
    %2452 = vmatpush.bf16.msra.mxu0 %v1981
    %2453 = vmatpush.bf16.msra.mxu0 %v1975
    %2454 = vmatpush.bf16.msra.mxu0 %v1969
    %2455 = vmatpush.bf16.msra.mxu0 %v1963
    %2456 = vmatpush.bf16.msra.mxu0 %v1957
    %2457 = vmatpush.bf16.msra.mxu0 %v1951
    %2458 = vmatpush.bf16.msra.mxu0 %v1945
    %2459 = vmatpush.bf16.msra.mxu0 %v1939
    %2460 = vmatmul.bf16.gmra.mxu0 %v578
    %v2461 = vpop.f32.mrf.mxu0
    %v2462 = vadd.f32 %v2449, %v2461
    %v2463 = vpop.f32.mrf.mxu0
    %2464 = vdwg.mxu0
    %2465 = vmatpush.bf16.msra.mxu0 %v2029
    %2466 = vmatpush.bf16.msra.mxu0 %v2023
    %2467 = vmatpush.bf16.msra.mxu0 %v2017
    %2468 = vmatpush.bf16.msra.mxu0 %v2011
    %2469 = vmatpush.bf16.msra.mxu0 %v2005
    %2470 = vmatpush.bf16.msra.mxu0 %v1999
    %2471 = vmatpush.bf16.msra.mxu0 %v1993
    %2472 = vmatpush.bf16.msra.mxu0 %v1987
    %2473 = vmatmul.bf16.gmra.mxu0 %v579
    %v2474 = vpop.f32.mrf.mxu0
    %v2475 = vadd.f32 %v2462, %v2474
    %v2476 = vpop.f32.mrf.mxu0
    %2477 = vdwg.mxu0
    %2478 = vmatpush.bf16.msra.mxu0 %v1790
    %2479 = vmatpush.bf16.msra.mxu0 %v1784
    %2480 = vmatpush.bf16.msra.mxu0 %v1778
    %2481 = vmatpush.bf16.msra.mxu0 %v1772
    %2482 = vmatpush.bf16.msra.mxu0 %v1766
    %2483 = vmatpush.bf16.msra.mxu0 %v1760
    %2484 = vmatpush.bf16.msra.mxu0 %v1754
    %2485 = vmatpush.bf16.msra.mxu0 %v1748
    %2486 = vmatmul.bf16.gmra.mxu0 %v574
    %v2487 = vpop.f32.mrf.mxu0
    %v2488 = vadd.f32 %v872, %v2487
    %v2489 = vpop.f32.mrf.mxu0
    %2490 = vdwg.mxu0
    %2491 = vmatpush.bf16.msra.mxu0 %v1838
    %2492 = vmatpush.bf16.msra.mxu0 %v1832
    %2493 = vmatpush.bf16.msra.mxu0 %v1826
    %2494 = vmatpush.bf16.msra.mxu0 %v1820
    %2495 = vmatpush.bf16.msra.mxu0 %v1814
    %2496 = vmatpush.bf16.msra.mxu0 %v1808
    %2497 = vmatpush.bf16.msra.mxu0 %v1802
    %2498 = vmatpush.bf16.msra.mxu0 %v1796
    %2499 = vmatmul.bf16.gmra.mxu0 %v575
    %v2500 = vpop.f32.mrf.mxu0
    %v2501 = vadd.f32 %v2488, %v2500
    %v2502 = vpop.f32.mrf.mxu0
    %2503 = vdwg.mxu0
    %2504 = vmatpush.bf16.msra.mxu0 %v1886
    %2505 = vmatpush.bf16.msra.mxu0 %v1880
    %2506 = vmatpush.bf16.msra.mxu0 %v1874
    %2507 = vmatpush.bf16.msra.mxu0 %v1868
    %2508 = vmatpush.bf16.msra.mxu0 %v1862
    %2509 = vmatpush.bf16.msra.mxu0 %v1856
    %2510 = vmatpush.bf16.msra.mxu0 %v1850
    %2511 = vmatpush.bf16.msra.mxu0 %v1844
    %2512 = vmatmul.bf16.gmra.mxu0 %v576
    %v2513 = vpop.f32.mrf.mxu0
    %v2514 = vadd.f32 %v2501, %v2513
    %v2515 = vpop.f32.mrf.mxu0
    %2516 = vdwg.mxu0
    %2517 = vmatpush.bf16.msra.mxu0 %v1934
    %2518 = vmatpush.bf16.msra.mxu0 %v1928
    %2519 = vmatpush.bf16.msra.mxu0 %v1922
    %2520 = vmatpush.bf16.msra.mxu0 %v1916
    %2521 = vmatpush.bf16.msra.mxu0 %v1910
    %2522 = vmatpush.bf16.msra.mxu0 %v1904
    %2523 = vmatpush.bf16.msra.mxu0 %v1898
    %2524 = vmatpush.bf16.msra.mxu0 %v1892
    %2525 = vmatmul.bf16.gmra.mxu0 %v577
    %v2526 = vpop.f32.mrf.mxu0
    %v2527 = vadd.f32 %v2514, %v2526
    %v2528 = vpop.f32.mrf.mxu0
    %2529 = vdwg.mxu0
    %2530 = vmatpush.bf16.msra.mxu0 %v1982
    %2531 = vmatpush.bf16.msra.mxu0 %v1976
    %2532 = vmatpush.bf16.msra.mxu0 %v1970
    %2533 = vmatpush.bf16.msra.mxu0 %v1964
    %2534 = vmatpush.bf16.msra.mxu0 %v1958
    %2535 = vmatpush.bf16.msra.mxu0 %v1952
    %2536 = vmatpush.bf16.msra.mxu0 %v1946
    %2537 = vmatpush.bf16.msra.mxu0 %v1940
    %2538 = vmatmul.bf16.gmra.mxu0 %v578
    %v2539 = vpop.f32.mrf.mxu0
    %v2540 = vadd.f32 %v2527, %v2539
    %v2541 = vpop.f32.mrf.mxu0
    %2542 = vdwg.mxu0
    %2543 = vmatpush.bf16.msra.mxu0 %v2030
    %2544 = vmatpush.bf16.msra.mxu0 %v2024
    %2545 = vmatpush.bf16.msra.mxu0 %v2018
    %2546 = vmatpush.bf16.msra.mxu0 %v2012
    %2547 = vmatpush.bf16.msra.mxu0 %v2006
    %2548 = vmatpush.bf16.msra.mxu0 %v2000
    %2549 = vmatpush.bf16.msra.mxu0 %v1994
    %2550 = vmatpush.bf16.msra.mxu0 %v1988
    %2551 = vmatmul.bf16.gmra.mxu0 %v579
    %v2552 = vpop.f32.mrf.mxu0
    %v2553 = vadd.f32 %v2540, %v2552
    %v2554 = vpop.f32.mrf.mxu0
    %2555 = vdwg.mxu0
    %2556 = vmatpush.bf16.msra.mxu0 %v1791
    %2557 = vmatpush.bf16.msra.mxu0 %v1785
    %2558 = vmatpush.bf16.msra.mxu0 %v1779
    %2559 = vmatpush.bf16.msra.mxu0 %v1773
    %2560 = vmatpush.bf16.msra.mxu0 %v1767
    %2561 = vmatpush.bf16.msra.mxu0 %v1761
    %2562 = vmatpush.bf16.msra.mxu0 %v1755
    %2563 = vmatpush.bf16.msra.mxu0 %v1749
    %2564 = vmatmul.bf16.gmra.mxu0 %v574
    %v2565 = vpop.f32.mrf.mxu0
    %v2566 = vadd.f32 %v873, %v2565
    %v2567 = vpop.f32.mrf.mxu0
    %2568 = vdwg.mxu0
    %2569 = vmatpush.bf16.msra.mxu0 %v1839
    %2570 = vmatpush.bf16.msra.mxu0 %v1833
    %2571 = vmatpush.bf16.msra.mxu0 %v1827
    %2572 = vmatpush.bf16.msra.mxu0 %v1821
    %2573 = vmatpush.bf16.msra.mxu0 %v1815
    %2574 = vmatpush.bf16.msra.mxu0 %v1809
    %2575 = vmatpush.bf16.msra.mxu0 %v1803
    %2576 = vmatpush.bf16.msra.mxu0 %v1797
    %2577 = vmatmul.bf16.gmra.mxu0 %v575
    %v2578 = vpop.f32.mrf.mxu0
    %v2579 = vadd.f32 %v2566, %v2578
    %v2580 = vpop.f32.mrf.mxu0
    %2581 = vdwg.mxu0
    %2582 = vmatpush.bf16.msra.mxu0 %v1887
    %2583 = vmatpush.bf16.msra.mxu0 %v1881
    %2584 = vmatpush.bf16.msra.mxu0 %v1875
    %2585 = vmatpush.bf16.msra.mxu0 %v1869
    %2586 = vmatpush.bf16.msra.mxu0 %v1863
    %2587 = vmatpush.bf16.msra.mxu0 %v1857
    %2588 = vmatpush.bf16.msra.mxu0 %v1851
    %2589 = vmatpush.bf16.msra.mxu0 %v1845
    %2590 = vmatmul.bf16.gmra.mxu0 %v576
    %v2591 = vpop.f32.mrf.mxu0
    %v2592 = vadd.f32 %v2579, %v2591
    %v2593 = vpop.f32.mrf.mxu0
    %2594 = vdwg.mxu0
    %2595 = vmatpush.bf16.msra.mxu0 %v1935
    %2596 = vmatpush.bf16.msra.mxu0 %v1929
    %2597 = vmatpush.bf16.msra.mxu0 %v1923
    %2598 = vmatpush.bf16.msra.mxu0 %v1917
    %2599 = vmatpush.bf16.msra.mxu0 %v1911
    %2600 = vmatpush.bf16.msra.mxu0 %v1905
    %2601 = vmatpush.bf16.msra.mxu0 %v1899
    %2602 = vmatpush.bf16.msra.mxu0 %v1893
    %2603 = vmatmul.bf16.gmra.mxu0 %v577
    %v2604 = vpop.f32.mrf.mxu0
    %v2605 = vadd.f32 %v2592, %v2604
    %v2606 = vpop.f32.mrf.mxu0
    %2607 = vdwg.mxu0
    %2608 = vmatpush.bf16.msra.mxu0 %v1983
    %2609 = vmatpush.bf16.msra.mxu0 %v1977
    %2610 = vmatpush.bf16.msra.mxu0 %v1971
    %2611 = vmatpush.bf16.msra.mxu0 %v1965
    %2612 = vmatpush.bf16.msra.mxu0 %v1959
    %2613 = vmatpush.bf16.msra.mxu0 %v1953
    %2614 = vmatpush.bf16.msra.mxu0 %v1947
    %2615 = vmatpush.bf16.msra.mxu0 %v1941
    %2616 = vmatmul.bf16.gmra.mxu0 %v578
    %v2617 = vpop.f32.mrf.mxu0
    %v2618 = vadd.f32 %v2605, %v2617
    %v2619 = vpop.f32.mrf.mxu0
    %2620 = vdwg.mxu0
    %2621 = vmatpush.bf16.msra.mxu0 %v2031
    %2622 = vmatpush.bf16.msra.mxu0 %v2025
    %2623 = vmatpush.bf16.msra.mxu0 %v2019
    %2624 = vmatpush.bf16.msra.mxu0 %v2013
    %2625 = vmatpush.bf16.msra.mxu0 %v2007
    %2626 = vmatpush.bf16.msra.mxu0 %v2001
    %2627 = vmatpush.bf16.msra.mxu0 %v1995
    %2628 = vmatpush.bf16.msra.mxu0 %v1989
    %2629 = vmatmul.bf16.gmra.mxu0 %v579
    %v2630 = vpop.f32.mrf.mxu0
    %v2631 = vadd.f32 %v2618, %v2630
    %v2632 = vpop.f32.mrf.mxu0
    %2633 = vdwg.mxu0
    %2634 = vmatpush.bf16.msra.mxu0 %v1792
    %2635 = vmatpush.bf16.msra.mxu0 %v1786
    %2636 = vmatpush.bf16.msra.mxu0 %v1780
    %2637 = vmatpush.bf16.msra.mxu0 %v1774
    %2638 = vmatpush.bf16.msra.mxu0 %v1768
    %2639 = vmatpush.bf16.msra.mxu0 %v1762
    %2640 = vmatpush.bf16.msra.mxu0 %v1756
    %2641 = vmatpush.bf16.msra.mxu0 %v1750
    %2642 = vmatmul.bf16.gmra.mxu0 %v574
    %v2643 = vpop.f32.mrf.mxu0
    %v2644 = vadd.f32 %v874, %v2643
    %v2645 = vpop.f32.mrf.mxu0
    %2646 = vdwg.mxu0
    %2647 = vmatpush.bf16.msra.mxu0 %v1840
    %2648 = vmatpush.bf16.msra.mxu0 %v1834
    %2649 = vmatpush.bf16.msra.mxu0 %v1828
    %2650 = vmatpush.bf16.msra.mxu0 %v1822
    %2651 = vmatpush.bf16.msra.mxu0 %v1816
    %2652 = vmatpush.bf16.msra.mxu0 %v1810
    %2653 = vmatpush.bf16.msra.mxu0 %v1804
    %2654 = vmatpush.bf16.msra.mxu0 %v1798
    %2655 = vmatmul.bf16.gmra.mxu0 %v575
    %v2656 = vpop.f32.mrf.mxu0
    %v2657 = vadd.f32 %v2644, %v2656
    %v2658 = vpop.f32.mrf.mxu0
    %2659 = vdwg.mxu0
    %2660 = vmatpush.bf16.msra.mxu0 %v1888
    %2661 = vmatpush.bf16.msra.mxu0 %v1882
    %2662 = vmatpush.bf16.msra.mxu0 %v1876
    %2663 = vmatpush.bf16.msra.mxu0 %v1870
    %2664 = vmatpush.bf16.msra.mxu0 %v1864
    %2665 = vmatpush.bf16.msra.mxu0 %v1858
    %2666 = vmatpush.bf16.msra.mxu0 %v1852
    %2667 = vmatpush.bf16.msra.mxu0 %v1846
    %2668 = vmatmul.bf16.gmra.mxu0 %v576
    %v2669 = vpop.f32.mrf.mxu0
    %v2670 = vadd.f32 %v2657, %v2669
    %v2671 = vpop.f32.mrf.mxu0
    %2672 = vdwg.mxu0
    %2673 = vmatpush.bf16.msra.mxu0 %v1936
    %2674 = vmatpush.bf16.msra.mxu0 %v1930
    %2675 = vmatpush.bf16.msra.mxu0 %v1924
    %2676 = vmatpush.bf16.msra.mxu0 %v1918
    %2677 = vmatpush.bf16.msra.mxu0 %v1912
    %2678 = vmatpush.bf16.msra.mxu0 %v1906
    %2679 = vmatpush.bf16.msra.mxu0 %v1900
    %2680 = vmatpush.bf16.msra.mxu0 %v1894
    %2681 = vmatmul.bf16.gmra.mxu0 %v577
    %v2682 = vpop.f32.mrf.mxu0
    %v2683 = vadd.f32 %v2670, %v2682
    %v2684 = vpop.f32.mrf.mxu0
    %2685 = vdwg.mxu0
    %2686 = vmatpush.bf16.msra.mxu0 %v1984
    %2687 = vmatpush.bf16.msra.mxu0 %v1978
    %2688 = vmatpush.bf16.msra.mxu0 %v1972
    %2689 = vmatpush.bf16.msra.mxu0 %v1966
    %2690 = vmatpush.bf16.msra.mxu0 %v1960
    %2691 = vmatpush.bf16.msra.mxu0 %v1954
    %2692 = vmatpush.bf16.msra.mxu0 %v1948
    %2693 = vmatpush.bf16.msra.mxu0 %v1942
    %2694 = vmatmul.bf16.gmra.mxu0 %v578
    %v2695 = vpop.f32.mrf.mxu0
    %v2696 = vadd.f32 %v2683, %v2695
    %v2697 = vpop.f32.mrf.mxu0
    %2698 = vdwg.mxu0
    %2699 = vmatpush.bf16.msra.mxu0 %v2032
    %2700 = vmatpush.bf16.msra.mxu0 %v2026
    %2701 = vmatpush.bf16.msra.mxu0 %v2020
    %2702 = vmatpush.bf16.msra.mxu0 %v2014
    %2703 = vmatpush.bf16.msra.mxu0 %v2008
    %2704 = vmatpush.bf16.msra.mxu0 %v2002
    %2705 = vmatpush.bf16.msra.mxu0 %v1996
    %2706 = vmatpush.bf16.msra.mxu0 %v1990
    %2707 = vmatmul.bf16.gmra.mxu0 %v579
    %v2708 = vpop.f32.mrf.mxu0
    %v2709 = vadd.f32 %v2696, %v2708
    %v2710 = vpop.f32.mrf.mxu0
    %2711 = vdwg.mxu0
    %2712 = vmatpush.bf16.msra.mxu0 %v1793
    %2713 = vmatpush.bf16.msra.mxu0 %v1787
    %2714 = vmatpush.bf16.msra.mxu0 %v1781
    %2715 = vmatpush.bf16.msra.mxu0 %v1775
    %2716 = vmatpush.bf16.msra.mxu0 %v1769
    %2717 = vmatpush.bf16.msra.mxu0 %v1763
    %2718 = vmatpush.bf16.msra.mxu0 %v1757
    %2719 = vmatpush.bf16.msra.mxu0 %v1751
    %2720 = vmatmul.bf16.gmra.mxu0 %v574
    %v2721 = vpop.f32.mrf.mxu0
    %v2722 = vadd.f32 %v875, %v2721
    %v2723 = vpop.f32.mrf.mxu0
    %2724 = vdwg.mxu0
    %2725 = vmatpush.bf16.msra.mxu0 %v1841
    %2726 = vmatpush.bf16.msra.mxu0 %v1835
    %2727 = vmatpush.bf16.msra.mxu0 %v1829
    %2728 = vmatpush.bf16.msra.mxu0 %v1823
    %2729 = vmatpush.bf16.msra.mxu0 %v1817
    %2730 = vmatpush.bf16.msra.mxu0 %v1811
    %2731 = vmatpush.bf16.msra.mxu0 %v1805
    %2732 = vmatpush.bf16.msra.mxu0 %v1799
    %2733 = vmatmul.bf16.gmra.mxu0 %v575
    %v2734 = vpop.f32.mrf.mxu0
    %v2735 = vadd.f32 %v2722, %v2734
    %v2736 = vpop.f32.mrf.mxu0
    %2737 = vdwg.mxu0
    %2738 = vmatpush.bf16.msra.mxu0 %v1889
    %2739 = vmatpush.bf16.msra.mxu0 %v1883
    %2740 = vmatpush.bf16.msra.mxu0 %v1877
    %2741 = vmatpush.bf16.msra.mxu0 %v1871
    %2742 = vmatpush.bf16.msra.mxu0 %v1865
    %2743 = vmatpush.bf16.msra.mxu0 %v1859
    %2744 = vmatpush.bf16.msra.mxu0 %v1853
    %2745 = vmatpush.bf16.msra.mxu0 %v1847
    %2746 = vmatmul.bf16.gmra.mxu0 %v576
    %v2747 = vpop.f32.mrf.mxu0
    %v2748 = vadd.f32 %v2735, %v2747
    %v2749 = vpop.f32.mrf.mxu0
    %2750 = vdwg.mxu0
    %2751 = vmatpush.bf16.msra.mxu0 %v1937
    %2752 = vmatpush.bf16.msra.mxu0 %v1931
    %2753 = vmatpush.bf16.msra.mxu0 %v1925
    %2754 = vmatpush.bf16.msra.mxu0 %v1919
    %2755 = vmatpush.bf16.msra.mxu0 %v1913
    %2756 = vmatpush.bf16.msra.mxu0 %v1907
    %2757 = vmatpush.bf16.msra.mxu0 %v1901
    %2758 = vmatpush.bf16.msra.mxu0 %v1895
    %2759 = vmatmul.bf16.gmra.mxu0 %v577
    %v2760 = vpop.f32.mrf.mxu0
    %v2761 = vadd.f32 %v2748, %v2760
    %v2762 = vpop.f32.mrf.mxu0
    %2763 = vdwg.mxu0
    %2764 = vmatpush.bf16.msra.mxu0 %v1985
    %2765 = vmatpush.bf16.msra.mxu0 %v1979
    %2766 = vmatpush.bf16.msra.mxu0 %v1973
    %2767 = vmatpush.bf16.msra.mxu0 %v1967
    %2768 = vmatpush.bf16.msra.mxu0 %v1961
    %2769 = vmatpush.bf16.msra.mxu0 %v1955
    %2770 = vmatpush.bf16.msra.mxu0 %v1949
    %2771 = vmatpush.bf16.msra.mxu0 %v1943
    %2772 = vmatmul.bf16.gmra.mxu0 %v578
    %v2773 = vpop.f32.mrf.mxu0
    %v2774 = vadd.f32 %v2761, %v2773
    %v2775 = vpop.f32.mrf.mxu0
    %2776 = vdwg.mxu0
    %2777 = vmatpush.bf16.msra.mxu0 %v2033
    %2778 = vmatpush.bf16.msra.mxu0 %v2027
    %2779 = vmatpush.bf16.msra.mxu0 %v2021
    %2780 = vmatpush.bf16.msra.mxu0 %v2015
    %2781 = vmatpush.bf16.msra.mxu0 %v2009
    %2782 = vmatpush.bf16.msra.mxu0 %v2003
    %2783 = vmatpush.bf16.msra.mxu0 %v1997
    %2784 = vmatpush.bf16.msra.mxu0 %v1991
    %2785 = vmatmul.bf16.gmra.mxu0 %v579
    %v2786 = vpop.f32.mrf.mxu0
    %v2787 = vadd.f32 %v2774, %v2786
    %v2788 = vpop.f32.mrf.mxu0
    %2789 = vdwg.mxu0
    %v2790 = vtanh.pop %v2397
    %v2791 = vtanh.pop %v2475
    %v2792 = vtanh.pop %v2553
    %v2793 = vtanh.pop %v2631
    %v2794 = vtanh.pop %v2709
    %v2795 = vtanh.pop %v2787
    %v2796 = vld [vmem:[%s2] sm:$0xff]
    %v2797 = vld [vmem:[%s5] sm:$0x1f]
    %v2798 = vld [vmem:[%s6] sm:$0x1]
    %v2800 = vperm.slane %v2798, 0
    %vm2802 = vcmask 39936
    %v2804 = vsel %vm2802, %v2796, 0
    %vm2806 = vcmask 1044480
    %v2808 = vsel %vm2806, %v2797, 0
    %2810 = vmatpush.msra.mxu0 0.0
    %2811 = vmatpush.msra.mxu0 0.0
    %2812 = vmatpush.msra.mxu0 0.0
    %2813 = vmatpush.msra.mxu0 0.0
    %2814 = vmatpush.msra.mxu0 0.0
    %2815 = vmatpush.msra.mxu0 0.0
    %2816 = vmatpush.msra.mxu0 0.0
    %2817 = vmatpush.msra.mxu0 0.0
    %2818 = vmatpush.msra.mxu0 0.0
    %2819 = vmatpush.msra.mxu0 0.0
    %2820 = vmatpush.msra.mxu0 0.0
    %2821 = vmatpush.msra.mxu0 0.0
    %2822 = vmatpush.msra.mxu0 0.0
    %2823 = vmatpush.msra.mxu0 0.0
    %2824 = vmatpush.msra.mxu0 0.0
    %2825 = vmatpush.msra.mxu0 %v2808
    %2826 = vmatmul.f32.gmra.mxu0 %v2804
    %v2827 = vpop.f32.mrf.mxu0
    %v2828 = vadd.f32 %v2800, %v2827
    %2829 = vdwg.mxu0
    %v2830 = vmax.f32 %v2828, 0.0
    %v2831 = vld [vmem:[%s7] sm:$0xff]
    %v2832 = vld [vmem:[%s7 + $0x8] sm:$0xff]
    %v2833 = vld [vmem:[%s7 + $0x10] sm:$0xff]
    %v2834 = vld [vmem:[%s7 + $0x18] sm:$0xff]
    %v2835 = vld [vmem:[%s7 + $0x20] sm:$0xff]
    %v2836 = vld [vmem:[%s7 + $0x28] sm:$0xff]
    %v2837 = vld [vmem:[%s7 + $0x30] sm:$0xff]
    %v2838 = vld [vmem:[%s7 + $0x38] sm:$0xff]
    %v2839 = vld [vmem:[%s7 + $0x40] sm:$0xff]
    %v2840 = vld [vmem:[%s7 + $0x48] sm:$0xff]
    %v2841 = vld [vmem:[%s7 + $0x50] sm:$0xff]
    %v2842 = vld [vmem:[%s7 + $0x58] sm:$0xff]
    %v2843 = vld [vmem:[%s7 + $0x60] sm:$0xff]
    %v2844 = vld [vmem:[%s7 + $0x68] sm:$0xff]
    %v2845 = vld [vmem:[%s7 + $0x70] sm:$0xff]
    %v2846 = vld [vmem:[%s7 + $0x78] sm:$0xff]
    %v2847 = vld [vmem:[%s8] sm:$0x1]
    %v2849 = vperm.slane %v2847, 0
    %2851 = vmatpush.msra.mxu0 %v2846
    %2852 = vmatpush.msra.mxu0 %v2845
    %2853 = vmatpush.msra.mxu0 %v2844
    %2854 = vmatpush.msra.mxu0 %v2843
    %2855 = vmatpush.msra.mxu0 %v2842
    %2856 = vmatpush.msra.mxu0 %v2841
    %2857 = vmatpush.msra.mxu0 %v2840
    %2858 = vmatpush.msra.mxu0 %v2839
    %2859 = vmatpush.msra.mxu0 %v2838
    %2860 = vmatpush.msra.mxu0 %v2837
    %2861 = vmatpush.msra.mxu0 %v2836
    %2862 = vmatpush.msra.mxu0 %v2835
    %2863 = vmatpush.msra.mxu0 %v2834
    %2864 = vmatpush.msra.mxu0 %v2833
    %2865 = vmatpush.msra.mxu0 %v2832
    %2866 = vmatpush.msra.mxu0 %v2831
    %2867 = vmatmul.f32.gmra.mxu0 %v2830
    %v2868 = vpop.f32.mrf.mxu0
    %v2869 = vadd.f32 %v2849, %v2868
    %2870 = vdwg.mxu0
    %v2871 = vmax.f32 %v2869, 0.0
    %v2872 = vpack.c.bf16 %v2790, %v2790
    %v2873 = vpack.c.bf16 %v2791, %v2791
    %v2874 = vpack.c.bf16 %v2792, %v2792
    %v2875 = vpack.c.bf16 %v2793, %v2793
    %v2876 = vpack.c.bf16 %v2794, %v2794
    %v2877 = vpack.c.bf16 %v2795, %v2795
    %v2878 = vld [vmem:[%s9] sm:$0xff]
    %v2879 = vld [vmem:[%s9 + $0x8] sm:$0xff]
    %v2880 = vld [vmem:[%s9 + $0x10] sm:$0xff]
    %v2881 = vld [vmem:[%s9 + $0x18] sm:$0xff]
    %v2882 = vld [vmem:[%s9 + $0x20] sm:$0xff]
    %v2883 = vld [vmem:[%s9 + $0x28] sm:$0xff]
    %v2884 = vld [vmem:[%s9 + $0x30] sm:$0xff]
    %v2885 = vld [vmem:[%s9 + $0x38] sm:$0xff]
    %v2886 = vld [vmem:[%s9 + $0x40] sm:$0xff]
    %v2887 = vld [vmem:[%s9 + $0x48] sm:$0xff]
    %v2888 = vld [vmem:[%s9 + $0x50] sm:$0xff]
    %v2889 = vld [vmem:[%s9 + $0x58] sm:$0xff]
    %v2890 = vld [vmem:[%s9 + $0x60] sm:$0xff]
    %v2891 = vld [vmem:[%s9 + $0x68] sm:$0xff]
    %v2892 = vld [vmem:[%s9 + $0x70] sm:$0xff]
    %v2893 = vld [vmem:[%s9 + $0x78] sm:$0xff]
    %v2894 = vld [vmem:[%s9 + $0x80] sm:$0xff]
    %v2895 = vld [vmem:[%s9 + $0x88] sm:$0xff]
    %v2896 = vld [vmem:[%s9 + $0x90] sm:$0xff]
    %v2897 = vld [vmem:[%s9 + $0x98] sm:$0xff]
    %v2898 = vld [vmem:[%s9 + $0xa0] sm:$0xff]
    %v2899 = vld [vmem:[%s9 + $0xa8] sm:$0xff]
    %v2900 = vld [vmem:[%s9 + $0xb0] sm:$0xff]
    %v2901 = vld [vmem:[%s9 + $0xb8] sm:$0xff]
    %v2902 = vld [vmem:[%s9 + $0xc0] sm:$0xff]
    %v2903 = vld [vmem:[%s9 + $0xc8] sm:$0xff]
    %v2904 = vld [vmem:[%s9 + $0xd0] sm:$0xff]
    %v2905 = vld [vmem:[%s9 + $0xd8] sm:$0xff]
    %v2906 = vld [vmem:[%s9 + $0xe0] sm:$0xff]
    %v2907 = vld [vmem:[%s9 + $0xe8] sm:$0xff]
    %v2908 = vld [vmem:[%s9 + $0xf0] sm:$0xff]
    %v2909 = vld [vmem:[%s9 + $0xf8] sm:$0xff]
    %v2910 = vld [vmem:[%s9 + $0x100] sm:$0xff]
    %v2911 = vld [vmem:[%s9 + $0x108] sm:$0xff]
    %v2912 = vld [vmem:[%s9 + $0x110] sm:$0xff]
    %v2913 = vld [vmem:[%s9 + $0x118] sm:$0xff]
    %v2914 = vld [vmem:[%s9 + $0x120] sm:$0xff]
    %v2915 = vld [vmem:[%s9 + $0x128] sm:$0xff]
    %v2916 = vld [vmem:[%s9 + $0x130] sm:$0xff]
    %v2917 = vld [vmem:[%s9 + $0x138] sm:$0xff]
    %v2918 = vld [vmem:[%s9 + $0x140] sm:$0xff]
    %v2919 = vld [vmem:[%s9 + $0x148] sm:$0xff]
    %v2920 = vld [vmem:[%s9 + $0x150] sm:$0xff]
    %v2921 = vld [vmem:[%s9 + $0x158] sm:$0xff]
    %v2922 = vld [vmem:[%s9 + $0x160] sm:$0xff]
    %v2923 = vld [vmem:[%s9 + $0x168] sm:$0xff]
    %v2924 = vld [vmem:[%s9 + $0x170] sm:$0xff]
    %v2925 = vld [vmem:[%s9 + $0x178] sm:$0xff]
    %v2926 = vld [vmem:[%s9 + $0x180] sm:$0xff]
    %v2927 = vld [vmem:[%s9 + $0x188] sm:$0xff]
    %v2928 = vld [vmem:[%s9 + $0x190] sm:$0xff]
    %v2929 = vld [vmem:[%s9 + $0x198] sm:$0xff]
    %v2930 = vld [vmem:[%s9 + $0x1a0] sm:$0xff]
    %v2931 = vld [vmem:[%s9 + $0x1a8] sm:$0xff]
    %v2932 = vld [vmem:[%s9 + $0x1b0] sm:$0xff]
    %v2933 = vld [vmem:[%s9 + $0x1b8] sm:$0xff]
    %v2934 = vld [vmem:[%s9 + $0x1c0] sm:$0xff]
    %v2935 = vld [vmem:[%s9 + $0x1c8] sm:$0xff]
    %v2936 = vld [vmem:[%s9 + $0x1d0] sm:$0xff]
    %v2937 = vld [vmem:[%s9 + $0x1d8] sm:$0xff]
    %v2938 = vld [vmem:[%s9 + $0x1e0] sm:$0xff]
    %v2939 = vld [vmem:[%s9 + $0x1e8] sm:$0xff]
    %v2940 = vld [vmem:[%s9 + $0x1f0] sm:$0xff]
    %v2941 = vld [vmem:[%s9 + $0x1f8] sm:$0xff]
    %v2942 = vld [vmem:[%s9 + $0x200] sm:$0xff]
    %v2943 = vld [vmem:[%s9 + $0x208] sm:$0xff]
    %v2944 = vld [vmem:[%s9 + $0x210] sm:$0xff]
    %v2945 = vld [vmem:[%s9 + $0x218] sm:$0xff]
    %v2946 = vld [vmem:[%s9 + $0x220] sm:$0xff]
    %v2947 = vld [vmem:[%s9 + $0x228] sm:$0xff]
    %v2948 = vld [vmem:[%s9 + $0x230] sm:$0xff]
    %v2949 = vld [vmem:[%s9 + $0x238] sm:$0xff]
    %v2950 = vld [vmem:[%s9 + $0x240] sm:$0xff]
    %v2951 = vld [vmem:[%s9 + $0x248] sm:$0xff]
    %v2952 = vld [vmem:[%s9 + $0x250] sm:$0xff]
    %v2953 = vld [vmem:[%s9 + $0x258] sm:$0xff]
    %v2954 = vld [vmem:[%s9 + $0x260] sm:$0xff]
    %v2955 = vld [vmem:[%s9 + $0x268] sm:$0xff]
    %v2956 = vld [vmem:[%s9 + $0x270] sm:$0xff]
    %v2957 = vld [vmem:[%s9 + $0x278] sm:$0xff]
    %v2958 = vld [vmem:[%s9 + $0x280] sm:$0xff]
    %v2959 = vld [vmem:[%s9 + $0x288] sm:$0xff]
    %v2960 = vld [vmem:[%s9 + $0x290] sm:$0xff]
    %v2961 = vld [vmem:[%s9 + $0x298] sm:$0xff]
    %v2962 = vld [vmem:[%s9 + $0x2a0] sm:$0xff]
    %v2963 = vld [vmem:[%s9 + $0x2a8] sm:$0xff]
    %v2964 = vld [vmem:[%s9 + $0x2b0] sm:$0xff]
    %v2965 = vld [vmem:[%s9 + $0x2b8] sm:$0xff]
    %v2966 = vld [vmem:[%s9 + $0x2c0] sm:$0xff]
    %v2967 = vld [vmem:[%s9 + $0x2c8] sm:$0xff]
    %v2968 = vld [vmem:[%s9 + $0x2d0] sm:$0xff]
    %v2969 = vld [vmem:[%s9 + $0x2d8] sm:$0xff]
    %v2970 = vld [vmem:[%s9 + $0x2e0] sm:$0xff]
    %v2971 = vld [vmem:[%s9 + $0x2e8] sm:$0xff]
    %v2972 = vld [vmem:[%s9 + $0x2f0] sm:$0xff]
    %v2973 = vld [vmem:[%s9 + $0x2f8] sm:$0xff]
    %v2974 = vpack.c.bf16 %v2871, %v2871
    %v2975 = vld [vmem:[%s10] sm:$0xff]
    %v2976 = vld [vmem:[%s10 + $0x8] sm:$0xff]
    %v2977 = vld [vmem:[%s10 + $0x10] sm:$0xff]
    %v2978 = vld [vmem:[%s10 + $0x18] sm:$0xff]
    %v2979 = vld [vmem:[%s10 + $0x20] sm:$0xff]
    %v2980 = vld [vmem:[%s10 + $0x28] sm:$0xff]
    %v2981 = vld [vmem:[%s10 + $0x30] sm:$0xff]
    %v2982 = vld [vmem:[%s10 + $0x38] sm:$0xff]
    %v2991 = vunpack.c.l.b16 %v2975
    %v2992 = vunpack.c.h.b16 %v2975
    %v2993 = vunpack.c.l.b16 %v2976
    %v2994 = vunpack.c.h.b16 %v2976
    %v2995 = vunpack.c.l.b16 %v2977
    %v2996 = vunpack.c.h.b16 %v2977
    %v2997 = vunpack.c.l.b16 %v2978
    %v2998 = vunpack.c.h.b16 %v2978
    %v2999 = vunpack.c.l.b16 %v2979
    %v3000 = vunpack.c.h.b16 %v2979
    %v3001 = vunpack.c.l.b16 %v2980
    %v3002 = vunpack.c.h.b16 %v2980
    %v3003 = vunpack.c.l.b16 %v2981
    %v3004 = vunpack.c.h.b16 %v2981
    %v3005 = vunpack.c.l.b16 %v2982
    %v3006 = vunpack.c.h.b16 %v2982
    %v3007 = vpack.c.b16 %v2993, %v2991
    %v3008 = vpack.c.b16 %v2994, %v2992
    %v3009 = vpack.c.b16 %v2997, %v2995
    %v3010 = vpack.c.b16 %v2998, %v2996
    %v3011 = vpack.c.b16 %v3001, %v2999
    %v3012 = vpack.c.b16 %v3002, %v3000
    %v3013 = vpack.c.b16 %v3005, %v3003
    %v3014 = vpack.c.b16 %v3006, %v3004
    %vm3023 = vcmask 523264
    %v3025 = vsel %vm3023, %v2974, 0
    %3027 = vmatpush.bf16.msra.mxu0 0
    %3028 = vmatpush.bf16.msra.mxu0 0
    %3029 = vmatpush.bf16.msra.mxu0 0
    %3030 = vmatpush.bf16.msra.mxu0 0
    %3031 = vmatpush.bf16.msra.mxu0 %v3013
    %3032 = vmatpush.bf16.msra.mxu0 %v3011
    %3033 = vmatpush.bf16.msra.mxu0 %v3009
    %3034 = vmatpush.bf16.msra.mxu0 %v3007
    %3035 = vmatmul.bf16.gmra.mxu0 %v3025
    %v3036 = vpop.f32.mrf.mxu0
    %v3037 = vadd.f32 0.0, %v3036
    %v3038 = vpop.f32.mrf.mxu0
    %3039 = vdwg.mxu0
    %3040 = vmatpush.bf16.msra.mxu0 0
    %3041 = vmatpush.bf16.msra.mxu0 0
    %3042 = vmatpush.bf16.msra.mxu0 0
    %3043 = vmatpush.bf16.msra.mxu0 0
    %3044 = vmatpush.bf16.msra.mxu0 %v3014
    %3045 = vmatpush.bf16.msra.mxu0 %v3012
    %3046 = vmatpush.bf16.msra.mxu0 %v3010
    %3047 = vmatpush.bf16.msra.mxu0 %v3008
    %3048 = vmatmul.bf16.gmra.mxu0 %v3025
    %v3049 = vpop.f32.mrf.mxu0
    %v3050 = vadd.f32 0.0, %v3049
    %v3051 = vpop.f32.mrf.mxu0
    %3052 = vdwg.mxu0
    %v3149 = vunpack.c.l.b16 %v2878
    %v3150 = vunpack.c.h.b16 %v2878
    %v3151 = vunpack.c.l.b16 %v2879
    %v3152 = vunpack.c.h.b16 %v2879
    %v3153 = vunpack.c.l.b16 %v2880
    %v3154 = vunpack.c.h.b16 %v2880
    %v3155 = vunpack.c.l.b16 %v2881
    %v3156 = vunpack.c.h.b16 %v2881
    %v3157 = vunpack.c.l.b16 %v2882
    %v3158 = vunpack.c.h.b16 %v2882
    %v3159 = vunpack.c.l.b16 %v2883
    %v3160 = vunpack.c.h.b16 %v2883
    %v3161 = vunpack.c.l.b16 %v2884
    %v3162 = vunpack.c.h.b16 %v2884
    %v3163 = vunpack.c.l.b16 %v2885
    %v3164 = vunpack.c.h.b16 %v2885
    %v3165 = vunpack.c.l.b16 %v2886
    %v3166 = vunpack.c.h.b16 %v2886
    %v3167 = vunpack.c.l.b16 %v2887
    %v3168 = vunpack.c.h.b16 %v2887
    %v3169 = vunpack.c.l.b16 %v2888
    %v3170 = vunpack.c.h.b16 %v2888
    %v3171 = vunpack.c.l.b16 %v2889
    %v3172 = vunpack.c.h.b16 %v2889
    %v3173 = vunpack.c.l.b16 %v2890
    %v3174 = vunpack.c.h.b16 %v2890
    %v3175 = vunpack.c.l.b16 %v2891
    %v3176 = vunpack.c.h.b16 %v2891
    %v3177 = vunpack.c.l.b16 %v2892
    %v3178 = vunpack.c.h.b16 %v2892
    %v3179 = vunpack.c.l.b16 %v2893
    %v3180 = vunpack.c.h.b16 %v2893
    %v3181 = vunpack.c.l.b16 %v2894
    %v3182 = vunpack.c.h.b16 %v2894
    %v3183 = vunpack.c.l.b16 %v2895
    %v3184 = vunpack.c.h.b16 %v2895
    %v3185 = vunpack.c.l.b16 %v2896
    %v3186 = vunpack.c.h.b16 %v2896
    %v3187 = vunpack.c.l.b16 %v2897
    %v3188 = vunpack.c.h.b16 %v2897
    %v3189 = vunpack.c.l.b16 %v2898
    %v3190 = vunpack.c.h.b16 %v2898
    %v3191 = vunpack.c.l.b16 %v2899
    %v3192 = vunpack.c.h.b16 %v2899
    %v3193 = vunpack.c.l.b16 %v2900
    %v3194 = vunpack.c.h.b16 %v2900
    %v3195 = vunpack.c.l.b16 %v2901
    %v3196 = vunpack.c.h.b16 %v2901
    %v3197 = vunpack.c.l.b16 %v2902
    %v3198 = vunpack.c.h.b16 %v2902
    %v3199 = vunpack.c.l.b16 %v2903
    %v3200 = vunpack.c.h.b16 %v2903
    %v3201 = vunpack.c.l.b16 %v2904
    %v3202 = vunpack.c.h.b16 %v2904
    %v3203 = vunpack.c.l.b16 %v2905
    %v3204 = vunpack.c.h.b16 %v2905
    %v3205 = vunpack.c.l.b16 %v2906
    %v3206 = vunpack.c.h.b16 %v2906
    %v3207 = vunpack.c.l.b16 %v2907
    %v3208 = vunpack.c.h.b16 %v2907
    %v3209 = vunpack.c.l.b16 %v2908
    %v3210 = vunpack.c.h.b16 %v2908
    %v3211 = vunpack.c.l.b16 %v2909
    %v3212 = vunpack.c.h.b16 %v2909
    %v3213 = vunpack.c.l.b16 %v2910
    %v3214 = vunpack.c.h.b16 %v2910
    %v3215 = vunpack.c.l.b16 %v2911
    %v3216 = vunpack.c.h.b16 %v2911
    %v3217 = vunpack.c.l.b16 %v2912
    %v3218 = vunpack.c.h.b16 %v2912
    %v3219 = vunpack.c.l.b16 %v2913
    %v3220 = vunpack.c.h.b16 %v2913
    %v3221 = vunpack.c.l.b16 %v2914
    %v3222 = vunpack.c.h.b16 %v2914
    %v3223 = vunpack.c.l.b16 %v2915
    %v3224 = vunpack.c.h.b16 %v2915
    %v3225 = vunpack.c.l.b16 %v2916
    %v3226 = vunpack.c.h.b16 %v2916
    %v3227 = vunpack.c.l.b16 %v2917
    %v3228 = vunpack.c.h.b16 %v2917
    %v3229 = vunpack.c.l.b16 %v2918
    %v3230 = vunpack.c.h.b16 %v2918
    %v3231 = vunpack.c.l.b16 %v2919
    %v3232 = vunpack.c.h.b16 %v2919
    %v3233 = vunpack.c.l.b16 %v2920
    %v3234 = vunpack.c.h.b16 %v2920
    %v3235 = vunpack.c.l.b16 %v2921
    %v3236 = vunpack.c.h.b16 %v2921
    %v3237 = vunpack.c.l.b16 %v2922
    %v3238 = vunpack.c.h.b16 %v2922
    %v3239 = vunpack.c.l.b16 %v2923
    %v3240 = vunpack.c.h.b16 %v2923
    %v3241 = vunpack.c.l.b16 %v2924
    %v3242 = vunpack.c.h.b16 %v2924
    %v3243 = vunpack.c.l.b16 %v2925
    %v3244 = vunpack.c.h.b16 %v2925
    %v3245 = vunpack.c.l.b16 %v2926
    %v3246 = vunpack.c.h.b16 %v2926
    %v3247 = vunpack.c.l.b16 %v2927
    %v3248 = vunpack.c.h.b16 %v2927
    %v3249 = vunpack.c.l.b16 %v2928
    %v3250 = vunpack.c.h.b16 %v2928
    %v3251 = vunpack.c.l.b16 %v2929
    %v3252 = vunpack.c.h.b16 %v2929
    %v3253 = vunpack.c.l.b16 %v2930
    %v3254 = vunpack.c.h.b16 %v2930
    %v3255 = vunpack.c.l.b16 %v2931
    %v3256 = vunpack.c.h.b16 %v2931
    %v3257 = vunpack.c.l.b16 %v2932
    %v3258 = vunpack.c.h.b16 %v2932
    %v3259 = vunpack.c.l.b16 %v2933
    %v3260 = vunpack.c.h.b16 %v2933
    %v3261 = vunpack.c.l.b16 %v2934
    %v3262 = vunpack.c.h.b16 %v2934
    %v3263 = vunpack.c.l.b16 %v2935
    %v3264 = vunpack.c.h.b16 %v2935
    %v3265 = vunpack.c.l.b16 %v2936
    %v3266 = vunpack.c.h.b16 %v2936
    %v3267 = vunpack.c.l.b16 %v2937
    %v3268 = vunpack.c.h.b16 %v2937
    %v3269 = vunpack.c.l.b16 %v2938
    %v3270 = vunpack.c.h.b16 %v2938
    %v3271 = vunpack.c.l.b16 %v2939
    %v3272 = vunpack.c.h.b16 %v2939
    %v3273 = vunpack.c.l.b16 %v2940
    %v3274 = vunpack.c.h.b16 %v2940
    %v3275 = vunpack.c.l.b16 %v2941
    %v3276 = vunpack.c.h.b16 %v2941
    %v3277 = vunpack.c.l.b16 %v2942
    %v3278 = vunpack.c.h.b16 %v2942
    %v3279 = vunpack.c.l.b16 %v2943
    %v3280 = vunpack.c.h.b16 %v2943
    %v3281 = vunpack.c.l.b16 %v2944
    %v3282 = vunpack.c.h.b16 %v2944
    %v3283 = vunpack.c.l.b16 %v2945
    %v3284 = vunpack.c.h.b16 %v2945
    %v3285 = vunpack.c.l.b16 %v2946
    %v3286 = vunpack.c.h.b16 %v2946
    %v3287 = vunpack.c.l.b16 %v2947
    %v3288 = vunpack.c.h.b16 %v2947
    %v3289 = vunpack.c.l.b16 %v2948
    %v3290 = vunpack.c.h.b16 %v2948
    %v3291 = vunpack.c.l.b16 %v2949
    %v3292 = vunpack.c.h.b16 %v2949
    %v3293 = vunpack.c.l.b16 %v2950
    %v3294 = vunpack.c.h.b16 %v2950
    %v3295 = vunpack.c.l.b16 %v2951
    %v3296 = vunpack.c.h.b16 %v2951
    %v3297 = vunpack.c.l.b16 %v2952
    %v3298 = vunpack.c.h.b16 %v2952
    %v3299 = vunpack.c.l.b16 %v2953
    %v3300 = vunpack.c.h.b16 %v2953
    %v3301 = vunpack.c.l.b16 %v2954
    %v3302 = vunpack.c.h.b16 %v2954
    %v3303 = vunpack.c.l.b16 %v2955
    %v3304 = vunpack.c.h.b16 %v2955
    %v3305 = vunpack.c.l.b16 %v2956
    %v3306 = vunpack.c.h.b16 %v2956
    %v3307 = vunpack.c.l.b16 %v2957
    %v3308 = vunpack.c.h.b16 %v2957
    %v3309 = vunpack.c.l.b16 %v2958
    %v3310 = vunpack.c.h.b16 %v2958
    %v3311 = vunpack.c.l.b16 %v2959
    %v3312 = vunpack.c.h.b16 %v2959
    %v3313 = vunpack.c.l.b16 %v2960
    %v3314 = vunpack.c.h.b16 %v2960
    %v3315 = vunpack.c.l.b16 %v2961
    %v3316 = vunpack.c.h.b16 %v2961
    %v3317 = vunpack.c.l.b16 %v2962
    %v3318 = vunpack.c.h.b16 %v2962
    %v3319 = vunpack.c.l.b16 %v2963
    %v3320 = vunpack.c.h.b16 %v2963
    %v3321 = vunpack.c.l.b16 %v2964
    %v3322 = vunpack.c.h.b16 %v2964
    %v3323 = vunpack.c.l.b16 %v2965
    %v3324 = vunpack.c.h.b16 %v2965
    %v3325 = vunpack.c.l.b16 %v2966
    %v3326 = vunpack.c.h.b16 %v2966
    %v3327 = vunpack.c.l.b16 %v2967
    %v3328 = vunpack.c.h.b16 %v2967
    %v3329 = vunpack.c.l.b16 %v2968
    %v3330 = vunpack.c.h.b16 %v2968
    %v3331 = vunpack.c.l.b16 %v2969
    %v3332 = vunpack.c.h.b16 %v2969
    %v3333 = vunpack.c.l.b16 %v2970
    %v3334 = vunpack.c.h.b16 %v2970
    %v3335 = vunpack.c.l.b16 %v2971
    %v3336 = vunpack.c.h.b16 %v2971
    %v3337 = vunpack.c.l.b16 %v2972
    %v3338 = vunpack.c.h.b16 %v2972
    %v3339 = vunpack.c.l.b16 %v2973
    %v3340 = vunpack.c.h.b16 %v2973
    %v3341 = vpack.c.b16 %v3151, %v3149
    %v3342 = vpack.c.b16 %v3152, %v3150
    %v3343 = vpack.c.b16 %v3155, %v3153
    %v3344 = vpack.c.b16 %v3156, %v3154
    %v3345 = vpack.c.b16 %v3159, %v3157
    %v3346 = vpack.c.b16 %v3160, %v3158
    %v3347 = vpack.c.b16 %v3163, %v3161
    %v3348 = vpack.c.b16 %v3164, %v3162
    %v3349 = vpack.c.b16 %v3167, %v3165
    %v3350 = vpack.c.b16 %v3168, %v3166
    %v3351 = vpack.c.b16 %v3171, %v3169
    %v3352 = vpack.c.b16 %v3172, %v3170
    %v3353 = vpack.c.b16 %v3175, %v3173
    %v3354 = vpack.c.b16 %v3176, %v3174
    %v3355 = vpack.c.b16 %v3179, %v3177
    %v3356 = vpack.c.b16 %v3180, %v3178
    %v3357 = vpack.c.b16 %v3183, %v3181
    %v3358 = vpack.c.b16 %v3184, %v3182
    %v3359 = vpack.c.b16 %v3187, %v3185
    %v3360 = vpack.c.b16 %v3188, %v3186
    %v3361 = vpack.c.b16 %v3191, %v3189
    %v3362 = vpack.c.b16 %v3192, %v3190
    %v3363 = vpack.c.b16 %v3195, %v3193
    %v3364 = vpack.c.b16 %v3196, %v3194
    %v3365 = vpack.c.b16 %v3199, %v3197
    %v3366 = vpack.c.b16 %v3200, %v3198
    %v3367 = vpack.c.b16 %v3203, %v3201
    %v3368 = vpack.c.b16 %v3204, %v3202
    %v3369 = vpack.c.b16 %v3207, %v3205
    %v3370 = vpack.c.b16 %v3208, %v3206
    %v3371 = vpack.c.b16 %v3211, %v3209
    %v3372 = vpack.c.b16 %v3212, %v3210
    %v3373 = vpack.c.b16 %v3215, %v3213
    %v3374 = vpack.c.b16 %v3216, %v3214
    %v3375 = vpack.c.b16 %v3219, %v3217
    %v3376 = vpack.c.b16 %v3220, %v3218
    %v3377 = vpack.c.b16 %v3223, %v3221
    %v3378 = vpack.c.b16 %v3224, %v3222
    %v3379 = vpack.c.b16 %v3227, %v3225
    %v3380 = vpack.c.b16 %v3228, %v3226
    %v3381 = vpack.c.b16 %v3231, %v3229
    %v3382 = vpack.c.b16 %v3232, %v3230
    %v3383 = vpack.c.b16 %v3235, %v3233
    %v3384 = vpack.c.b16 %v3236, %v3234
    %v3385 = vpack.c.b16 %v3239, %v3237
    %v3386 = vpack.c.b16 %v3240, %v3238
    %v3387 = vpack.c.b16 %v3243, %v3241
    %v3388 = vpack.c.b16 %v3244, %v3242
    %v3389 = vpack.c.b16 %v3247, %v3245
    %v3390 = vpack.c.b16 %v3248, %v3246
    %v3391 = vpack.c.b16 %v3251, %v3249
    %v3392 = vpack.c.b16 %v3252, %v3250
    %v3393 = vpack.c.b16 %v3255, %v3253
    %v3394 = vpack.c.b16 %v3256, %v3254
    %v3395 = vpack.c.b16 %v3259, %v3257
    %v3396 = vpack.c.b16 %v3260, %v3258
    %v3397 = vpack.c.b16 %v3263, %v3261
    %v3398 = vpack.c.b16 %v3264, %v3262
    %v3399 = vpack.c.b16 %v3267, %v3265
    %v3400 = vpack.c.b16 %v3268, %v3266
    %v3401 = vpack.c.b16 %v3271, %v3269
    %v3402 = vpack.c.b16 %v3272, %v3270
    %v3403 = vpack.c.b16 %v3275, %v3273
    %v3404 = vpack.c.b16 %v3276, %v3274
    %v3405 = vpack.c.b16 %v3279, %v3277
    %v3406 = vpack.c.b16 %v3280, %v3278
    %v3407 = vpack.c.b16 %v3283, %v3281
    %v3408 = vpack.c.b16 %v3284, %v3282
    %v3409 = vpack.c.b16 %v3287, %v3285
    %v3410 = vpack.c.b16 %v3288, %v3286
    %v3411 = vpack.c.b16 %v3291, %v3289
    %v3412 = vpack.c.b16 %v3292, %v3290
    %v3413 = vpack.c.b16 %v3295, %v3293
    %v3414 = vpack.c.b16 %v3296, %v3294
    %v3415 = vpack.c.b16 %v3299, %v3297
    %v3416 = vpack.c.b16 %v3300, %v3298
    %v3417 = vpack.c.b16 %v3303, %v3301
    %v3418 = vpack.c.b16 %v3304, %v3302
    %v3419 = vpack.c.b16 %v3307, %v3305
    %v3420 = vpack.c.b16 %v3308, %v3306
    %v3421 = vpack.c.b16 %v3311, %v3309
    %v3422 = vpack.c.b16 %v3312, %v3310
    %v3423 = vpack.c.b16 %v3315, %v3313
    %v3424 = vpack.c.b16 %v3316, %v3314
    %v3425 = vpack.c.b16 %v3319, %v3317
    %v3426 = vpack.c.b16 %v3320, %v3318
    %v3427 = vpack.c.b16 %v3323, %v3321
    %v3428 = vpack.c.b16 %v3324, %v3322
    %v3429 = vpack.c.b16 %v3327, %v3325
    %v3430 = vpack.c.b16 %v3328, %v3326
    %v3431 = vpack.c.b16 %v3331, %v3329
    %v3432 = vpack.c.b16 %v3332, %v3330
    %v3433 = vpack.c.b16 %v3335, %v3333
    %v3434 = vpack.c.b16 %v3336, %v3334
    %v3435 = vpack.c.b16 %v3339, %v3337
    %v3436 = vpack.c.b16 %v3340, %v3338
    %3533 = vmatpush.bf16.msra.mxu0 %v3355
    %3534 = vmatpush.bf16.msra.mxu0 %v3353
    %3535 = vmatpush.bf16.msra.mxu0 %v3351
    %3536 = vmatpush.bf16.msra.mxu0 %v3349
    %3537 = vmatpush.bf16.msra.mxu0 %v3347
    %3538 = vmatpush.bf16.msra.mxu0 %v3345
    %3539 = vmatpush.bf16.msra.mxu0 %v3343
    %3540 = vmatpush.bf16.msra.mxu0 %v3341
    %3541 = vmatmul.bf16.gmra.mxu0 %v2872
    %v3542 = vpop.f32.mrf.mxu0
    %v3543 = vadd.f32 %v3037, %v3542
    %v3544 = vpop.f32.mrf.mxu0
    %3545 = vdwg.mxu0
    %3546 = vmatpush.bf16.msra.mxu0 %v3371
    %3547 = vmatpush.bf16.msra.mxu0 %v3369
    %3548 = vmatpush.bf16.msra.mxu0 %v3367
    %3549 = vmatpush.bf16.msra.mxu0 %v3365
    %3550 = vmatpush.bf16.msra.mxu0 %v3363
    %3551 = vmatpush.bf16.msra.mxu0 %v3361
    %3552 = vmatpush.bf16.msra.mxu0 %v3359
    %3553 = vmatpush.bf16.msra.mxu0 %v3357
    %3554 = vmatmul.bf16.gmra.mxu0 %v2873
    %v3555 = vpop.f32.mrf.mxu0
    %v3556 = vadd.f32 %v3543, %v3555
    %v3557 = vpop.f32.mrf.mxu0
    %3558 = vdwg.mxu0
    %3559 = vmatpush.bf16.msra.mxu0 %v3387
    %3560 = vmatpush.bf16.msra.mxu0 %v3385
    %3561 = vmatpush.bf16.msra.mxu0 %v3383
    %3562 = vmatpush.bf16.msra.mxu0 %v3381
    %3563 = vmatpush.bf16.msra.mxu0 %v3379
    %3564 = vmatpush.bf16.msra.mxu0 %v3377
    %3565 = vmatpush.bf16.msra.mxu0 %v3375
    %3566 = vmatpush.bf16.msra.mxu0 %v3373
    %3567 = vmatmul.bf16.gmra.mxu0 %v2874
    %v3568 = vpop.f32.mrf.mxu0
    %v3569 = vadd.f32 %v3556, %v3568
    %v3570 = vpop.f32.mrf.mxu0
    %3571 = vdwg.mxu0
    %3572 = vmatpush.bf16.msra.mxu0 %v3403
    %3573 = vmatpush.bf16.msra.mxu0 %v3401
    %3574 = vmatpush.bf16.msra.mxu0 %v3399
    %3575 = vmatpush.bf16.msra.mxu0 %v3397
    %3576 = vmatpush.bf16.msra.mxu0 %v3395
    %3577 = vmatpush.bf16.msra.mxu0 %v3393
    %3578 = vmatpush.bf16.msra.mxu0 %v3391
    %3579 = vmatpush.bf16.msra.mxu0 %v3389
    %3580 = vmatmul.bf16.gmra.mxu0 %v2875
    %v3581 = vpop.f32.mrf.mxu0
    %v3582 = vadd.f32 %v3569, %v3581
    %v3583 = vpop.f32.mrf.mxu0
    %3584 = vdwg.mxu0
    %3585 = vmatpush.bf16.msra.mxu0 %v3419
    %3586 = vmatpush.bf16.msra.mxu0 %v3417
    %3587 = vmatpush.bf16.msra.mxu0 %v3415
    %3588 = vmatpush.bf16.msra.mxu0 %v3413
    %3589 = vmatpush.bf16.msra.mxu0 %v3411
    %3590 = vmatpush.bf16.msra.mxu0 %v3409
    %3591 = vmatpush.bf16.msra.mxu0 %v3407
    %3592 = vmatpush.bf16.msra.mxu0 %v3405
    %3593 = vmatmul.bf16.gmra.mxu0 %v2876
    %v3594 = vpop.f32.mrf.mxu0
    %v3595 = vadd.f32 %v3582, %v3594
    %v3596 = vpop.f32.mrf.mxu0
    %3597 = vdwg.mxu0
    %3598 = vmatpush.bf16.msra.mxu0 %v3435
    %3599 = vmatpush.bf16.msra.mxu0 %v3433
    %3600 = vmatpush.bf16.msra.mxu0 %v3431
    %3601 = vmatpush.bf16.msra.mxu0 %v3429
    %3602 = vmatpush.bf16.msra.mxu0 %v3427
    %3603 = vmatpush.bf16.msra.mxu0 %v3425
    %3604 = vmatpush.bf16.msra.mxu0 %v3423
    %3605 = vmatpush.bf16.msra.mxu0 %v3421
    %3606 = vmatmul.bf16.gmra.mxu0 %v2877
    %v3607 = vpop.f32.mrf.mxu0
    %v3608 = vadd.f32 %v3595, %v3607
    %v3609 = vpop.f32.mrf.mxu0
    %3610 = vdwg.mxu0
    %3611 = vmatpush.bf16.msra.mxu0 %v3356
    %3612 = vmatpush.bf16.msra.mxu0 %v3354
    %3613 = vmatpush.bf16.msra.mxu0 %v3352
    %3614 = vmatpush.bf16.msra.mxu0 %v3350
    %3615 = vmatpush.bf16.msra.mxu0 %v3348
    %3616 = vmatpush.bf16.msra.mxu0 %v3346
    %3617 = vmatpush.bf16.msra.mxu0 %v3344
    %3618 = vmatpush.bf16.msra.mxu0 %v3342
    %3619 = vmatmul.bf16.gmra.mxu0 %v2872
    %v3620 = vpop.f32.mrf.mxu0
    %v3621 = vadd.f32 %v3050, %v3620
    %v3622 = vpop.f32.mrf.mxu0
    %3623 = vdwg.mxu0
    %3624 = vmatpush.bf16.msra.mxu0 %v3372
    %3625 = vmatpush.bf16.msra.mxu0 %v3370
    %3626 = vmatpush.bf16.msra.mxu0 %v3368
    %3627 = vmatpush.bf16.msra.mxu0 %v3366
    %3628 = vmatpush.bf16.msra.mxu0 %v3364
    %3629 = vmatpush.bf16.msra.mxu0 %v3362
    %3630 = vmatpush.bf16.msra.mxu0 %v3360
    %3631 = vmatpush.bf16.msra.mxu0 %v3358
    %3632 = vmatmul.bf16.gmra.mxu0 %v2873
    %v3633 = vpop.f32.mrf.mxu0
    %v3634 = vadd.f32 %v3621, %v3633
    %v3635 = vpop.f32.mrf.mxu0
    %3636 = vdwg.mxu0
    %3637 = vmatpush.bf16.msra.mxu0 %v3388
    %3638 = vmatpush.bf16.msra.mxu0 %v3386
    %3639 = vmatpush.bf16.msra.mxu0 %v3384
    %3640 = vmatpush.bf16.msra.mxu0 %v3382
    %3641 = vmatpush.bf16.msra.mxu0 %v3380
    %3642 = vmatpush.bf16.msra.mxu0 %v3378
    %3643 = vmatpush.bf16.msra.mxu0 %v3376
    %3644 = vmatpush.bf16.msra.mxu0 %v3374
    %3645 = vmatmul.bf16.gmra.mxu0 %v2874
    %v3646 = vpop.f32.mrf.mxu0
    %v3647 = vadd.f32 %v3634, %v3646
    %v3648 = vpop.f32.mrf.mxu0
    %3649 = vdwg.mxu0
    %3650 = vmatpush.bf16.msra.mxu0 %v3404
    %3651 = vmatpush.bf16.msra.mxu0 %v3402
    %3652 = vmatpush.bf16.msra.mxu0 %v3400
    %3653 = vmatpush.bf16.msra.mxu0 %v3398
    %3654 = vmatpush.bf16.msra.mxu0 %v3396
    %3655 = vmatpush.bf16.msra.mxu0 %v3394
    %3656 = vmatpush.bf16.msra.mxu0 %v3392
    %3657 = vmatpush.bf16.msra.mxu0 %v3390
    %3658 = vmatmul.bf16.gmra.mxu0 %v2875
    %v3659 = vpop.f32.mrf.mxu0
    %v3660 = vadd.f32 %v3647, %v3659
    %v3661 = vpop.f32.mrf.mxu0
    %3662 = vdwg.mxu0
    %3663 = vmatpush.bf16.msra.mxu0 %v3420
    %3664 = vmatpush.bf16.msra.mxu0 %v3418
    %3665 = vmatpush.bf16.msra.mxu0 %v3416
    %3666 = vmatpush.bf16.msra.mxu0 %v3414
    %3667 = vmatpush.bf16.msra.mxu0 %v3412
    %3668 = vmatpush.bf16.msra.mxu0 %v3410
    %3669 = vmatpush.bf16.msra.mxu0 %v3408
    %3670 = vmatpush.bf16.msra.mxu0 %v3406
    %3671 = vmatmul.bf16.gmra.mxu0 %v2876
    %v3672 = vpop.f32.mrf.mxu0
    %v3673 = vadd.f32 %v3660, %v3672
    %v3674 = vpop.f32.mrf.mxu0
    %3675 = vdwg.mxu0
    %3676 = vmatpush.bf16.msra.mxu0 %v3436
    %3677 = vmatpush.bf16.msra.mxu0 %v3434
    %3678 = vmatpush.bf16.msra.mxu0 %v3432
    %3679 = vmatpush.bf16.msra.mxu0 %v3430
    %3680 = vmatpush.bf16.msra.mxu0 %v3428
    %3681 = vmatpush.bf16.msra.mxu0 %v3426
    %3682 = vmatpush.bf16.msra.mxu0 %v3424
    %3683 = vmatpush.bf16.msra.mxu0 %v3422
    %3684 = vmatmul.bf16.gmra.mxu0 %v2877
    %v3685 = vpop.f32.mrf.mxu0
    %v3686 = vadd.f32 %v3673, %v3685
    %v3687 = vpop.f32.mrf.mxu0
    %3688 = vdwg.mxu0
    %v3689 = vld [vmem:[%s11] sm:$0x3]
    %v3691 = vperm.slane %v3689, 0
    %v3692 = vperm.slane %v3689, 1
    %v3695 = vadd.f32 %v3608, %v3691
    %v3696 = vadd.f32 %v3686, %v3692
    %v3697 = vmax.f32 %v3695, 0.0
    %v3698 = vmax.f32 %v3696, 0.0
    %v3699 = vpack.c.bf16 %v3697, %v3697
    %v3700 = vpack.c.bf16 %v3698, %v3698
    %v3701 = vld [vmem:[%s12] sm:$0xf]
    %v3702 = vld [vmem:[%s12 + $0x4] sm:$0xf]
    %v3703 = vld [vmem:[%s12 + $0x8] sm:$0xf]
    %v3704 = vld [vmem:[%s12 + $0xc] sm:$0xf]
    %v3705 = vld [vmem:[%s12 + $0x10] sm:$0xf]
    %v3706 = vld [vmem:[%s12 + $0x14] sm:$0xf]
    %v3707 = vld [vmem:[%s12 + $0x18] sm:$0xf]
    %v3708 = vld [vmem:[%s12 + $0x1c] sm:$0xf]
    %v3709 = vld [vmem:[%s12 + $0x20] sm:$0xf]
    %v3710 = vld [vmem:[%s12 + $0x24] sm:$0xf]
    %v3711 = vld [vmem:[%s12 + $0x28] sm:$0xf]
    %v3712 = vld [vmem:[%s12 + $0x2c] sm:$0xf]
    %v3713 = vld [vmem:[%s12 + $0x30] sm:$0xf]
    %v3714 = vld [vmem:[%s12 + $0x34] sm:$0xf]
    %v3715 = vld [vmem:[%s12 + $0x38] sm:$0xf]
    %v3716 = vld [vmem:[%s12 + $0x3c] sm:$0xf]
    %v3717 = vld [vmem:[%s12 + $0x40] sm:$0xf]
    %v3718 = vld [vmem:[%s12 + $0x44] sm:$0xf]
    %v3719 = vld [vmem:[%s12 + $0x48] sm:$0xf]
    %v3720 = vld [vmem:[%s12 + $0x4c] sm:$0xf]
    %v3721 = vld [vmem:[%s12 + $0x50] sm:$0xf]
    %v3722 = vld [vmem:[%s12 + $0x54] sm:$0xf]
    %v3723 = vld [vmem:[%s12 + $0x58] sm:$0xf]
    %v3724 = vld [vmem:[%s12 + $0x5c] sm:$0xf]
    %v3725 = vld [vmem:[%s12 + $0x60] sm:$0xf]
    %v3726 = vld [vmem:[%s12 + $0x64] sm:$0xf]
    %v3727 = vld [vmem:[%s12 + $0x68] sm:$0xf]
    %v3728 = vld [vmem:[%s12 + $0x6c] sm:$0xf]
    %v3729 = vld [vmem:[%s12 + $0x70] sm:$0xf]
    %v3730 = vld [vmem:[%s12 + $0x74] sm:$0xf]
    %v3731 = vld [vmem:[%s12 + $0x78] sm:$0xf]
    %v3732 = vld [vmem:[%s12 + $0x7c] sm:$0xf]
    %v3733 = vld [vmem:[%s13] sm:$0x1]
    %v3735 = vperm.slane %v3733, 0
    %v3769 = vunpack.c.l.b16 %v3701
    %v3770 = vunpack.c.l.b16 %v3702
    %v3771 = vunpack.c.l.b16 %v3703
    %v3772 = vunpack.c.l.b16 %v3704
    %v3773 = vunpack.c.l.b16 %v3705
    %v3774 = vunpack.c.l.b16 %v3706
    %v3775 = vunpack.c.l.b16 %v3707
    %v3776 = vunpack.c.l.b16 %v3708
    %v3777 = vunpack.c.l.b16 %v3709
    %v3778 = vunpack.c.l.b16 %v3710
    %v3779 = vunpack.c.l.b16 %v3711
    %v3780 = vunpack.c.l.b16 %v3712
    %v3781 = vunpack.c.l.b16 %v3713
    %v3782 = vunpack.c.l.b16 %v3714
    %v3783 = vunpack.c.l.b16 %v3715
    %v3784 = vunpack.c.l.b16 %v3716
    %v3785 = vunpack.c.l.b16 %v3717
    %v3786 = vunpack.c.l.b16 %v3718
    %v3787 = vunpack.c.l.b16 %v3719
    %v3788 = vunpack.c.l.b16 %v3720
    %v3789 = vunpack.c.l.b16 %v3721
    %v3790 = vunpack.c.l.b16 %v3722
    %v3791 = vunpack.c.l.b16 %v3723
    %v3792 = vunpack.c.l.b16 %v3724
    %v3793 = vunpack.c.l.b16 %v3725
    %v3794 = vunpack.c.l.b16 %v3726
    %v3795 = vunpack.c.l.b16 %v3727
    %v3796 = vunpack.c.l.b16 %v3728
    %v3797 = vunpack.c.l.b16 %v3729
    %v3798 = vunpack.c.l.b16 %v3730
    %v3799 = vunpack.c.l.b16 %v3731
    %v3800 = vunpack.c.l.b16 %v3732
    %v3801 = vpack.c.b16 %v3770, %v3769
    %v3802 = vpack.c.b16 %v3772, %v3771
    %v3803 = vpack.c.b16 %v3774, %v3773
    %v3804 = vpack.c.b16 %v3776, %v3775
    %v3805 = vpack.c.b16 %v3778, %v3777
    %v3806 = vpack.c.b16 %v3780, %v3779
    %v3807 = vpack.c.b16 %v3782, %v3781
    %v3808 = vpack.c.b16 %v3784, %v3783
    %v3809 = vpack.c.b16 %v3786, %v3785
    %v3810 = vpack.c.b16 %v3788, %v3787
    %v3811 = vpack.c.b16 %v3790, %v3789
    %v3812 = vpack.c.b16 %v3792, %v3791
    %v3813 = vpack.c.b16 %v3794, %v3793
    %v3814 = vpack.c.b16 %v3796, %v3795
    %v3815 = vpack.c.b16 %v3798, %v3797
    %v3816 = vpack.c.b16 %v3800, %v3799
    %3833 = vmatpush.bf16.msra.mxu0 %v3808
    %3834 = vmatpush.bf16.msra.mxu0 %v3807
    %3835 = vmatpush.bf16.msra.mxu0 %v3806
    %3836 = vmatpush.bf16.msra.mxu0 %v3805
    %3837 = vmatpush.bf16.msra.mxu0 %v3804
    %3838 = vmatpush.bf16.msra.mxu0 %v3803
    %3839 = vmatpush.bf16.msra.mxu0 %v3802
    %3840 = vmatpush.bf16.msra.mxu0 %v3801
    %3841 = vmatmul.bf16.gmra.mxu0 %v3699
    %v3842 = vpop.f32.mrf.mxu0
    %v3843 = vadd.f32 %v3735, %v3842
    %v3844 = vpop.f32.mrf.mxu0
    %3845 = vdwg.mxu0
    %3846 = vmatpush.bf16.msra.mxu0 %v3816
    %3847 = vmatpush.bf16.msra.mxu0 %v3815
    %3848 = vmatpush.bf16.msra.mxu0 %v3814
    %3849 = vmatpush.bf16.msra.mxu0 %v3813
    %3850 = vmatpush.bf16.msra.mxu0 %v3812
    %3851 = vmatpush.bf16.msra.mxu0 %v3811
    %3852 = vmatpush.bf16.msra.mxu0 %v3810
    %3853 = vmatpush.bf16.msra.mxu0 %v3809
    %3854 = vmatmul.bf16.gmra.mxu0 %v3700
    %v3855 = vpop.f32.mrf.mxu0
    %v3856 = vadd.f32 %v3843, %v3855
    %v3857 = vpop.f32.mrf.mxu0
    %3858 = vdwg.mxu0
    %v3859 = vmax.f32 %v3856, 0.0
    %v3860 = vpack.c.bf16 %v3859, %v3859
    %v3861 = vld [vmem:[%s14] sm:$0xf]
    %v3862 = vld [vmem:[%s14 + $0x4] sm:$0xf]
    %v3863 = vld [vmem:[%s14 + $0x8] sm:$0xf]
    %v3864 = vld [vmem:[%s14 + $0xc] sm:$0xf]
    %v3865 = vld [vmem:[%s14 + $0x10] sm:$0xf]
    %v3866 = vld [vmem:[%s14 + $0x14] sm:$0xf]
    %v3867 = vld [vmem:[%s14 + $0x18] sm:$0xf]
    %v3868 = vld [vmem:[%s14 + $0x1c] sm:$0xf]
    %v3869 = vld [vmem:[%s14 + $0x20] sm:$0xf]
    %v3870 = vld [vmem:[%s14 + $0x24] sm:$0xf]
    %v3871 = vld [vmem:[%s14 + $0x28] sm:$0xf]
    %v3872 = vld [vmem:[%s14 + $0x2c] sm:$0xf]
    %v3873 = vld [vmem:[%s14 + $0x30] sm:$0xf]
    %v3874 = vld [vmem:[%s14 + $0x34] sm:$0xf]
    %v3875 = vld [vmem:[%s14 + $0x38] sm:$0xf]
    %v3876 = vld [vmem:[%s14 + $0x3c] sm:$0xf]
    %v3877 = vld [vmem:[%s15] sm:$0x1]
    %v3879 = vperm.slane %v3877, 0
    %v3897 = vunpack.c.l.b16 %v3861
    %v3898 = vunpack.c.l.b16 %v3862
    %v3899 = vunpack.c.l.b16 %v3863
    %v3900 = vunpack.c.l.b16 %v3864
    %v3901 = vunpack.c.l.b16 %v3865
    %v3902 = vunpack.c.l.b16 %v3866
    %v3903 = vunpack.c.l.b16 %v3867
    %v3904 = vunpack.c.l.b16 %v3868
    %v3905 = vunpack.c.l.b16 %v3869
    %v3906 = vunpack.c.l.b16 %v3870
    %v3907 = vunpack.c.l.b16 %v3871
    %v3908 = vunpack.c.l.b16 %v3872
    %v3909 = vunpack.c.l.b16 %v3873
    %v3910 = vunpack.c.l.b16 %v3874
    %v3911 = vunpack.c.l.b16 %v3875
    %v3912 = vunpack.c.l.b16 %v3876
    %v3913 = vpack.c.b16 %v3898, %v3897
    %v3914 = vpack.c.b16 %v3900, %v3899
    %v3915 = vpack.c.b16 %v3902, %v3901
    %v3916 = vpack.c.b16 %v3904, %v3903
    %v3917 = vpack.c.b16 %v3906, %v3905
    %v3918 = vpack.c.b16 %v3908, %v3907
    %v3919 = vpack.c.b16 %v3910, %v3909
    %v3920 = vpack.c.b16 %v3912, %v3911
    %3929 = vmatpush.bf16.msra.mxu0 %v3920
    %3930 = vmatpush.bf16.msra.mxu0 %v3919
    %3931 = vmatpush.bf16.msra.mxu0 %v3918
    %3932 = vmatpush.bf16.msra.mxu0 %v3917
    %3933 = vmatpush.bf16.msra.mxu0 %v3916
    %3934 = vmatpush.bf16.msra.mxu0 %v3915
    %3935 = vmatpush.bf16.msra.mxu0 %v3914
    %3936 = vmatpush.bf16.msra.mxu0 %v3913
    %3937 = vmatmul.bf16.gmra.mxu0 %v3860
    %v3938 = vpop.f32.mrf.mxu0
    %v3939 = vadd.f32 %v3879, %v3938
    %v3940 = vpop.f32.mrf.mxu0
    %3941 = vdwg.mxu0
    %v3942 = vmax.f32 %v3939, 0.0
    %v3943 = vld [vmem:[%s16] sm:$0x1]
    %v3945 = vperm.slane %v3943, 0
    %v3947 = vmul.f32 %v3942, %v3945
    %v3948 = vsel %vm3023, %v3947, 0.0
    %3949 = vadd.xlane.f32.xlu0 %v3948
    %v3950 = vpop.xlane.xlu0 %3949
    %v3951 = vld [vmem:[#allocation3] sm:$0x1]
    %v3953 = vperm.slane %v3951, 0
    %v3955 = vadd.f32 %v3950, %v3953
    %vm3956 = vcmask 7168
    %3957 = vst.msk [vmem:[%s18] sm:$0xff] %vm3956, %v3955
  $region81: #{multimodal_resume_classifier.1} parent=0 // pred_fallthru
    _
  // Predicated region
  $region82: #{multimodal_resume_classifier.1} parent=0 // pred_check
    _
  $region83: #{multimodal_resume_classifier.1} parent=0 // pred_check_branch
    %3959 = sbr.rel (0) target = $region85
  $region84: #{multimodal_resume_classifier.1} parent=0 // pred_region
    _
  $region85: #{multimodal_resume_classifier.1} parent=0 // pred_fallthru
    _
  // Predicated region
  $region86: #{multimodal_resume_classifier.1} parent=0 // pred_check
    _
  $region87: #{multimodal_resume_classifier.1} parent=0 // pred_check_branch
    %3961 = sbr.rel (0) target = $region89
  $region88: #{multimodal_resume_classifier.1} parent=0 // pred_region
    _
  $region89: #{multimodal_resume_classifier.1} parent=0 // pred_fallthru
    _

</llo_original>
